<compile_context>
chip_gen: v7x
topology: tpu7x:2x2x1
jax: 0.10.0
libtpu: 0.0.40
codegen_flags: <defaults>
</compile_context>

<pallas_src>
import numpy as np

import jax
import jax.numpy as jnp
from jax.experimental import pallas as pl
from jax.experimental.pallas import tpu as pltpu

NUM_CLASSES = 20
CLS_PAD = 128                    # lane-dense classifier output, slice [:20] outside
IMG = 224
POOL = 32                        # stand-in backbone: 32x32 avg pool -> 7x7
PGRID = IMG // POOL              # 7
LANES = 128                      # per-frame pooled row, lane-padded (49 valid)
K_PAD = 3 * LANES                # 384  (3 frames per image, 128 lanes each)
FEATURE_DIM = 1024               # stand-in backbone feature width
                                 # TODO(synk): real EfficientNet-b0 emits 1000;
                                 # padded to 1024 for lane-dense MXU tiling.


# ---------------------------------------------------------------------------
# Pooling constants (built once on host with numpy, passed as kernel inputs).
#   qt  (8, 224):   qt[p, i]  = 1/(32*C) if p < 7 and i // 32 == p      (row 7 = 0)
#   pw  (224, 128): pw[j, l]  = 1/32     if l < 49 and j // 32 == l % 7
#   msk (8, 128):   msk[p, l] = 1        if l < 49 and p < 7 and l // 7 == p
# For gated per-channel maps g_c (224,224):
#   cs     = sum_c qt @ g_c                       (8, 224)  row 7 is zero
#   expand = cs @ pw                              (8, 128)
#   flat[l]= sum_p expand[p, l] * msk[p, l]  ->  mean of 32x32 block (l//7, l%7)
# ---------------------------------------------------------------------------
def _pool_constants(c_channels):
    i = np.arange(IMG)
    p8 = np.arange(8)
    l = np.arange(LANES)
    qt = np.where((p8[:, None] < PGRID) & ((i[None, :] // POOL) == p8[:, None]),
                  1.0 / (POOL * c_channels), 0.0)                       # (8, 224)
    pw = np.where((l[None, :] < PGRID * PGRID)
                  & ((i[:, None] // POOL) == (l[None, :] % PGRID)),
                  1.0 / POOL, 0.0)                                      # (224, 128)
    msk = np.where((l[None, :] < PGRID * PGRID)
                   & (p8[:, None] < PGRID)
                   & ((l[None, :] // PGRID) == p8[:, None]), 1.0, 0.0)  # (8, 128)
    return (jnp.asarray(qt, jnp.float32),
            jnp.asarray(pw, jnp.float32),
            jnp.asarray(msk, jnp.float32))


# ---------------------------------------------------------------------------
# Kernel 1: motion gating + channel mean + fused 32x32 average pool.
#   grid = (B, T); per step: one (prev, cur) frame pair.
#   PA = sigmoid(alpha_c * (cur - prev));  acc = mean_c(cur * PA)
#   Per-frame column sums accumulate into a VMEM scratch; at the last frame a
#   single batched MXU matmul + masked sublane reduce emits all T pooled rows.
# TODO(synk): exact Motion_Features_Dilation5 architecture not provided in the
#             snippet; a per-channel frame-difference sigmoid gate is used.
# ---------------------------------------------------------------------------
def encode_pool_kernel(alpha_ref, qt_ref, pw_ref, msk_ref,
                       prev_ref, cur_ref, out_ref, csum_ref):
    t = pl.program_id(1)
    T = out_ref.shape[1]
    C = cur_ref.shape[2]

    qt = qt_ref[...]                                    # (8, 224), has 1/(32*C)

    cs = None
    for c in range(C):                                  # static unroll, C == 3
        prev_c = prev_ref[0, 0, c].astype(jnp.float32)  # (224, 224)
        cur_c = cur_ref[0, 0, c].astype(jnp.float32)    # (224, 224)
        half_a = alpha_ref[c] * 0.5
        # sigmoid(a*d) == 0.5*(1 + tanh(0.5*a*d)) : one EUP op instead of two.
        pa = 0.5 + 0.5 * jnp.tanh(half_a * (cur_c - prev_c))
        g = cur_c * pa
        # Contract straight through the pool matrix: keeps only an (8,224)
        # accumulator live instead of a full (224,224) frame accumulator.
        d = jnp.dot(qt, g, preferred_element_type=jnp.float32)  # (8, 224)
        cs = d if cs is None else cs + d

    row0 = pl.multiple_of(t * 8, 8)
    csum_ref[pl.ds(row0, 8), :] = cs

    @pl.when(t == pl.num_programs(1) - 1)
    def _():
        # One batched (T*8, 224) @ (224, 128) matmul for all frames of the clip.
        expand = jnp.dot(csum_ref[...], pw_ref[...],
                         preferred_element_type=jnp.float32)     # (T*8, 128)
        msk = msk_ref[...]                                       # (8, 128)
        pooled = jnp.sum(expand.reshape(T, 8, LANES) * msk[None, :, :],
                         axis=1)                                 # (T, 128)
        out_ref[0, :, :] = pooled


def encode_pool_pallas(alpha, rgb):
    B, Tp1, C, H, W = rgb.shape
    T = Tp1 - 1
    qt, pw, msk = _pool_constants(C)
    return pl.pallas_call(
        encode_pool_kernel,
        out_shape=jax.ShapeDtypeStruct((B, T, LANES), jnp.float32),
        grid=(B, T),
        in_specs=[
            pl.BlockSpec(memory_space=pltpu.MemorySpace.SMEM),               # alpha (3,)
            pl.BlockSpec((8, W), lambda b, t: (0, 0)),                       # qt
            pl.BlockSpec((W, LANES), lambda b, t: (0, 0)),                   # pw
            pl.BlockSpec((8, LANES), lambda b, t: (0, 0)),                   # msk
            pl.BlockSpec((1, 1, C, H, W), lambda b, t: (b, t, 0, 0, 0)),     # prev frame
            pl.BlockSpec((1, 1, C, H, W), lambda b, t: (b, t + 1, 0, 0, 0)), # cur frame
        ],
        out_specs=pl.BlockSpec((1, T, LANES), lambda b, t: (b, 0, 0)),
        scratch_shapes=[pltpu.VMEM((T * 8, W), jnp.float32)],
        compiler_params=pltpu.CompilerParams(
            # batch axis megacore-parallel; frame axis carries the resident
            # output block + colsum scratch, so it must be "arbitrary".
            dimension_semantics=("parallel", "arbitrary"),
        ),
    )(alpha, qt, pw, msk, rgb, rgb)


# ---------------------------------------------------------------------------
# Kernel 2 (fused): stand-in backbone head + TA_nopool temporal attention.
#   Single ungridded call; all operands are KiB/MiB-scale and fit VMEM.
#   Per batch element: linear(384 -> 1024), softmax attention over segments
#   (F -> 1 scorer via VPU multiply + lane reduce), classifier to a lane-dense
#   128-wide row (first NUM_CLASSES valid).
# TODO(synk): pretrained EfficientNet-b0 and TA_nopool internals cannot be
#             reproduced from the snippet; deterministic stand-ins are used.
# ---------------------------------------------------------------------------
def head_kernel(x_ref, w_bb_ref, b_bb_ref, wa_ref, wc_ref, bc_ref, o_ref):
    B = x_ref.shape[0]
    w_bb = w_bb_ref[...]                                  # (384, 1024)
    b_bb = b_bb_ref[...]                                  # (1, 1024)
    wa = wa_ref[...]                                      # (1, 1024)
    wc = wc_ref[...]                                      # (1024, 128)
    bc = bc_ref[...]                                      # (1, 128)
    for b in range(B):                                    # static unroll; small B
        xb = x_ref[b]                                     # (S, 384)
        fb = jnp.dot(xb, w_bb, preferred_element_type=jnp.float32) + b_bb  # (S, F)
        score = jnp.sum(fb * wa, axis=-1, keepdims=True)  # (S, 1)
        m = jnp.max(score, axis=0, keepdims=True)
        e = jnp.exp(score - m)
        att = e / jnp.sum(e, axis=0, keepdims=True)       # (S, 1)
        agg = jnp.sum(att * fb, axis=0, keepdims=True)    # (1, F)
        o_ref[b:b + 1, :] = (
            jnp.dot(agg, wc, preferred_element_type=jnp.float32) + bc
        )                                                 # (1, 128)


def head_pallas(x, w_bb, b_bb, w_attn, w_cls, b_cls):
    B = x.shape[0]
    vmem = pl.BlockSpec(memory_space=pltpu.MemorySpace.VMEM)
    return pl.pallas_call(
        head_kernel,
        out_shape=jax.ShapeDtypeStruct((B, CLS_PAD), jnp.float32),
        in_specs=[vmem] * 6,
        out_specs=vmem,
    )(x, w_bb, b_bb, w_attn, w_cls, b_cls)


# ---------------------------------------------------------------------------
# MYNET forward
# ---------------------------------------------------------------------------
def init_params(key, sequence_size):
    k1, k2, k3, k4 = jax.random.split(key, 4)
    w_cls = 0.02 * jax.random.normal(k4, (FEATURE_DIM, NUM_CLASSES), jnp.float32)
    w_cls = jnp.pad(w_cls, ((0, 0), (0, CLS_PAD - NUM_CLASSES)))
    return {
        "alpha": 1.0 + 0.5 * jax.random.normal(k1, (3,), jnp.float32),
        "w_bb": 0.02 * jax.random.normal(k2, (K_PAD, FEATURE_DIM), jnp.float32),
        "b_bb": jnp.zeros((1, FEATURE_DIM), jnp.float32),
        "w_attn": 0.02 * jax.random.normal(k3, (1, FEATURE_DIM), jnp.float32),
        "w_cls": w_cls,
        "b_cls": jnp.zeros((1, CLS_PAD), jnp.float32),
    }


def mynet_forward(params, rgb, sequence_size):
    B, Tp1, C, H, W = rgb.shape
    T = Tp1 - 1
    assert T == sequence_size and T % 3 == 0 and C == 3 and H == IMG and W == IMG

    # motion gating + channel mean + fused 32x32 pool -> (B, T, 128)
    pooled = encode_pool_pallas(params["alpha"], rgb)

    # reshape(-1, 3, 224, 224) semantics: consecutive frame triples -> channels.
    # Pooled rows are lane-padded, so grouping 3 frames gives K = 384; the
    # contiguous reshape never crosses batch boundaries (T % 3 == 0) and the
    # zero padding lanes are inert in the K = 384 matmul.
    x = pooled.reshape(B, T // 3, K_PAD)                 # (B, S, 384)

    # fused stand-in backbone linear + temporal-attention head -> (B, 128)
    logits_pad = head_pallas(x, params["w_bb"], params["b_bb"],
                             params["w_attn"], params["w_cls"], params["b_cls"])
    return logits_pad[:, :NUM_CLASSES]                   # (B, 20)


if __name__ == "__main__":
    SEQ = 6                          # sequence_size (must be divisible by 3)
    B = 2
    key = jax.random.PRNGKey(0)
    k_in, k_par = jax.random.split(key)

    rgb = jax.random.uniform(k_in, (B, SEQ + 1, 3, IMG, IMG), jnp.float32)
    params = init_params(k_par, SEQ)

    logits = jax.jit(lambda p, x: mynet_forward(p, x, SEQ))(params, rgb)
    logits = jax.block_until_ready(logits)

    assert logits.shape == (B, NUM_CLASSES)
    assert bool(jnp.all(jnp.isfinite(logits)))
    print("KERNEL_OK")
</pallas_src>

<mosaic_0001>
module attributes {stable_mosaic.version = 11 : i64} {
  func.func @head_kernel(%arg0: memref<2x2x384xf32, #tpu.memory_space<vmem>>, %arg1: memref<384x1024xf32, #tpu.memory_space<vmem>>, %arg2: memref<1x1024xf32, #tpu.memory_space<vmem>>, %arg3: memref<1x1024xf32, #tpu.memory_space<vmem>>, %arg4: memref<1024x128xf32, #tpu.memory_space<vmem>>, %arg5: memref<1x128xf32, #tpu.memory_space<vmem>>, %arg6: memref<2x128xf32, #tpu.memory_space<vmem>>) attributes {dimension_semantics = [], scalar_prefetch = 0 : i64, scratch_operands = 0 : i64, tpu.core_type = #tpu.core_type<tc>} {
    %c0 = arith.constant 0 : index
    %c0_0 = arith.constant 0 : index
    %0 = vector.load %arg1[%c0, %c0_0] : memref<384x1024xf32, #tpu.memory_space<vmem>>, vector<384x1024xf32>
    %c0_1 = arith.constant 0 : index
    %c0_2 = arith.constant 0 : index
    %1 = vector.load %arg2[%c0_1, %c0_2] : memref<1x1024xf32, #tpu.memory_space<vmem>>, vector<1x1024xf32>
    %c0_3 = arith.constant 0 : index
    %c0_4 = arith.constant 0 : index
    %2 = vector.load %arg3[%c0_3, %c0_4] : memref<1x1024xf32, #tpu.memory_space<vmem>>, vector<1x1024xf32>
    %c0_5 = arith.constant 0 : index
    %c0_6 = arith.constant 0 : index
    %3 = vector.load %arg4[%c0_5, %c0_6] : memref<1024x128xf32, #tpu.memory_space<vmem>>, vector<1024x128xf32>
    %c0_7 = arith.constant 0 : index
    %c0_8 = arith.constant 0 : index
    %4 = vector.load %arg5[%c0_7, %c0_8] : memref<1x128xf32, #tpu.memory_space<vmem>>, vector<1x128xf32>
    %c0_9 = arith.constant 0 : index
    %c0_10 = arith.constant 0 : index
    %c0_11 = arith.constant 0 : index
    %5 = vector.load %arg0[%c0_9, %c0_10, %c0_11] : memref<2x2x384xf32, #tpu.memory_space<vmem>>, vector<1x2x384xf32>
    %6 = vector.shape_cast %5 : vector<1x2x384xf32> to vector<2x384xf32>
    %cst = arith.constant dense<0.000000e+00> : vector<2x1024xf32>
    %7 = tpu.matmul %6, %0, %cst {dimension_numbers = #tpu.dot_dimension_numbers<[1], [0], [0], [1], [0, 0, 1, 1], [], []>} : vector<2x384xf32>, vector<384x1024xf32>, vector<2x1024xf32> -> vector<2x1024xf32>
    %8 = vector.broadcast %1 : vector<1x1024xf32> to vector<2x1024xf32>
    %9 = arith.addf %7, %8 : vector<2x1024xf32>
    %10 = vector.broadcast %2 : vector<1x1024xf32> to vector<2x1024xf32>
    %11 = arith.mulf %9, %10 : vector<2x1024xf32>
    %cst_12 = arith.constant dense<0.000000e+00> : vector<2xf32>
    %12 = vector.multi_reduction <add>, %11, %cst_12 [1] : vector<2x1024xf32> to vector<2xf32>
    %13 = vector.shape_cast %12 : vector<2xf32> to vector<2x1xf32>
    %cst_13 = arith.constant dense<0xFF800000> : vector<1xf32>
    %14 = vector.multi_reduction <maximumf>, %13, %cst_13 [0] : vector<2x1xf32> to vector<1xf32>
    %15 = vector.shape_cast %14 : vector<1xf32> to vector<1x1xf32>
    %16 = vector.broadcast %15 : vector<1x1xf32> to vector<2x1xf32>
    %17 = arith.subf %13, %16 : vector<2x1xf32>
    %18 = math.exp %17 : vector<2x1xf32>
    %cst_14 = arith.constant dense<0.000000e+00> : vector<1xf32>
    %19 = vector.multi_reduction <add>, %18, %cst_14 [0] : vector<2x1xf32> to vector<1xf32>
    %20 = vector.shape_cast %19 : vector<1xf32> to vector<1x1xf32>
    %21 = vector.broadcast %20 : vector<1x1xf32> to vector<2x1xf32>
    %22 = arith.divf %18, %21 : vector<2x1xf32>
    %23 = vector.broadcast %22 : vector<2x1xf32> to vector<2x1024xf32>
    %24 = arith.mulf %23, %9 : vector<2x1024xf32>
    %cst_15 = arith.constant dense<0.000000e+00> : vector<1024xf32>
    %25 = vector.multi_reduction <add>, %24, %cst_15 [0] : vector<2x1024xf32> to vector<1024xf32>
    %26 = vector.shape_cast %25 : vector<1024xf32> to vector<1x1024xf32>
    %cst_16 = arith.constant dense<0.000000e+00> : vector<1x128xf32>
    %27 = tpu.matmul %26, %3, %cst_16 {dimension_numbers = #tpu.dot_dimension_numbers<[1], [0], [0], [1], [0, 0, 1, 1], [], []>} : vector<1x1024xf32>, vector<1024x128xf32>, vector<1x128xf32> -> vector<1x128xf32>
    %28 = arith.addf %27, %4 : vector<1x128xf32>
    %c0_17 = arith.constant 0 : index
    %c0_18 = arith.constant 0 : index
    %29 = vector.load %arg6[%c0_17, %c0_18] : memref<2x128xf32, #tpu.memory_space<vmem>>, vector<1x128xf32>
    tpu.vector_store %arg6[%c0_17, %c0_18], %28 {strides = array<i32>} : memref<2x128xf32, #tpu.memory_space<vmem>>, vector<1x128xf32>,
    %c1 = arith.constant 1 : index
    %c0_19 = arith.constant 0 : index
    %c0_20 = arith.constant 0 : index
    %30 = vector.load %arg0[%c1, %c0_19, %c0_20] : memref<2x2x384xf32, #tpu.memory_space<vmem>>, vector<1x2x384xf32>
    %31 = vector.shape_cast %30 : vector<1x2x384xf32> to vector<2x384xf32>
    %cst_21 = arith.constant dense<0.000000e+00> : vector<2x1024xf32>
    %32 = tpu.matmul %31, %0, %cst_21 {dimension_numbers = #tpu.dot_dimension_numbers<[1], [0], [0], [1], [0, 0, 1, 1], [], []>} : vector<2x384xf32>, vector<384x1024xf32>, vector<2x1024xf32> -> vector<2x1024xf32>
    %33 = vector.broadcast %1 : vector<1x1024xf32> to vector<2x1024xf32>
    %34 = arith.addf %32, %33 : vector<2x1024xf32>
    %35 = vector.broadcast %2 : vector<1x1024xf32> to vector<2x1024xf32>
    %36 = arith.mulf %34, %35 : vector<2x1024xf32>
    %cst_22 = arith.constant dense<0.000000e+00> : vector<2xf32>
    %37 = vector.multi_reduction <add>, %36, %cst_22 [1] : vector<2x1024xf32> to vector<2xf32>
    %38 = vector.shape_cast %37 : vector<2xf32> to vector<2x1xf32>
    %cst_23 = arith.constant dense<0xFF800000> : vector<1xf32>
    %39 = vector.multi_reduction <maximumf>, %38, %cst_23 [0] : vector<2x1xf32> to vector<1xf32>
    %40 = vector.shape_cast %39 : vector<1xf32> to vector<1x1xf32>
    %41 = vector.broadcast %40 : vector<1x1xf32> to vector<2x1xf32>
    %42 = arith.subf %38, %41 : vector<2x1xf32>
    %43 = math.exp %42 : vector<2x1xf32>
    %cst_24 = arith.constant dense<0.000000e+00> : vector<1xf32>
    %44 = vector.multi_reduction <add>, %43, %cst_24 [0] : vector<2x1xf32> to vector<1xf32>
    %45 = vector.shape_cast %44 : vector<1xf32> to vector<1x1xf32>
    %46 = vector.broadcast %45 : vector<1x1xf32> to vector<2x1xf32>
    %47 = arith.divf %43, %46 : vector<2x1xf32>
    %48 = vector.broadcast %47 : vector<2x1xf32> to vector<2x1024xf32>
    %49 = arith.mulf %48, %34 : vector<2x1024xf32>
    %cst_25 = arith.constant dense<0.000000e+00> : vector<1024xf32>
    %50 = vector.multi_reduction <add>, %49, %cst_25 [0] : vector<2x1024xf32> to vector<1024xf32>
    %51 = vector.shape_cast %50 : vector<1024xf32> to vector<1x1024xf32>
    %cst_26 = arith.constant dense<0.000000e+00> : vector<1x128xf32>
    %52 = tpu.matmul %51, %3, %cst_26 {dimension_numbers = #tpu.dot_dimension_numbers<[1], [0], [0], [1], [0, 0, 1, 1], [], []>} : vector<1x1024xf32>, vector<1024x128xf32>, vector<1x128xf32> -> vector<1x128xf32>
    %53 = arith.addf %52, %4 : vector<1x128xf32>
    %c1_27 = arith.constant 1 : index
    %c0_28 = arith.constant 0 : index
    %54 = vector.load %arg6[%c1_27, %c0_28] : memref<2x128xf32, #tpu.memory_space<vmem>>, vector<1x128xf32>
    tpu.vector_store %arg6[%c1_27, %c0_28], %53 {strides = array<i32>} : memref<2x128xf32, #tpu.memory_space<vmem>>, vector<1x128xf32>,
    return
  }
}

module attributes {stable_mosaic.version = 11 : i64} {
  func.func @encode_pool_kernel(%arg0: i32, %arg1: i32, %arg2: memref<3xf32, #tpu.memory_space<smem>>, %arg3: memref<8x224xf32, #tpu.memory_space<vmem>>, %arg4: memref<224x128xf32, #tpu.memory_space<vmem>>, %arg5: memref<8x128xf32, #tpu.memory_space<vmem>>, %arg6: memref<1x1x3x224x224xf32, #tpu.memory_space<vmem>>, %arg7: memref<1x1x3x224x224xf32, #tpu.memory_space<vmem>>, %arg8: memref<1x6x128xf32, #tpu.memory_space<vmem>>, %arg9: memref<48x224xf32, #tpu.memory_space<vmem>>) attributes {dimension_semantics = [#tpu.dimension_semantics<parallel>, #tpu.dimension_semantics<arbitrary>], iteration_bounds = array<i64: 2, 6>, scalar_prefetch = 0 : i64, scratch_operands = 1 : i64, tpu.core_type = #tpu.core_type<tc>, window_params = [{transform_indices = @transform_0, window_bounds = array<i64: 3>}, {pipeline_mode = #tpu.pipeline_mode<synchronous>, transform_indices = @transform_1, window_bounds = array<i64: 8, 224>}, {pipeline_mode = #tpu.pipeline_mode<synchronous>, transform_indices = @transform_2, window_bounds = array<i64: 224, 128>}, {pipeline_mode = #tpu.pipeline_mode<synchronous>, transform_indices = @transform_3, window_bounds = array<i64: 8, 128>}, {transform_indices = @transform_4, window_bounds = array<i64: 1, 1, 3, 224, 224>}, {transform_indices = @transform_5, window_bounds = array<i64: 1, 1, 3, 224, 224>}, {transform_indices = @transform_6, window_bounds = array<i64: 1, 6, 128>}]} {
    %c0 = arith.constant 0 : index
    %c0_0 = arith.constant 0 : index
    %0 = vector.load %arg3[%c0, %c0_0] : memref<8x224xf32, #tpu.memory_space<vmem>>, vector<8x224xf32>
    %c0_1 = arith.constant 0 : index
    %c0_2 = arith.constant 0 : index
    %c0_3 = arith.constant 0 : index
    %c0_4 = arith.constant 0 : index
    %c0_5 = arith.constant 0 : index
    %1 = vector.load %arg6[%c0_1, %c0_2, %c0_3, %c0_4, %c0_5] : memref<1x1x3x224x224xf32, #tpu.memory_space<vmem>>, vector<1x1x1x224x224xf32>
    %2 = vector.shape_cast %1 : vector<1x1x1x224x224xf32> to vector<224x224xf32>
    %c0_6 = arith.constant 0 : index
    %c0_7 = arith.constant 0 : index
    %c0_8 = arith.constant 0 : index
    %c0_9 = arith.constant 0 : index
    %c0_10 = arith.constant 0 : index
    %3 = vector.load %arg7[%c0_6, %c0_7, %c0_8, %c0_9, %c0_10] : memref<1x1x3x224x224xf32, #tpu.memory_space<vmem>>, vector<1x1x1x224x224xf32>
    %4 = vector.shape_cast %3 : vector<1x1x1x224x224xf32> to vector<224x224xf32>
    %c0_11 = arith.constant 0 : index
    %5 = memref.load %arg2[%c0_11] : memref<3xf32, #tpu.memory_space<smem>>
    %cst = arith.constant 5.000000e-01 : f32
    %6 = arith.mulf %5, %cst : f32
    %7 = arith.subf %4, %2 : vector<224x224xf32>
    %8 = vector.broadcast %6 : f32 to vector<224x224xf32>
    %9 = arith.mulf %8, %7 : vector<224x224xf32>
    %10 = math.tanh %9 : vector<224x224xf32>
    %cst_12 = arith.constant 5.000000e-01 : f32
    %11 = vector.broadcast %cst_12 : f32 to vector<224x224xf32>
    %12 = arith.mulf %11, %10 : vector<224x224xf32>
    %cst_13 = arith.constant 5.000000e-01 : f32
    %13 = vector.broadcast %cst_13 : f32 to vector<224x224xf32>
    %14 = arith.addf %13, %12 : vector<224x224xf32>
    %15 = arith.mulf %4, %14 : vector<224x224xf32>
    %cst_14 = arith.constant dense<0.000000e+00> : vector<8x224xf32>
    %16 = tpu.matmul %0, %15, %cst_14 {dimension_numbers = #tpu.dot_dimension_numbers<[1], [0], [0], [1], [0, 0, 1, 1], [], []>} : vector<8x224xf32>, vector<224x224xf32>, vector<8x224xf32> -> vector<8x224xf32>
    %c0_15 = arith.constant 0 : index
    %c0_16 = arith.constant 0 : index
    %c1 = arith.constant 1 : index
    %c0_17 = arith.constant 0 : index
    %c0_18 = arith.constant 0 : index
    %17 = vector.load %arg6[%c0_15, %c0_16, %c1, %c0_17, %c0_18] : memref<1x1x3x224x224xf32, #tpu.memory_space<vmem>>, vector<1x1x1x224x224xf32>
    %18 = vector.shape_cast %17 : vector<1x1x1x224x224xf32> to vector<224x224xf32>
    %c0_19 = arith.constant 0 : index
    %c0_20 = arith.constant 0 : index
    %c1_21 = arith.constant 1 : index
    %c0_22 = arith.constant 0 : index
    %c0_23 = arith.constant 0 : index
    %19 = vector.load %arg7[%c0_19, %c0_20, %c1_21, %c0_22, %c0_23] : memref<1x1x3x224x224xf32, #tpu.memory_space<vmem>>, vector<1x1x1x224x224xf32>
    %20 = vector.shape_cast %19 : vector<1x1x1x224x224xf32> to vector<224x224xf32>
    %c1_24 = arith.constant 1 : index
    %21 = memref.load %arg2[%c1_24] : memref<3xf32, #tpu.memory_space<smem>>
    %cst_25 = arith.constant 5.000000e-01 : f32
    %22 = arith.mulf %21, %cst_25 : f32
    %23 = arith.subf %20, %18 : vector<224x224xf32>
    %24 = vector.broadcast %22 : f32 to vector<224x224xf32>
    %25 = arith.mulf %24, %23 : vector<224x224xf32>
    %26 = math.tanh %25 : vector<224x224xf32>
    %cst_26 = arith.constant 5.000000e-01 : f32
    %27 = vector.broadcast %cst_26 : f32 to vector<224x224xf32>
    %28 = arith.mulf %27, %26 : vector<224x224xf32>
    %cst_27 = arith.constant 5.000000e-01 : f32
    %29 = vector.broadcast %cst_27 : f32 to vector<224x224xf32>
    %30 = arith.addf %29, %28 : vector<224x224xf32>
    %31 = arith.mulf %20, %30 : vector<224x224xf32>
    %cst_28 = arith.constant dense<0.000000e+00> : vector<8x224xf32>
    %32 = tpu.matmul %0, %31, %cst_28 {dimension_numbers = #tpu.dot_dimension_numbers<[1], [0], [0], [1], [0, 0, 1, 1], [], []>} : vector<8x224xf32>, vector<224x224xf32>, vector<8x224xf32> -> vector<8x224xf32>
    %33 = arith.addf %16, %32 : vector<8x224xf32>
    %c0_29 = arith.constant 0 : index
    %c0_30 = arith.constant 0 : index
    %c2 = arith.constant 2 : index
    %c0_31 = arith.constant 0 : index
    %c0_32 = arith.constant 0 : index
    %34 = vector.load %arg6[%c0_29, %c0_30, %c2, %c0_31, %c0_32] : memref<1x1x3x224x224xf32, #tpu.memory_space<vmem>>, vector<1x1x1x224x224xf32>
    %35 = vector.shape_cast %34 : vector<1x1x1x224x224xf32> to vector<224x224xf32>
    %c0_33 = arith.constant 0 : index
    %c0_34 = arith.constant 0 : index
    %c2_35 = arith.constant 2 : index
    %c0_36 = arith.constant 0 : index
    %c0_37 = arith.constant 0 : index
    %36 = vector.load %arg7[%c0_33, %c0_34, %c2_35, %c0_36, %c0_37] : memref<1x1x3x224x224xf32, #tpu.memory_space<vmem>>, vector<1x1x1x224x224xf32>
    %37 = vector.shape_cast %36 : vector<1x1x1x224x224xf32> to vector<224x224xf32>
    %c2_38 = arith.constant 2 : index
    %38 = memref.load %arg2[%c2_38] : memref<3xf32, #tpu.memory_space<smem>>
    %cst_39 = arith.constant 5.000000e-01 : f32
    %39 = arith.mulf %38, %cst_39 : f32
    %40 = arith.subf %37, %35 : vector<224x224xf32>
    %41 = vector.broadcast %39 : f32 to vector<224x224xf32>
    %42 = arith.mulf %41, %40 : vector<224x224xf32>
    %43 = math.tanh %42 : vector<224x224xf32>
    %cst_40 = arith.constant 5.000000e-01 : f32
    %44 = vector.broadcast %cst_40 : f32 to vector<224x224xf32>
    %45 = arith.mulf %44, %43 : vector<224x224xf32>
    %cst_41 = arith.constant 5.000000e-01 : f32
    %46 = vector.broadcast %cst_41 : f32 to vector<224x224xf32>
    %47 = arith.addf %46, %45 : vector<224x224xf32>
    %48 = arith.mulf %37, %47 : vector<224x224xf32>
    %cst_42 = arith.constant dense<0.000000e+00> : vector<8x224xf32>
    %49 = tpu.matmul %0, %48, %cst_42 {dimension_numbers = #tpu.dot_dimension_numbers<[1], [0], [0], [1], [0, 0, 1, 1], [], []>} : vector<8x224xf32>, vector<224x224xf32>, vector<8x224xf32> -> vector<8x224xf32>
    %50 = arith.addf %33, %49 : vector<8x224xf32>
    %c8_i32 = arith.constant 8 : i32
    %51 = arith.muli %arg1, %c8_i32 : i32
    %52 = tpu.assume_multiple %51, 8 : i32
    %53 = arith.index_cast %52 : i32 to index
    %c0_43 = arith.constant 0 : index
    %54 = vector.load %arg9[%53, %c0_43] : memref<48x224xf32, #tpu.memory_space<vmem>>, vector<8x224xf32>
    tpu.vector_store %arg9[%53, %c0_43], %50 {strides = array<i32>} : memref<48x224xf32, #tpu.memory_space<vmem>>, vector<8x224xf32>,
    %c5_i32 = arith.constant 5 : i32
    %55 = arith.cmpi eq, %arg1, %c5_i32 : i32
    %56 = arith.extui %55 : i1 to i32
    %c0_i32 = arith.constant 0 : i32
    %57 = arith.cmpi ne, %56, %c0_i32 : i32
    scf.if %57 {
      %c0_44 = arith.constant 0 : index
      %c0_45 = arith.constant 0 : index
      %58 = vector.load %arg9[%c0_44, %c0_45] : memref<48x224xf32, #tpu.memory_space<vmem>>, vector<48x224xf32>
      %c0_46 = arith.constant 0 : index
      %c0_47 = arith.constant 0 : index
      %59 = vector.load %arg4[%c0_46, %c0_47] : memref<224x128xf32, #tpu.memory_space<vmem>>, vector<224x128xf32>
      %cst_48 = arith.constant dense<0.000000e+00> : vector<48x128xf32>
      %60 = tpu.matmul %58, %59, %cst_48 {dimension_numbers = #tpu.dot_dimension_numbers<[1], [0], [0], [1], [0, 0, 1, 1], [], []>} : vector<48x224xf32>, vector<224x128xf32>, vector<48x128xf32> -> vector<48x128xf32>
      %c0_49 = arith.constant 0 : index
      %c0_50 = arith.constant 0 : index
      %61 = vector.load %arg5[%c0_49, %c0_50] : memref<8x128xf32, #tpu.memory_space<vmem>>, vector<8x128xf32>
      %62 = vector.shape_cast %60 : vector<48x128xf32> to vector<6x8x128xf32>
      %63 = vector.shape_cast %61 : vector<8x128xf32> to vector<1x8x128xf32>
      %64 = vector.broadcast %63 : vector<1x8x128xf32> to vector<6x8x128xf32>
      %65 = arith.mulf %62, %64 : vector<6x8x128xf32>
      %cst_51 = arith.constant dense<0.000000e+00> : vector<6x128xf32>
      %66 = vector.multi_reduction <add>, %65, %cst_51 [1] : vector<6x8x128xf32> to vector<6x128xf32>
      %c0_52 = arith.constant 0 : index
      %c0_53 = arith.constant 0 : index
      %c0_54 = arith.constant 0 : index
      %67 = vector.load %arg8[%c0_52, %c0_53, %c0_54] : memref<1x6x128xf32, #tpu.memory_space<vmem>>, vector<1x6x128xf32>
      %68 = vector.shape_cast %67 : vector<1x6x128xf32> to vector<6x128xf32>
      %69 = vector.shape_cast %66 : vector<6x128xf32> to vector<1x6x128xf32>
      tpu.vector_store %arg8[%c0_52, %c0_53, %c0_54], %69 {strides = array<i32>} : memref<1x6x128xf32, #tpu.memory_space<vmem>>, vector<1x6x128xf32>,
    } else {
    }
    return
  }
  func.func @transform_0(%arg0: i32, %arg1: i32) -> i32 {
    %c0_i32 = arith.constant 0 : i32
    %c0_i32_0 = arith.constant 0 : i32
    return %c0_i32 : i32
  }
  func.func @transform_1(%arg0: i32, %arg1: i32) -> (i32, i32) {
    %c0_i32 = arith.constant 0 : i32
    %c0_i32_0 = arith.constant 0 : i32
    %c0_i32_1 = arith.constant 0 : i32
    return %c0_i32, %c0_i32_0 : i32, i32
  }
  func.func @transform_2(%arg0: i32, %arg1: i32) -> (i32, i32) {
    %c0_i32 = arith.constant 0 : i32
    %c0_i32_0 = arith.constant 0 : i32
    %c0_i32_1 = arith.constant 0 : i32
    return %c0_i32, %c0_i32_0 : i32, i32
  }
  func.func @transform_3(%arg0: i32, %arg1: i32) -> (i32, i32) {
    %c0_i32 = arith.constant 0 : i32
    %c0_i32_0 = arith.constant 0 : i32
    %c0_i32_1 = arith.constant 0 : i32
    return %c0_i32, %c0_i32_0 : i32, i32
  }
  func.func @transform_4(%arg0: i32, %arg1: i32) -> (i32, i32, i32, i32, i32) {
    %c0_i32 = arith.constant 0 : i32
    %c0_i32_0 = arith.constant 0 : i32
    %c0_i32_1 = arith.constant 0 : i32
    %c0_i32_2 = arith.constant 0 : i32
    return %arg0, %arg1, %c0_i32, %c0_i32_0, %c0_i32_1 : i32, i32, i32, i32, i32
  }
  func.func @transform_5(%arg0: i32, %arg1: i32) -> (i32, i32, i32, i32, i32) {
    %c1_i32 = arith.constant 1 : i32
    %0 = arith.addi %arg1, %c1_i32 : i32
    %c0_i32 = arith.constant 0 : i32
    %c0_i32_0 = arith.constant 0 : i32
    %c0_i32_1 = arith.constant 0 : i32
    %c0_i32_2 = arith.constant 0 : i32
    return %arg0, %0, %c0_i32, %c0_i32_0, %c0_i32_1 : i32, i32, i32, i32, i32
  }
  func.func @transform_6(%arg0: i32, %arg1: i32) -> (i32, i32, i32) {
    %c0_i32 = arith.constant 0 : i32
    %c0_i32_0 = arith.constant 0 : i32
    %c0_i32_1 = arith.constant 0 : i32
    return %arg0, %c0_i32, %c0_i32_0 : i32, i32, i32
  }
}

</mosaic_0001>

<llo_original>
// kernel: _lambda_.3
$region0: #{_lambda_.3}
  #allocation0 [shape = 'u32[]', space=smem, size = 0x4, offset = 0x4, fixed_abs, tag = 'smem constant byte address 0x4 - core index']
  #allocation1 [shape = 'u32[144,128]{1,0:T(1,128)}', space=vmem, size = 0x12000, scoped, tag = 'internal scratch']
  %s0 = inlined_call_operand.vmem [shape: f32[2,2,384], index: 0, kind: input, shape index: {}]
  %s1 = inlined_call_operand.vmem [shape: f32[384,1024], index: 1, kind: input, shape index: {}]
  %s2 = inlined_call_operand.vmem [shape: f32[1,1024], index: 2, kind: input, shape index: {}]
  %s3 = inlined_call_operand.vmem [shape: f32[1,1024], index: 3, kind: input, shape index: {}]
  %s4 = inlined_call_operand.vmem [shape: f32[1024,128], index: 4, kind: input, shape index: {}]
  %s5 = inlined_call_operand.vmem [shape: f32[1,128], index: 5, kind: input, shape index: {}]
  %s6 = inlined_call_operand.hbm [shape: f32[2,128], index: 6, kind: output, shape index: {}]
  %s7 = sld [smem:[#allocation0]]
  $region34: #{_lambda_.3} parent=0
    _
  %s9 = ssub.s32 1, %s7
  %s10 = scalar_select 0, %s9, %s7
  $region1: #{_lambda_.3} parent=0
    #allocation2 [shape = 'u8[1024]{0}', space=vmem, size = 0x400, scoped, tag = 'output window, operand 0, single buffered']
    #allocation3 [shape = 's32[1]{0}', space=sflag, size = 0x4, scoped, tag = 'scoped memory for _lambda_.3']
    %11 = vsyncpa [#allocation3], 0
    // Predicated region
    $region2: #{_lambda_.3} parent=1 // pred_check
      _
    $region3: #{_lambda_.3} parent=1 // pred_check_branch
      %13 = sbr.rel (0) target = $region5
    $region4: #{_lambda_.3} parent=1 // pred_region
      _
    $region5: #{_lambda_.3} parent=1 // pred_fallthru
      _
    // Predicated region
    $region6: #{_lambda_.3} parent=1 // pred_check
      _
    $region7: #{_lambda_.3} parent=1 // pred_check_branch
      %15 = sbr.rel (0) target = $region9
    $region8: #{_lambda_.3} parent=1 // pred_region
      _
    $region9: #{_lambda_.3} parent=1 // pred_fallthru
      _
    // Predicated region
    $region10: #{_lambda_.3} parent=1 // pred_check
      _
    $region11: #{_lambda_.3} parent=1 // pred_check_branch
      %17 = sbr.rel (0) target = $region13
    $region12: #{_lambda_.3} parent=1 // pred_region
      _
    $region13: #{_lambda_.3} parent=1 // pred_fallthru
      _
    // Predicated region
    $region14: #{_lambda_.3} parent=1 // pred_check
      _
    $region15: #{_lambda_.3} parent=1 // pred_check_branch
      %19 = sbr.rel (0) target = $region17
    $region16: #{_lambda_.3} parent=1 // pred_region
      _
    $region17: #{_lambda_.3} parent=1 // pred_fallthru
      _
    // Predicated region
    $region18: #{_lambda_.3} parent=1 // pred_check
      _
    $region19: #{_lambda_.3} parent=1 // pred_check_branch
      %21 = sbr.rel (0) target = $region21
    $region20: #{_lambda_.3} parent=1 // pred_region
      _
    $region21: #{_lambda_.3} parent=1 // pred_fallthru
      _
    // Predicated region
    $region22: #{_lambda_.3} parent=1 // pred_check
      _
    $region23: #{_lambda_.3} parent=1 // pred_check_branch
      %23 = sbr.rel (0) target = $region25
    $region24: #{_lambda_.3} parent=1 // pred_region
      _
    $region25: #{_lambda_.3} parent=1 // pred_fallthru
      _
    %v24 = vld [vmem:[%s1] sm:$0xff]
    %v25 = vld [vmem:[%s1 + $0x8] sm:$0xff]
    %v26 = vld [vmem:[%s1 + $0x10] sm:$0xff]
    %v27 = vld [vmem:[%s1 + $0x18] sm:$0xff]
    %v28 = vld [vmem:[%s1 + $0x20] sm:$0xff]
    %v29 = vld [vmem:[%s1 + $0x28] sm:$0xff]
    %v30 = vld [vmem:[%s1 + $0x30] sm:$0xff]
    %v31 = vld [vmem:[%s1 + $0x38] sm:$0xff]
    %v32 = vld [vmem:[%s1 + $0x40] sm:$0xff]
    %v33 = vld [vmem:[%s1 + $0x48] sm:$0xff]
    %v34 = vld [vmem:[%s1 + $0x50] sm:$0xff]
    %v35 = vld [vmem:[%s1 + $0x58] sm:$0xff]
    %v36 = vld [vmem:[%s1 + $0x60] sm:$0xff]
    %v37 = vld [vmem:[%s1 + $0x68] sm:$0xff]
    %v38 = vld [vmem:[%s1 + $0x70] sm:$0xff]
    %v39 = vld [vmem:[%s1 + $0x78] sm:$0xff]
    %v40 = vld [vmem:[%s1 + $0x80] sm:$0xff]
    %v41 = vld [vmem:[%s1 + $0x88] sm:$0xff]
    %v42 = vld [vmem:[%s1 + $0x90] sm:$0xff]
    %v43 = vld [vmem:[%s1 + $0x98] sm:$0xff]
    %v44 = vld [vmem:[%s1 + $0xa0] sm:$0xff]
    %v45 = vld [vmem:[%s1 + $0xa8] sm:$0xff]
    %v46 = vld [vmem:[%s1 + $0xb0] sm:$0xff]
    %v47 = vld [vmem:[%s1 + $0xb8] sm:$0xff]
    %v48 = vld [vmem:[%s1 + $0xc0] sm:$0xff]
    %v49 = vld [vmem:[%s1 + $0xc8] sm:$0xff]
    %v50 = vld [vmem:[%s1 + $0xd0] sm:$0xff]
    %v51 = vld [vmem:[%s1 + $0xd8] sm:$0xff]
    %v52 = vld [vmem:[%s1 + $0xe0] sm:$0xff]
    %v53 = vld [vmem:[%s1 + $0xe8] sm:$0xff]
    %v54 = vld [vmem:[%s1 + $0xf0] sm:$0xff]
    %v55 = vld [vmem:[%s1 + $0xf8] sm:$0xff]
    %v56 = vld [vmem:[%s1 + $0x100] sm:$0xff]
    %v57 = vld [vmem:[%s1 + $0x108] sm:$0xff]
    %v58 = vld [vmem:[%s1 + $0x110] sm:$0xff]
    %v59 = vld [vmem:[%s1 + $0x118] sm:$0xff]
    %v60 = vld [vmem:[%s1 + $0x120] sm:$0xff]
    %v61 = vld [vmem:[%s1 + $0x128] sm:$0xff]
    %v62 = vld [vmem:[%s1 + $0x130] sm:$0xff]
    %v63 = vld [vmem:[%s1 + $0x138] sm:$0xff]
    %v64 = vld [vmem:[%s1 + $0x140] sm:$0xff]
    %v65 = vld [vmem:[%s1 + $0x148] sm:$0xff]
    %v66 = vld [vmem:[%s1 + $0x150] sm:$0xff]
    %v67 = vld [vmem:[%s1 + $0x158] sm:$0xff]
    %v68 = vld [vmem:[%s1 + $0x160] sm:$0xff]
    %v69 = vld [vmem:[%s1 + $0x168] sm:$0xff]
    %v70 = vld [vmem:[%s1 + $0x170] sm:$0xff]
    %v71 = vld [vmem:[%s1 + $0x178] sm:$0xff]
    %v72 = vld [vmem:[%s1 + $0x180] sm:$0xff]
    %v73 = vld [vmem:[%s1 + $0x188] sm:$0xff]
    %v74 = vld [vmem:[%s1 + $0x190] sm:$0xff]
    %v75 = vld [vmem:[%s1 + $0x198] sm:$0xff]
    %v76 = vld [vmem:[%s1 + $0x1a0] sm:$0xff]
    %v77 = vld [vmem:[%s1 + $0x1a8] sm:$0xff]
    %v78 = vld [vmem:[%s1 + $0x1b0] sm:$0xff]
    %v79 = vld [vmem:[%s1 + $0x1b8] sm:$0xff]
    %v80 = vld [vmem:[%s1 + $0x1c0] sm:$0xff]
    %v81 = vld [vmem:[%s1 + $0x1c8] sm:$0xff]
    %v82 = vld [vmem:[%s1 + $0x1d0] sm:$0xff]
    %v83 = vld [vmem:[%s1 + $0x1d8] sm:$0xff]
    %v84 = vld [vmem:[%s1 + $0x1e0] sm:$0xff]
    %v85 = vld [vmem:[%s1 + $0x1e8] sm:$0xff]
    %v86 = vld [vmem:[%s1 + $0x1f0] sm:$0xff]
    %v87 = vld [vmem:[%s1 + $0x1f8] sm:$0xff]
    %v88 = vld [vmem:[%s1 + $0x200] sm:$0xff]
    %v89 = vld [vmem:[%s1 + $0x208] sm:$0xff]
    %v90 = vld [vmem:[%s1 + $0x210] sm:$0xff]
    %v91 = vld [vmem:[%s1 + $0x218] sm:$0xff]
    %v92 = vld [vmem:[%s1 + $0x220] sm:$0xff]
    %v93 = vld [vmem:[%s1 + $0x228] sm:$0xff]
    %v94 = vld [vmem:[%s1 + $0x230] sm:$0xff]
    %v95 = vld [vmem:[%s1 + $0x238] sm:$0xff]
    %v96 = vld [vmem:[%s1 + $0x240] sm:$0xff]
    %v97 = vld [vmem:[%s1 + $0x248] sm:$0xff]
    %v98 = vld [vmem:[%s1 + $0x250] sm:$0xff]
    %v99 = vld [vmem:[%s1 + $0x258] sm:$0xff]
    %v100 = vld [vmem:[%s1 + $0x260] sm:$0xff]
    %v101 = vld [vmem:[%s1 + $0x268] sm:$0xff]
    %v102 = vld [vmem:[%s1 + $0x270] sm:$0xff]
    %v103 = vld [vmem:[%s1 + $0x278] sm:$0xff]
    %v104 = vld [vmem:[%s1 + $0x280] sm:$0xff]
    %v105 = vld [vmem:[%s1 + $0x288] sm:$0xff]
    %v106 = vld [vmem:[%s1 + $0x290] sm:$0xff]
    %v107 = vld [vmem:[%s1 + $0x298] sm:$0xff]
    %v108 = vld [vmem:[%s1 + $0x2a0] sm:$0xff]
    %v109 = vld [vmem:[%s1 + $0x2a8] sm:$0xff]
    %v110 = vld [vmem:[%s1 + $0x2b0] sm:$0xff]
    %v111 = vld [vmem:[%s1 + $0x2b8] sm:$0xff]
    %v112 = vld [vmem:[%s1 + $0x2c0] sm:$0xff]
    %v113 = vld [vmem:[%s1 + $0x2c8] sm:$0xff]
    %v114 = vld [vmem:[%s1 + $0x2d0] sm:$0xff]
    %v115 = vld [vmem:[%s1 + $0x2d8] sm:$0xff]
    %v116 = vld [vmem:[%s1 + $0x2e0] sm:$0xff]
    %v117 = vld [vmem:[%s1 + $0x2e8] sm:$0xff]
    %v118 = vld [vmem:[%s1 + $0x2f0] sm:$0xff]
    %v119 = vld [vmem:[%s1 + $0x2f8] sm:$0xff]
    %v120 = vld [vmem:[%s1 + $0x300] sm:$0xff]
    %v121 = vld [vmem:[%s1 + $0x308] sm:$0xff]
    %v122 = vld [vmem:[%s1 + $0x310] sm:$0xff]
    %v123 = vld [vmem:[%s1 + $0x318] sm:$0xff]
    %v124 = vld [vmem:[%s1 + $0x320] sm:$0xff]
    %v125 = vld [vmem:[%s1 + $0x328] sm:$0xff]
    %v126 = vld [vmem:[%s1 + $0x330] sm:$0xff]
    %v127 = vld [vmem:[%s1 + $0x338] sm:$0xff]
    %v128 = vld [vmem:[%s1 + $0x340] sm:$0xff]
    %v129 = vld [vmem:[%s1 + $0x348] sm:$0xff]
    %v130 = vld [vmem:[%s1 + $0x350] sm:$0xff]
    %v131 = vld [vmem:[%s1 + $0x358] sm:$0xff]
    %v132 = vld [vmem:[%s1 + $0x360] sm:$0xff]
    %v133 = vld [vmem:[%s1 + $0x368] sm:$0xff]
    %v134 = vld [vmem:[%s1 + $0x370] sm:$0xff]
    %v135 = vld [vmem:[%s1 + $0x378] sm:$0xff]
    %v136 = vld [vmem:[%s1 + $0x380] sm:$0xff]
    %v137 = vld [vmem:[%s1 + $0x388] sm:$0xff]
    %v138 = vld [vmem:[%s1 + $0x390] sm:$0xff]
    %v139 = vld [vmem:[%s1 + $0x398] sm:$0xff]
    %v140 = vld [vmem:[%s1 + $0x3a0] sm:$0xff]
    %v141 = vld [vmem:[%s1 + $0x3a8] sm:$0xff]
    %v142 = vld [vmem:[%s1 + $0x3b0] sm:$0xff]
    %v143 = vld [vmem:[%s1 + $0x3b8] sm:$0xff]
    %v144 = vld [vmem:[%s1 + $0x3c0] sm:$0xff]
    %v145 = vld [vmem:[%s1 + $0x3c8] sm:$0xff]
    %v146 = vld [vmem:[%s1 + $0x3d0] sm:$0xff]
    %v147 = vld [vmem:[%s1 + $0x3d8] sm:$0xff]
    %v148 = vld [vmem:[%s1 + $0x3e0] sm:$0xff]
    %v149 = vld [vmem:[%s1 + $0x3e8] sm:$0xff]
    %v150 = vld [vmem:[%s1 + $0x3f0] sm:$0xff]
    %v151 = vld [vmem:[%s1 + $0x3f8] sm:$0xff]
    %v152 = vld [vmem:[%s1 + $0x400] sm:$0xff]
    %v153 = vld [vmem:[%s1 + $0x408] sm:$0xff]
    %v154 = vld [vmem:[%s1 + $0x410] sm:$0xff]
    %v155 = vld [vmem:[%s1 + $0x418] sm:$0xff]
    %v156 = vld [vmem:[%s1 + $0x420] sm:$0xff]
    %v157 = vld [vmem:[%s1 + $0x428] sm:$0xff]
    %v158 = vld [vmem:[%s1 + $0x430] sm:$0xff]
    %v159 = vld [vmem:[%s1 + $0x438] sm:$0xff]
    %v160 = vld [vmem:[%s1 + $0x440] sm:$0xff]
    %v161 = vld [vmem:[%s1 + $0x448] sm:$0xff]
    %v162 = vld [vmem:[%s1 + $0x450] sm:$0xff]
    %v163 = vld [vmem:[%s1 + $0x458] sm:$0xff]
    %v164 = vld [vmem:[%s1 + $0x460] sm:$0xff]
    %v165 = vld [vmem:[%s1 + $0x468] sm:$0xff]
    %v166 = vld [vmem:[%s1 + $0x470] sm:$0xff]
    %v167 = vld [vmem:[%s1 + $0x478] sm:$0xff]
    %v168 = vld [vmem:[%s1 + $0x480] sm:$0xff]
    %v169 = vld [vmem:[%s1 + $0x488] sm:$0xff]
    %v170 = vld [vmem:[%s1 + $0x490] sm:$0xff]
    %v171 = vld [vmem:[%s1 + $0x498] sm:$0xff]
    %v172 = vld [vmem:[%s1 + $0x4a0] sm:$0xff]
    %v173 = vld [vmem:[%s1 + $0x4a8] sm:$0xff]
    %v174 = vld [vmem:[%s1 + $0x4b0] sm:$0xff]
    %v175 = vld [vmem:[%s1 + $0x4b8] sm:$0xff]
    %v176 = vld [vmem:[%s1 + $0x4c0] sm:$0xff]
    %v177 = vld [vmem:[%s1 + $0x4c8] sm:$0xff]
    %v178 = vld [vmem:[%s1 + $0x4d0] sm:$0xff]
    %v179 = vld [vmem:[%s1 + $0x4d8] sm:$0xff]
    %v180 = vld [vmem:[%s1 + $0x4e0] sm:$0xff]
    %v181 = vld [vmem:[%s1 + $0x4e8] sm:$0xff]
    %v182 = vld [vmem:[%s1 + $0x4f0] sm:$0xff]
    %v183 = vld [vmem:[%s1 + $0x4f8] sm:$0xff]
    %v184 = vld [vmem:[%s1 + $0x500] sm:$0xff]
    %v185 = vld [vmem:[%s1 + $0x508] sm:$0xff]
    %v186 = vld [vmem:[%s1 + $0x510] sm:$0xff]
    %v187 = vld [vmem:[%s1 + $0x518] sm:$0xff]
    %v188 = vld [vmem:[%s1 + $0x520] sm:$0xff]
    %v189 = vld [vmem:[%s1 + $0x528] sm:$0xff]
    %v190 = vld [vmem:[%s1 + $0x530] sm:$0xff]
    %v191 = vld [vmem:[%s1 + $0x538] sm:$0xff]
    %v192 = vld [vmem:[%s1 + $0x540] sm:$0xff]
    %v193 = vld [vmem:[%s1 + $0x548] sm:$0xff]
    %v194 = vld [vmem:[%s1 + $0x550] sm:$0xff]
    %v195 = vld [vmem:[%s1 + $0x558] sm:$0xff]
    %v196 = vld [vmem:[%s1 + $0x560] sm:$0xff]
    %v197 = vld [vmem:[%s1 + $0x568] sm:$0xff]
    %v198 = vld [vmem:[%s1 + $0x570] sm:$0xff]
    %v199 = vld [vmem:[%s1 + $0x578] sm:$0xff]
    %v200 = vld [vmem:[%s1 + $0x580] sm:$0xff]
    %v201 = vld [vmem:[%s1 + $0x588] sm:$0xff]
    %v202 = vld [vmem:[%s1 + $0x590] sm:$0xff]
    %v203 = vld [vmem:[%s1 + $0x598] sm:$0xff]
    %v204 = vld [vmem:[%s1 + $0x5a0] sm:$0xff]
    %v205 = vld [vmem:[%s1 + $0x5a8] sm:$0xff]
    %v206 = vld [vmem:[%s1 + $0x5b0] sm:$0xff]
    %v207 = vld [vmem:[%s1 + $0x5b8] sm:$0xff]
    %v208 = vld [vmem:[%s1 + $0x5c0] sm:$0xff]
    %v209 = vld [vmem:[%s1 + $0x5c8] sm:$0xff]
    %v210 = vld [vmem:[%s1 + $0x5d0] sm:$0xff]
    %v211 = vld [vmem:[%s1 + $0x5d8] sm:$0xff]
    %v212 = vld [vmem:[%s1 + $0x5e0] sm:$0xff]
    %v213 = vld [vmem:[%s1 + $0x5e8] sm:$0xff]
    %v214 = vld [vmem:[%s1 + $0x5f0] sm:$0xff]
    %v215 = vld [vmem:[%s1 + $0x5f8] sm:$0xff]
    %v216 = vld [vmem:[%s1 + $0x600] sm:$0xff]
    %v217 = vld [vmem:[%s1 + $0x608] sm:$0xff]
    %v218 = vld [vmem:[%s1 + $0x610] sm:$0xff]
    %v219 = vld [vmem:[%s1 + $0x618] sm:$0xff]
    %v220 = vld [vmem:[%s1 + $0x620] sm:$0xff]
    %v221 = vld [vmem:[%s1 + $0x628] sm:$0xff]
    %v222 = vld [vmem:[%s1 + $0x630] sm:$0xff]
    %v223 = vld [vmem:[%s1 + $0x638] sm:$0xff]
    %v224 = vld [vmem:[%s1 + $0x640] sm:$0xff]
    %v225 = vld [vmem:[%s1 + $0x648] sm:$0xff]
    %v226 = vld [vmem:[%s1 + $0x650] sm:$0xff]
    %v227 = vld [vmem:[%s1 + $0x658] sm:$0xff]
    %v228 = vld [vmem:[%s1 + $0x660] sm:$0xff]
    %v229 = vld [vmem:[%s1 + $0x668] sm:$0xff]
    %v230 = vld [vmem:[%s1 + $0x670] sm:$0xff]
    %v231 = vld [vmem:[%s1 + $0x678] sm:$0xff]
    %v232 = vld [vmem:[%s1 + $0x680] sm:$0xff]
    %v233 = vld [vmem:[%s1 + $0x688] sm:$0xff]
    %v234 = vld [vmem:[%s1 + $0x690] sm:$0xff]
    %v235 = vld [vmem:[%s1 + $0x698] sm:$0xff]
    %v236 = vld [vmem:[%s1 + $0x6a0] sm:$0xff]
    %v237 = vld [vmem:[%s1 + $0x6a8] sm:$0xff]
    %v238 = vld [vmem:[%s1 + $0x6b0] sm:$0xff]
    %v239 = vld [vmem:[%s1 + $0x6b8] sm:$0xff]
    %v240 = vld [vmem:[%s1 + $0x6c0] sm:$0xff]
    %v241 = vld [vmem:[%s1 + $0x6c8] sm:$0xff]
    %v242 = vld [vmem:[%s1 + $0x6d0] sm:$0xff]
    %v243 = vld [vmem:[%s1 + $0x6d8] sm:$0xff]
    %v244 = vld [vmem:[%s1 + $0x6e0] sm:$0xff]
    %v245 = vld [vmem:[%s1 + $0x6e8] sm:$0xff]
    %v246 = vld [vmem:[%s1 + $0x6f0] sm:$0xff]
    %v247 = vld [vmem:[%s1 + $0x6f8] sm:$0xff]
    %v248 = vld [vmem:[%s1 + $0x700] sm:$0xff]
    %v249 = vld [vmem:[%s1 + $0x708] sm:$0xff]
    %v250 = vld [vmem:[%s1 + $0x710] sm:$0xff]
    %v251 = vld [vmem:[%s1 + $0x718] sm:$0xff]
    %v252 = vld [vmem:[%s1 + $0x720] sm:$0xff]
    %v253 = vld [vmem:[%s1 + $0x728] sm:$0xff]
    %v254 = vld [vmem:[%s1 + $0x730] sm:$0xff]
    %v255 = vld [vmem:[%s1 + $0x738] sm:$0xff]
    %v256 = vld [vmem:[%s1 + $0x740] sm:$0xff]
    %v257 = vld [vmem:[%s1 + $0x748] sm:$0xff]
    %v258 = vld [vmem:[%s1 + $0x750] sm:$0xff]
    %v259 = vld [vmem:[%s1 + $0x758] sm:$0xff]
    %v260 = vld [vmem:[%s1 + $0x760] sm:$0xff]
    %v261 = vld [vmem:[%s1 + $0x768] sm:$0xff]
    %v262 = vld [vmem:[%s1 + $0x770] sm:$0xff]
    %v263 = vld [vmem:[%s1 + $0x778] sm:$0xff]
    %v264 = vld [vmem:[%s1 + $0x780] sm:$0xff]
    %v265 = vld [vmem:[%s1 + $0x788] sm:$0xff]
    %v266 = vld [vmem:[%s1 + $0x790] sm:$0xff]
    %v267 = vld [vmem:[%s1 + $0x798] sm:$0xff]
    %v268 = vld [vmem:[%s1 + $0x7a0] sm:$0xff]
    %v269 = vld [vmem:[%s1 + $0x7a8] sm:$0xff]
    %v270 = vld [vmem:[%s1 + $0x7b0] sm:$0xff]
    %v271 = vld [vmem:[%s1 + $0x7b8] sm:$0xff]
    %v272 = vld [vmem:[%s1 + $0x7c0] sm:$0xff]
    %v273 = vld [vmem:[%s1 + $0x7c8] sm:$0xff]
    %v274 = vld [vmem:[%s1 + $0x7d0] sm:$0xff]
    %v275 = vld [vmem:[%s1 + $0x7d8] sm:$0xff]
    %v276 = vld [vmem:[%s1 + $0x7e0] sm:$0xff]
    %v277 = vld [vmem:[%s1 + $0x7e8] sm:$0xff]
    %v278 = vld [vmem:[%s1 + $0x7f0] sm:$0xff]
    %v279 = vld [vmem:[%s1 + $0x7f8] sm:$0xff]
    %v280 = vld [vmem:[%s1 + $0x800] sm:$0xff]
    %v281 = vld [vmem:[%s1 + $0x808] sm:$0xff]
    %v282 = vld [vmem:[%s1 + $0x810] sm:$0xff]
    %v283 = vld [vmem:[%s1 + $0x818] sm:$0xff]
    %v284 = vld [vmem:[%s1 + $0x820] sm:$0xff]
    %v285 = vld [vmem:[%s1 + $0x828] sm:$0xff]
    %v286 = vld [vmem:[%s1 + $0x830] sm:$0xff]
    %v287 = vld [vmem:[%s1 + $0x838] sm:$0xff]
    %v288 = vld [vmem:[%s1 + $0x840] sm:$0xff]
    %v289 = vld [vmem:[%s1 + $0x848] sm:$0xff]
    %v290 = vld [vmem:[%s1 + $0x850] sm:$0xff]
    %v291 = vld [vmem:[%s1 + $0x858] sm:$0xff]
    %v292 = vld [vmem:[%s1 + $0x860] sm:$0xff]
    %v293 = vld [vmem:[%s1 + $0x868] sm:$0xff]
    %v294 = vld [vmem:[%s1 + $0x870] sm:$0xff]
    %v295 = vld [vmem:[%s1 + $0x878] sm:$0xff]
    %v296 = vld [vmem:[%s1 + $0x880] sm:$0xff]
    %v297 = vld [vmem:[%s1 + $0x888] sm:$0xff]
    %v298 = vld [vmem:[%s1 + $0x890] sm:$0xff]
    %v299 = vld [vmem:[%s1 + $0x898] sm:$0xff]
    %v300 = vld [vmem:[%s1 + $0x8a0] sm:$0xff]
    %v301 = vld [vmem:[%s1 + $0x8a8] sm:$0xff]
    %v302 = vld [vmem:[%s1 + $0x8b0] sm:$0xff]
    %v303 = vld [vmem:[%s1 + $0x8b8] sm:$0xff]
    %v304 = vld [vmem:[%s1 + $0x8c0] sm:$0xff]
    %v305 = vld [vmem:[%s1 + $0x8c8] sm:$0xff]
    %v306 = vld [vmem:[%s1 + $0x8d0] sm:$0xff]
    %v307 = vld [vmem:[%s1 + $0x8d8] sm:$0xff]
    %v308 = vld [vmem:[%s1 + $0x8e0] sm:$0xff]
    %v309 = vld [vmem:[%s1 + $0x8e8] sm:$0xff]
    %v310 = vld [vmem:[%s1 + $0x8f0] sm:$0xff]
    %v311 = vld [vmem:[%s1 + $0x8f8] sm:$0xff]
    %v312 = vld [vmem:[%s1 + $0x900] sm:$0xff]
    %v313 = vld [vmem:[%s1 + $0x908] sm:$0xff]
    %v314 = vld [vmem:[%s1 + $0x910] sm:$0xff]
    %v315 = vld [vmem:[%s1 + $0x918] sm:$0xff]
    %v316 = vld [vmem:[%s1 + $0x920] sm:$0xff]
    %v317 = vld [vmem:[%s1 + $0x928] sm:$0xff]
    %v318 = vld [vmem:[%s1 + $0x930] sm:$0xff]
    %v319 = vld [vmem:[%s1 + $0x938] sm:$0xff]
    %v320 = vld [vmem:[%s1 + $0x940] sm:$0xff]
    %v321 = vld [vmem:[%s1 + $0x948] sm:$0xff]
    %v322 = vld [vmem:[%s1 + $0x950] sm:$0xff]
    %v323 = vld [vmem:[%s1 + $0x958] sm:$0xff]
    %v324 = vld [vmem:[%s1 + $0x960] sm:$0xff]
    %v325 = vld [vmem:[%s1 + $0x968] sm:$0xff]
    %v326 = vld [vmem:[%s1 + $0x970] sm:$0xff]
    %v327 = vld [vmem:[%s1 + $0x978] sm:$0xff]
    %v328 = vld [vmem:[%s1 + $0x980] sm:$0xff]
    %v329 = vld [vmem:[%s1 + $0x988] sm:$0xff]
    %v330 = vld [vmem:[%s1 + $0x990] sm:$0xff]
    %v331 = vld [vmem:[%s1 + $0x998] sm:$0xff]
    %v332 = vld [vmem:[%s1 + $0x9a0] sm:$0xff]
    %v333 = vld [vmem:[%s1 + $0x9a8] sm:$0xff]
    %v334 = vld [vmem:[%s1 + $0x9b0] sm:$0xff]
    %v335 = vld [vmem:[%s1 + $0x9b8] sm:$0xff]
    %v336 = vld [vmem:[%s1 + $0x9c0] sm:$0xff]
    %v337 = vld [vmem:[%s1 + $0x9c8] sm:$0xff]
    %v338 = vld [vmem:[%s1 + $0x9d0] sm:$0xff]
    %v339 = vld [vmem:[%s1 + $0x9d8] sm:$0xff]
    %v340 = vld [vmem:[%s1 + $0x9e0] sm:$0xff]
    %v341 = vld [vmem:[%s1 + $0x9e8] sm:$0xff]
    %v342 = vld [vmem:[%s1 + $0x9f0] sm:$0xff]
    %v343 = vld [vmem:[%s1 + $0x9f8] sm:$0xff]
    %v344 = vld [vmem:[%s1 + $0xa00] sm:$0xff]
    %v345 = vld [vmem:[%s1 + $0xa08] sm:$0xff]
    %v346 = vld [vmem:[%s1 + $0xa10] sm:$0xff]
    %v347 = vld [vmem:[%s1 + $0xa18] sm:$0xff]
    %v348 = vld [vmem:[%s1 + $0xa20] sm:$0xff]
    %v349 = vld [vmem:[%s1 + $0xa28] sm:$0xff]
    %v350 = vld [vmem:[%s1 + $0xa30] sm:$0xff]
    %v351 = vld [vmem:[%s1 + $0xa38] sm:$0xff]
    %v352 = vld [vmem:[%s1 + $0xa40] sm:$0xff]
    %v353 = vld [vmem:[%s1 + $0xa48] sm:$0xff]
    %v354 = vld [vmem:[%s1 + $0xa50] sm:$0xff]
    %v355 = vld [vmem:[%s1 + $0xa58] sm:$0xff]
    %v356 = vld [vmem:[%s1 + $0xa60] sm:$0xff]
    %v357 = vld [vmem:[%s1 + $0xa68] sm:$0xff]
    %v358 = vld [vmem:[%s1 + $0xa70] sm:$0xff]
    %v359 = vld [vmem:[%s1 + $0xa78] sm:$0xff]
    %v360 = vld [vmem:[%s1 + $0xa80] sm:$0xff]
    %v361 = vld [vmem:[%s1 + $0xa88] sm:$0xff]
    %v362 = vld [vmem:[%s1 + $0xa90] sm:$0xff]
    %v363 = vld [vmem:[%s1 + $0xa98] sm:$0xff]
    %v364 = vld [vmem:[%s1 + $0xaa0] sm:$0xff]
    %v365 = vld [vmem:[%s1 + $0xaa8] sm:$0xff]
    %v366 = vld [vmem:[%s1 + $0xab0] sm:$0xff]
    %v367 = vld [vmem:[%s1 + $0xab8] sm:$0xff]
    %v368 = vld [vmem:[%s1 + $0xac0] sm:$0xff]
    %v369 = vld [vmem:[%s1 + $0xac8] sm:$0xff]
    %v370 = vld [vmem:[%s1 + $0xad0] sm:$0xff]
    %v371 = vld [vmem:[%s1 + $0xad8] sm:$0xff]
    %v372 = vld [vmem:[%s1 + $0xae0] sm:$0xff]
    %v373 = vld [vmem:[%s1 + $0xae8] sm:$0xff]
    %v374 = vld [vmem:[%s1 + $0xaf0] sm:$0xff]
    %v375 = vld [vmem:[%s1 + $0xaf8] sm:$0xff]
    %v376 = vld [vmem:[%s1 + $0xb00] sm:$0xff]
    %v377 = vld [vmem:[%s1 + $0xb08] sm:$0xff]
    %v378 = vld [vmem:[%s1 + $0xb10] sm:$0xff]
    %v379 = vld [vmem:[%s1 + $0xb18] sm:$0xff]
    %v380 = vld [vmem:[%s1 + $0xb20] sm:$0xff]
    %v381 = vld [vmem:[%s1 + $0xb28] sm:$0xff]
    %v382 = vld [vmem:[%s1 + $0xb30] sm:$0xff]
    %v383 = vld [vmem:[%s1 + $0xb38] sm:$0xff]
    %v384 = vld [vmem:[%s1 + $0xb40] sm:$0xff]
    %v385 = vld [vmem:[%s1 + $0xb48] sm:$0xff]
    %v386 = vld [vmem:[%s1 + $0xb50] sm:$0xff]
    %v387 = vld [vmem:[%s1 + $0xb58] sm:$0xff]
    %v388 = vld [vmem:[%s1 + $0xb60] sm:$0xff]
    %v389 = vld [vmem:[%s1 + $0xb68] sm:$0xff]
    %v390 = vld [vmem:[%s1 + $0xb70] sm:$0xff]
    %v391 = vld [vmem:[%s1 + $0xb78] sm:$0xff]
    %v392 = vld [vmem:[%s1 + $0xb80] sm:$0xff]
    %v393 = vld [vmem:[%s1 + $0xb88] sm:$0xff]
    %v394 = vld [vmem:[%s1 + $0xb90] sm:$0xff]
    %v395 = vld [vmem:[%s1 + $0xb98] sm:$0xff]
    %v396 = vld [vmem:[%s1 + $0xba0] sm:$0xff]
    %v397 = vld [vmem:[%s1 + $0xba8] sm:$0xff]
    %v398 = vld [vmem:[%s1 + $0xbb0] sm:$0xff]
    %v399 = vld [vmem:[%s1 + $0xbb8] sm:$0xff]
    %v400 = vld [vmem:[%s1 + $0xbc0] sm:$0xff]
    %v401 = vld [vmem:[%s1 + $0xbc8] sm:$0xff]
    %v402 = vld [vmem:[%s1 + $0xbd0] sm:$0xff]
    %v403 = vld [vmem:[%s1 + $0xbd8] sm:$0xff]
    %v404 = vld [vmem:[%s1 + $0xbe0] sm:$0xff]
    %v405 = vld [vmem:[%s1 + $0xbe8] sm:$0xff]
    %v406 = vld [vmem:[%s1 + $0xbf0] sm:$0xff]
    %v407 = vld [vmem:[%s1 + $0xbf8] sm:$0xff]
    %v408 = vld [vmem:[%s2] sm:$0xff]
    %v409 = vld [vmem:[%s3] sm:$0xff]
    %v410 = vld [vmem:[%s4] sm:$0xff]
    %v411 = vld [vmem:[%s4 + $0x8] sm:$0xff]
    %v412 = vld [vmem:[%s4 + $0x10] sm:$0xff]
    %v413 = vld [vmem:[%s4 + $0x18] sm:$0xff]
    %v414 = vld [vmem:[%s4 + $0x20] sm:$0xff]
    %v415 = vld [vmem:[%s4 + $0x28] sm:$0xff]
    %v416 = vld [vmem:[%s4 + $0x30] sm:$0xff]
    %v417 = vld [vmem:[%s4 + $0x38] sm:$0xff]
    %v418 = vld [vmem:[%s4 + $0x40] sm:$0xff]
    %v419 = vld [vmem:[%s4 + $0x48] sm:$0xff]
    %v420 = vld [vmem:[%s4 + $0x50] sm:$0xff]
    %v421 = vld [vmem:[%s4 + $0x58] sm:$0xff]
    %v422 = vld [vmem:[%s4 + $0x60] sm:$0xff]
    %v423 = vld [vmem:[%s4 + $0x68] sm:$0xff]
    %v424 = vld [vmem:[%s4 + $0x70] sm:$0xff]
    %v425 = vld [vmem:[%s4 + $0x78] sm:$0xff]
    %v426 = vld [vmem:[%s4 + $0x80] sm:$0xff]
    %v427 = vld [vmem:[%s4 + $0x88] sm:$0xff]
    %v428 = vld [vmem:[%s4 + $0x90] sm:$0xff]
    %v429 = vld [vmem:[%s4 + $0x98] sm:$0xff]
    %v430 = vld [vmem:[%s4 + $0xa0] sm:$0xff]
    %v431 = vld [vmem:[%s4 + $0xa8] sm:$0xff]
    %v432 = vld [vmem:[%s4 + $0xb0] sm:$0xff]
    %v433 = vld [vmem:[%s4 + $0xb8] sm:$0xff]
    %v434 = vld [vmem:[%s4 + $0xc0] sm:$0xff]
    %v435 = vld [vmem:[%s4 + $0xc8] sm:$0xff]
    %v436 = vld [vmem:[%s4 + $0xd0] sm:$0xff]
    %v437 = vld [vmem:[%s4 + $0xd8] sm:$0xff]
    %v438 = vld [vmem:[%s4 + $0xe0] sm:$0xff]
    %v439 = vld [vmem:[%s4 + $0xe8] sm:$0xff]
    %v440 = vld [vmem:[%s4 + $0xf0] sm:$0xff]
    %v441 = vld [vmem:[%s4 + $0xf8] sm:$0xff]
    %v442 = vld [vmem:[%s4 + $0x100] sm:$0xff]
    %v443 = vld [vmem:[%s4 + $0x108] sm:$0xff]
    %v444 = vld [vmem:[%s4 + $0x110] sm:$0xff]
    %v445 = vld [vmem:[%s4 + $0x118] sm:$0xff]
    %v446 = vld [vmem:[%s4 + $0x120] sm:$0xff]
    %v447 = vld [vmem:[%s4 + $0x128] sm:$0xff]
    %v448 = vld [vmem:[%s4 + $0x130] sm:$0xff]
    %v449 = vld [vmem:[%s4 + $0x138] sm:$0xff]
    %v450 = vld [vmem:[%s4 + $0x140] sm:$0xff]
    %v451 = vld [vmem:[%s4 + $0x148] sm:$0xff]
    %v452 = vld [vmem:[%s4 + $0x150] sm:$0xff]
    %v453 = vld [vmem:[%s4 + $0x158] sm:$0xff]
    %v454 = vld [vmem:[%s4 + $0x160] sm:$0xff]
    %v455 = vld [vmem:[%s4 + $0x168] sm:$0xff]
    %v456 = vld [vmem:[%s4 + $0x170] sm:$0xff]
    %v457 = vld [vmem:[%s4 + $0x178] sm:$0xff]
    %v458 = vld [vmem:[%s4 + $0x180] sm:$0xff]
    %v459 = vld [vmem:[%s4 + $0x188] sm:$0xff]
    %v460 = vld [vmem:[%s4 + $0x190] sm:$0xff]
    %v461 = vld [vmem:[%s4 + $0x198] sm:$0xff]
    %v462 = vld [vmem:[%s4 + $0x1a0] sm:$0xff]
    %v463 = vld [vmem:[%s4 + $0x1a8] sm:$0xff]
    %v464 = vld [vmem:[%s4 + $0x1b0] sm:$0xff]
    %v465 = vld [vmem:[%s4 + $0x1b8] sm:$0xff]
    %v466 = vld [vmem:[%s4 + $0x1c0] sm:$0xff]
    %v467 = vld [vmem:[%s4 + $0x1c8] sm:$0xff]
    %v468 = vld [vmem:[%s4 + $0x1d0] sm:$0xff]
    %v469 = vld [vmem:[%s4 + $0x1d8] sm:$0xff]
    %v470 = vld [vmem:[%s4 + $0x1e0] sm:$0xff]
    %v471 = vld [vmem:[%s4 + $0x1e8] sm:$0xff]
    %v472 = vld [vmem:[%s4 + $0x1f0] sm:$0xff]
    %v473 = vld [vmem:[%s4 + $0x1f8] sm:$0xff]
    %v474 = vld [vmem:[%s4 + $0x200] sm:$0xff]
    %v475 = vld [vmem:[%s4 + $0x208] sm:$0xff]
    %v476 = vld [vmem:[%s4 + $0x210] sm:$0xff]
    %v477 = vld [vmem:[%s4 + $0x218] sm:$0xff]
    %v478 = vld [vmem:[%s4 + $0x220] sm:$0xff]
    %v479 = vld [vmem:[%s4 + $0x228] sm:$0xff]
    %v480 = vld [vmem:[%s4 + $0x230] sm:$0xff]
    %v481 = vld [vmem:[%s4 + $0x238] sm:$0xff]
    %v482 = vld [vmem:[%s4 + $0x240] sm:$0xff]
    %v483 = vld [vmem:[%s4 + $0x248] sm:$0xff]
    %v484 = vld [vmem:[%s4 + $0x250] sm:$0xff]
    %v485 = vld [vmem:[%s4 + $0x258] sm:$0xff]
    %v486 = vld [vmem:[%s4 + $0x260] sm:$0xff]
    %v487 = vld [vmem:[%s4 + $0x268] sm:$0xff]
    %v488 = vld [vmem:[%s4 + $0x270] sm:$0xff]
    %v489 = vld [vmem:[%s4 + $0x278] sm:$0xff]
    %v490 = vld [vmem:[%s4 + $0x280] sm:$0xff]
    %v491 = vld [vmem:[%s4 + $0x288] sm:$0xff]
    %v492 = vld [vmem:[%s4 + $0x290] sm:$0xff]
    %v493 = vld [vmem:[%s4 + $0x298] sm:$0xff]
    %v494 = vld [vmem:[%s4 + $0x2a0] sm:$0xff]
    %v495 = vld [vmem:[%s4 + $0x2a8] sm:$0xff]
    %v496 = vld [vmem:[%s4 + $0x2b0] sm:$0xff]
    %v497 = vld [vmem:[%s4 + $0x2b8] sm:$0xff]
    %v498 = vld [vmem:[%s4 + $0x2c0] sm:$0xff]
    %v499 = vld [vmem:[%s4 + $0x2c8] sm:$0xff]
    %v500 = vld [vmem:[%s4 + $0x2d0] sm:$0xff]
    %v501 = vld [vmem:[%s4 + $0x2d8] sm:$0xff]
    %v502 = vld [vmem:[%s4 + $0x2e0] sm:$0xff]
    %v503 = vld [vmem:[%s4 + $0x2e8] sm:$0xff]
    %v504 = vld [vmem:[%s4 + $0x2f0] sm:$0xff]
    %v505 = vld [vmem:[%s4 + $0x2f8] sm:$0xff]
    %v506 = vld [vmem:[%s4 + $0x300] sm:$0xff]
    %v507 = vld [vmem:[%s4 + $0x308] sm:$0xff]
    %v508 = vld [vmem:[%s4 + $0x310] sm:$0xff]
    %v509 = vld [vmem:[%s4 + $0x318] sm:$0xff]
    %v510 = vld [vmem:[%s4 + $0x320] sm:$0xff]
    %v511 = vld [vmem:[%s4 + $0x328] sm:$0xff]
    %v512 = vld [vmem:[%s4 + $0x330] sm:$0xff]
    %v513 = vld [vmem:[%s4 + $0x338] sm:$0xff]
    %v514 = vld [vmem:[%s4 + $0x340] sm:$0xff]
    %v515 = vld [vmem:[%s4 + $0x348] sm:$0xff]
    %v516 = vld [vmem:[%s4 + $0x350] sm:$0xff]
    %v517 = vld [vmem:[%s4 + $0x358] sm:$0xff]
    %v518 = vld [vmem:[%s4 + $0x360] sm:$0xff]
    %v519 = vld [vmem:[%s4 + $0x368] sm:$0xff]
    %v520 = vld [vmem:[%s4 + $0x370] sm:$0xff]
    %v521 = vld [vmem:[%s4 + $0x378] sm:$0xff]
    %v522 = vld [vmem:[%s4 + $0x380] sm:$0xff]
    %v523 = vld [vmem:[%s4 + $0x388] sm:$0xff]
    %v524 = vld [vmem:[%s4 + $0x390] sm:$0xff]
    %v525 = vld [vmem:[%s4 + $0x398] sm:$0xff]
    %v526 = vld [vmem:[%s4 + $0x3a0] sm:$0xff]
    %v527 = vld [vmem:[%s4 + $0x3a8] sm:$0xff]
    %v528 = vld [vmem:[%s4 + $0x3b0] sm:$0xff]
    %v529 = vld [vmem:[%s4 + $0x3b8] sm:$0xff]
    %v530 = vld [vmem:[%s4 + $0x3c0] sm:$0xff]
    %v531 = vld [vmem:[%s4 + $0x3c8] sm:$0xff]
    %v532 = vld [vmem:[%s4 + $0x3d0] sm:$0xff]
    %v533 = vld [vmem:[%s4 + $0x3d8] sm:$0xff]
    %v534 = vld [vmem:[%s4 + $0x3e0] sm:$0xff]
    %v535 = vld [vmem:[%s4 + $0x3e8] sm:$0xff]
    %v536 = vld [vmem:[%s4 + $0x3f0] sm:$0xff]
    %v537 = vld [vmem:[%s4 + $0x3f8] sm:$0xff]
    %v538 = vld [vmem:[%s5] sm:$0x1]
    %v539 = vld [vmem:[%s0] sm:$0x3f]
    %v541 = vlaneseq
    %v542 = vshrl.u32 %v541, 7
    %v543 = vsub.s32 0, %v542
    %v544 = vrot.slane %v408, %v543
    %v545 = vlaneseq
    %v546 = vshrl.u32 %v545, 7
    %v547 = vsub.s32 1, %v546
    %v548 = vrot.slane %v408, %v547
    %v549 = vlaneseq
    %v550 = vshrl.u32 %v549, 7
    %v551 = vsub.s32 2, %v550
    %v552 = vrot.slane %v408, %v551
    %v553 = vlaneseq
    %v554 = vshrl.u32 %v553, 7
    %v555 = vsub.s32 3, %v554
    %v556 = vrot.slane %v408, %v555
    %v557 = vlaneseq
    %v558 = vshrl.u32 %v557, 7
    %v559 = vsub.s32 4, %v558
    %v560 = vrot.slane %v408, %v559
    %v561 = vlaneseq
    %v562 = vshrl.u32 %v561, 7
    %v563 = vsub.s32 5, %v562
    %v564 = vrot.slane %v408, %v563
    %v565 = vlaneseq
    %v566 = vshrl.u32 %v565, 7
    %v567 = vsub.s32 6, %v566
    %v568 = vrot.slane %v408, %v567
    %v569 = vlaneseq
    %v570 = vshrl.u32 %v569, 7
    %v571 = vsub.s32 7, %v570
    %v572 = vrot.slane %v408, %v571
    %v582 = vcombine.high %v539, %v539
    %v584 = vunpack.c.l.s4 1983009808
    %v585 = vunpack.c.0.s8 %v584
    %v586 = vlaneseq
    %v587 = vshrl.u32 %v586, 7
    %v588 = vsub.s32 %v585, %v587
    %v589 = vrot.slane %v539, %v588
    %v591 = vunpack.c.l.s4 1983009808
    %v592 = vunpack.c.0.s8 %v591
    %v593 = vlaneseq
    %v594 = vshrl.u32 %v593, 7
    %v595 = vsub.s32 %v592, %v594
    %v596 = vrot.slane %v582, %v595
    %v597 = vcombine.high %v589, %v589
    %601 = vmatprep.subr.mxu0 %v25
    %602 = vmatpush1.msra.mxu0 %v24
    %603 = vmatprep.subr.mxu0 %v33
    %604 = vmatpush1.msra.mxu0 %v32
    %605 = vmatprep.subr.mxu0 %v41
    %606 = vmatpush1.msra.mxu0 %v40
    %607 = vmatprep.subr.mxu0 %v49
    %608 = vmatpush1.msra.mxu0 %v48
    %609 = vmatprep.subr.mxu0 %v57
    %610 = vmatpush1.msra.mxu0 %v56
    %611 = vmatprep.subr.mxu0 %v65
    %612 = vmatpush1.msra.mxu0 %v64
    %613 = vmatprep.subr.mxu0 %v73
    %614 = vmatpush1.msra.mxu0 %v72
    %615 = vmatprep.subr.mxu0 %v81
    %616 = vmatpush1.msra.mxu0 %v80
    %617 = vmatprep.subr.mxu0 %v89
    %618 = vmatpush1.msra.mxu0 %v88
    %619 = vmatprep.subr.mxu0 %v97
    %620 = vmatpush1.msra.mxu0 %v96
    %621 = vmatprep.subr.mxu0 %v105
    %622 = vmatpush1.msra.mxu0 %v104
    %623 = vmatprep.subr.mxu0 %v113
    %624 = vmatpush1.msra.mxu0 %v112
    %625 = vmatprep.subr.mxu0 %v121
    %626 = vmatpush1.msra.mxu0 %v120
    %627 = vmatprep.subr.mxu0 %v129
    %628 = vmatpush1.msra.mxu0 %v128
    %629 = vmatprep.subr.mxu0 %v137
    %630 = vmatpush1.msra.mxu0 %v136
    %631 = vmatprep.subr.mxu0 %v145
    %632 = vmatpush1.msra.mxu0 %v144
    %633 = vmatprep.subr.mxu0 %v153
    %634 = vmatpush1.msra.mxu0 %v152
    %635 = vmatprep.subr.mxu0 %v161
    %636 = vmatpush1.msra.mxu0 %v160
    %637 = vmatprep.subr.mxu0 %v169
    %638 = vmatpush1.msra.mxu0 %v168
    %639 = vmatprep.subr.mxu0 %v177
    %640 = vmatpush1.msra.mxu0 %v176
    %641 = vmatprep.subr.mxu0 %v185
    %642 = vmatpush1.msra.mxu0 %v184
    %643 = vmatprep.subr.mxu0 %v193
    %644 = vmatpush1.msra.mxu0 %v192
    %645 = vmatprep.subr.mxu0 %v201
    %646 = vmatpush1.msra.mxu0 %v200
    %647 = vmatprep.subr.mxu0 %v209
    %648 = vmatpush1.msra.mxu0 %v208
    %649 = vmatprep.subr.mxu0 %v217
    %650 = vmatpush1.msra.mxu0 %v216
    %651 = vmatprep.subr.mxu0 %v225
    %652 = vmatpush1.msra.mxu0 %v224
    %653 = vmatprep.subr.mxu0 %v233
    %654 = vmatpush1.msra.mxu0 %v232
    %655 = vmatprep.subr.mxu0 %v241
    %656 = vmatpush1.msra.mxu0 %v240
    %657 = vmatprep.subr.mxu0 %v249
    %658 = vmatpush1.msra.mxu0 %v248
    %659 = vmatprep.subr.mxu0 %v257
    %660 = vmatpush1.msra.mxu0 %v256
    %661 = vmatprep.subr.mxu0 %v265
    %662 = vmatpush1.msra.mxu0 %v264
    %663 = vmatprep.subr.mxu0 %v273
    %664 = vmatpush1.msra.mxu0 %v272
    %665 = vmatprep.mubr.f32.mxu0 %v597
    %666 = vmatmul.mubr.f32.gmra.mrb[0].mxu0 %v589
    %v667 = vpop.f32.mrb[0].mxu0
    %v668 = vadd.f32 %v544, %v667
    %v669 = vpop.f32.mrb[0].mxu0
    %v670 = vadd.f32 %v548, %v669
    %671 = vdwg.mxu0
    %672 = vmatprep.subr.mxu0 %v281
    %673 = vmatpush1.msra.mxu0 %v280
    %674 = vmatprep.subr.mxu0 %v289
    %675 = vmatpush1.msra.mxu0 %v288
    %676 = vmatprep.subr.mxu0 %v297
    %677 = vmatpush1.msra.mxu0 %v296
    %678 = vmatprep.subr.mxu0 %v305
    %679 = vmatpush1.msra.mxu0 %v304
    %680 = vmatprep.subr.mxu0 %v313
    %681 = vmatpush1.msra.mxu0 %v312
    %682 = vmatprep.subr.mxu0 %v321
    %683 = vmatpush1.msra.mxu0 %v320
    %684 = vmatprep.subr.mxu0 %v329
    %685 = vmatpush1.msra.mxu0 %v328
    %686 = vmatprep.subr.mxu0 %v337
    %687 = vmatpush1.msra.mxu0 %v336
    %688 = vmatprep.subr.mxu0 %v345
    %689 = vmatpush1.msra.mxu0 %v344
    %690 = vmatprep.subr.mxu0 %v353
    %691 = vmatpush1.msra.mxu0 %v352
    %692 = vmatprep.subr.mxu0 %v361
    %693 = vmatpush1.msra.mxu0 %v360
    %694 = vmatprep.subr.mxu0 %v369
    %695 = vmatpush1.msra.mxu0 %v368
    %696 = vmatprep.subr.mxu0 %v377
    %697 = vmatpush1.msra.mxu0 %v376
    %698 = vmatprep.subr.mxu0 %v385
    %699 = vmatpush1.msra.mxu0 %v384
    %700 = vmatprep.subr.mxu0 %v393
    %701 = vmatpush1.msra.mxu0 %v392
    %702 = vmatprep.subr.mxu0 %v401
    %703 = vmatpush1.msra.mxu0 %v400
    %704 = vmatprep.subr.mxu0 0.0
    %705 = vmatpush1.msra.mxu0 0.0
    %706 = vmatprep.subr.mxu0 0.0
    %707 = vmatpush1.msra.mxu0 0.0
    %708 = vmatprep.subr.mxu0 0.0
    %709 = vmatpush1.msra.mxu0 0.0
    %710 = vmatprep.subr.mxu0 0.0
    %711 = vmatpush1.msra.mxu0 0.0
    %712 = vmatprep.subr.mxu0 0.0
    %713 = vmatpush1.msra.mxu0 0.0
    %714 = vmatprep.subr.mxu0 0.0
    %715 = vmatpush1.msra.mxu0 0.0
    %716 = vmatprep.subr.mxu0 0.0
    %717 = vmatpush1.msra.mxu0 0.0
    %718 = vmatprep.subr.mxu0 0.0
    %719 = vmatpush1.msra.mxu0 0.0
    %720 = vmatprep.subr.mxu0 0.0
    %721 = vmatpush1.msra.mxu0 0.0
    %722 = vmatprep.subr.mxu0 0.0
    %723 = vmatpush1.msra.mxu0 0.0
    %724 = vmatprep.subr.mxu0 0.0
    %725 = vmatpush1.msra.mxu0 0.0
    %726 = vmatprep.subr.mxu0 0.0
    %727 = vmatpush1.msra.mxu0 0.0
    %728 = vmatprep.subr.mxu0 0.0
    %729 = vmatpush1.msra.mxu0 0.0
    %730 = vmatprep.subr.mxu0 0.0
    %731 = vmatpush1.msra.mxu0 0.0
    %732 = vmatprep.subr.mxu0 0.0
    %733 = vmatpush1.msra.mxu0 0.0
    %734 = vmatprep.subr.mxu0 0.0
    %735 = vmatpush1.msra.mxu0 0.0
    %736 = vmatprep.mubr.f32.mxu0 0.0
    %737 = vmatmul.mubr.f32.gmra.mrb[0].mxu0 %v596
    %v738 = vpop.f32.mrb[0].mxu0
    %v739 = vadd.f32 %v668, %v738
    %v740 = vpop.f32.mrb[0].mxu0
    %v741 = vadd.f32 %v670, %v740
    %742 = vdwg.mxu0
    %743 = vmatprep.subr.mxu0 %v27
    %744 = vmatpush1.msra.mxu0 %v26
    %745 = vmatprep.subr.mxu0 %v35
    %746 = vmatpush1.msra.mxu0 %v34
    %747 = vmatprep.subr.mxu0 %v43
    %748 = vmatpush1.msra.mxu0 %v42
    %749 = vmatprep.subr.mxu0 %v51
    %750 = vmatpush1.msra.mxu0 %v50
    %751 = vmatprep.subr.mxu0 %v59
    %752 = vmatpush1.msra.mxu0 %v58
    %753 = vmatprep.subr.mxu0 %v67
    %754 = vmatpush1.msra.mxu0 %v66
    %755 = vmatprep.subr.mxu0 %v75
    %756 = vmatpush1.msra.mxu0 %v74
    %757 = vmatprep.subr.mxu0 %v83
    %758 = vmatpush1.msra.mxu0 %v82
    %759 = vmatprep.subr.mxu0 %v91
    %760 = vmatpush1.msra.mxu0 %v90
    %761 = vmatprep.subr.mxu0 %v99
    %762 = vmatpush1.msra.mxu0 %v98
    %763 = vmatprep.subr.mxu0 %v107
    %764 = vmatpush1.msra.mxu0 %v106
    %765 = vmatprep.subr.mxu0 %v115
    %766 = vmatpush1.msra.mxu0 %v114
    %767 = vmatprep.subr.mxu0 %v123
    %768 = vmatpush1.msra.mxu0 %v122
    %769 = vmatprep.subr.mxu0 %v131
    %770 = vmatpush1.msra.mxu0 %v130
    %771 = vmatprep.subr.mxu0 %v139
    %772 = vmatpush1.msra.mxu0 %v138
    %773 = vmatprep.subr.mxu0 %v147
    %774 = vmatpush1.msra.mxu0 %v146
    %775 = vmatprep.subr.mxu0 %v155
    %776 = vmatpush1.msra.mxu0 %v154
    %777 = vmatprep.subr.mxu0 %v163
    %778 = vmatpush1.msra.mxu0 %v162
    %779 = vmatprep.subr.mxu0 %v171
    %780 = vmatpush1.msra.mxu0 %v170
    %781 = vmatprep.subr.mxu0 %v179
    %782 = vmatpush1.msra.mxu0 %v178
    %783 = vmatprep.subr.mxu0 %v187
    %784 = vmatpush1.msra.mxu0 %v186
    %785 = vmatprep.subr.mxu0 %v195
    %786 = vmatpush1.msra.mxu0 %v194
    %787 = vmatprep.subr.mxu0 %v203
    %788 = vmatpush1.msra.mxu0 %v202
    %789 = vmatprep.subr.mxu0 %v211
    %790 = vmatpush1.msra.mxu0 %v210
    %791 = vmatprep.subr.mxu0 %v219
    %792 = vmatpush1.msra.mxu0 %v218
    %793 = vmatprep.subr.mxu0 %v227
    %794 = vmatpush1.msra.mxu0 %v226
    %795 = vmatprep.subr.mxu0 %v235
    %796 = vmatpush1.msra.mxu0 %v234
    %797 = vmatprep.subr.mxu0 %v243
    %798 = vmatpush1.msra.mxu0 %v242
    %799 = vmatprep.subr.mxu0 %v251
    %800 = vmatpush1.msra.mxu0 %v250
    %801 = vmatprep.subr.mxu0 %v259
    %802 = vmatpush1.msra.mxu0 %v258
    %803 = vmatprep.subr.mxu0 %v267
    %804 = vmatpush1.msra.mxu0 %v266
    %805 = vmatprep.subr.mxu0 %v275
    %806 = vmatpush1.msra.mxu0 %v274
    %807 = vmatprep.mubr.f32.mxu0 %v597
    %808 = vmatmul.mubr.f32.gmra.mrb[0].mxu0 %v589
    %v809 = vpop.f32.mrb[0].mxu0
    %v810 = vadd.f32 %v552, %v809
    %v811 = vpop.f32.mrb[0].mxu0
    %v812 = vadd.f32 %v556, %v811
    %813 = vdwg.mxu0
    %814 = vmatprep.subr.mxu0 %v283
    %815 = vmatpush1.msra.mxu0 %v282
    %816 = vmatprep.subr.mxu0 %v291
    %817 = vmatpush1.msra.mxu0 %v290
    %818 = vmatprep.subr.mxu0 %v299
    %819 = vmatpush1.msra.mxu0 %v298
    %820 = vmatprep.subr.mxu0 %v307
    %821 = vmatpush1.msra.mxu0 %v306
    %822 = vmatprep.subr.mxu0 %v315
    %823 = vmatpush1.msra.mxu0 %v314
    %824 = vmatprep.subr.mxu0 %v323
    %825 = vmatpush1.msra.mxu0 %v322
    %826 = vmatprep.subr.mxu0 %v331
    %827 = vmatpush1.msra.mxu0 %v330
    %828 = vmatprep.subr.mxu0 %v339
    %829 = vmatpush1.msra.mxu0 %v338
    %830 = vmatprep.subr.mxu0 %v347
    %831 = vmatpush1.msra.mxu0 %v346
    %832 = vmatprep.subr.mxu0 %v355
    %833 = vmatpush1.msra.mxu0 %v354
    %834 = vmatprep.subr.mxu0 %v363
    %835 = vmatpush1.msra.mxu0 %v362
    %836 = vmatprep.subr.mxu0 %v371
    %837 = vmatpush1.msra.mxu0 %v370
    %838 = vmatprep.subr.mxu0 %v379
    %839 = vmatpush1.msra.mxu0 %v378
    %840 = vmatprep.subr.mxu0 %v387
    %841 = vmatpush1.msra.mxu0 %v386
    %842 = vmatprep.subr.mxu0 %v395
    %843 = vmatpush1.msra.mxu0 %v394
    %844 = vmatprep.subr.mxu0 %v403
    %845 = vmatpush1.msra.mxu0 %v402
    %846 = vmatprep.subr.mxu0 0.0
    %847 = vmatpush1.msra.mxu0 0.0
    %848 = vmatprep.subr.mxu0 0.0
    %849 = vmatpush1.msra.mxu0 0.0
    %850 = vmatprep.subr.mxu0 0.0
    %851 = vmatpush1.msra.mxu0 0.0
    %852 = vmatprep.subr.mxu0 0.0
    %853 = vmatpush1.msra.mxu0 0.0
    %854 = vmatprep.subr.mxu0 0.0
    %855 = vmatpush1.msra.mxu0 0.0
    %856 = vmatprep.subr.mxu0 0.0
    %857 = vmatpush1.msra.mxu0 0.0
    %858 = vmatprep.subr.mxu0 0.0
    %859 = vmatpush1.msra.mxu0 0.0
    %860 = vmatprep.subr.mxu0 0.0
    %861 = vmatpush1.msra.mxu0 0.0
    %862 = vmatprep.subr.mxu0 0.0
    %863 = vmatpush1.msra.mxu0 0.0
    %864 = vmatprep.subr.mxu0 0.0
    %865 = vmatpush1.msra.mxu0 0.0
    %866 = vmatprep.subr.mxu0 0.0
    %867 = vmatpush1.msra.mxu0 0.0
    %868 = vmatprep.subr.mxu0 0.0
    %869 = vmatpush1.msra.mxu0 0.0
    %870 = vmatprep.subr.mxu0 0.0
    %871 = vmatpush1.msra.mxu0 0.0
    %872 = vmatprep.subr.mxu0 0.0
    %873 = vmatpush1.msra.mxu0 0.0
    %874 = vmatprep.subr.mxu0 0.0
    %875 = vmatpush1.msra.mxu0 0.0
    %876 = vmatprep.subr.mxu0 0.0
    %877 = vmatpush1.msra.mxu0 0.0
    %878 = vmatprep.mubr.f32.mxu0 0.0
    %879 = vmatmul.mubr.f32.gmra.mrb[0].mxu0 %v596
    %v880 = vpop.f32.mrb[0].mxu0
    %v881 = vadd.f32 %v810, %v880
    %v882 = vpop.f32.mrb[0].mxu0
    %v883 = vadd.f32 %v812, %v882
    %884 = vdwg.mxu0
    %885 = vmatprep.subr.mxu0 %v29
    %886 = vmatpush1.msra.mxu0 %v28
    %887 = vmatprep.subr.mxu0 %v37
    %888 = vmatpush1.msra.mxu0 %v36
    %889 = vmatprep.subr.mxu0 %v45
    %890 = vmatpush1.msra.mxu0 %v44
    %891 = vmatprep.subr.mxu0 %v53
    %892 = vmatpush1.msra.mxu0 %v52
    %893 = vmatprep.subr.mxu0 %v61
    %894 = vmatpush1.msra.mxu0 %v60
    %895 = vmatprep.subr.mxu0 %v69
    %896 = vmatpush1.msra.mxu0 %v68
    %897 = vmatprep.subr.mxu0 %v77
    %898 = vmatpush1.msra.mxu0 %v76
    %899 = vmatprep.subr.mxu0 %v85
    %900 = vmatpush1.msra.mxu0 %v84
    %901 = vmatprep.subr.mxu0 %v93
    %902 = vmatpush1.msra.mxu0 %v92
    %903 = vmatprep.subr.mxu0 %v101
    %904 = vmatpush1.msra.mxu0 %v100
    %905 = vmatprep.subr.mxu0 %v109
    %906 = vmatpush1.msra.mxu0 %v108
    %907 = vmatprep.subr.mxu0 %v117
    %908 = vmatpush1.msra.mxu0 %v116
    %909 = vmatprep.subr.mxu0 %v125
    %910 = vmatpush1.msra.mxu0 %v124
    %911 = vmatprep.subr.mxu0 %v133
    %912 = vmatpush1.msra.mxu0 %v132
    %913 = vmatprep.subr.mxu0 %v141
    %914 = vmatpush1.msra.mxu0 %v140
    %915 = vmatprep.subr.mxu0 %v149
    %916 = vmatpush1.msra.mxu0 %v148
    %917 = vmatprep.subr.mxu0 %v157
    %918 = vmatpush1.msra.mxu0 %v156
    %919 = vmatprep.subr.mxu0 %v165
    %920 = vmatpush1.msra.mxu0 %v164
    %921 = vmatprep.subr.mxu0 %v173
    %922 = vmatpush1.msra.mxu0 %v172
    %923 = vmatprep.subr.mxu0 %v181
    %924 = vmatpush1.msra.mxu0 %v180
    %925 = vmatprep.subr.mxu0 %v189
    %926 = vmatpush1.msra.mxu0 %v188
    %927 = vmatprep.subr.mxu0 %v197
    %928 = vmatpush1.msra.mxu0 %v196
    %929 = vmatprep.subr.mxu0 %v205
    %930 = vmatpush1.msra.mxu0 %v204
    %931 = vmatprep.subr.mxu0 %v213
    %932 = vmatpush1.msra.mxu0 %v212
    %933 = vmatprep.subr.mxu0 %v221
    %934 = vmatpush1.msra.mxu0 %v220
    %935 = vmatprep.subr.mxu0 %v229
    %936 = vmatpush1.msra.mxu0 %v228
    %937 = vmatprep.subr.mxu0 %v237
    %938 = vmatpush1.msra.mxu0 %v236
    %939 = vmatprep.subr.mxu0 %v245
    %940 = vmatpush1.msra.mxu0 %v244
    %941 = vmatprep.subr.mxu0 %v253
    %942 = vmatpush1.msra.mxu0 %v252
    %943 = vmatprep.subr.mxu0 %v261
    %944 = vmatpush1.msra.mxu0 %v260
    %945 = vmatprep.subr.mxu0 %v269
    %946 = vmatpush1.msra.mxu0 %v268
    %947 = vmatprep.subr.mxu0 %v277
    %948 = vmatpush1.msra.mxu0 %v276
    %949 = vmatprep.mubr.f32.mxu0 %v597
    %950 = vmatmul.mubr.f32.gmra.mrb[0].mxu0 %v589
    %v951 = vpop.f32.mrb[0].mxu0
    %v952 = vadd.f32 %v560, %v951
    %v953 = vpop.f32.mrb[0].mxu0
    %v954 = vadd.f32 %v564, %v953
    %955 = vdwg.mxu0
    %956 = vmatprep.subr.mxu0 %v285
    %957 = vmatpush1.msra.mxu0 %v284
    %958 = vmatprep.subr.mxu0 %v293
    %959 = vmatpush1.msra.mxu0 %v292
    %960 = vmatprep.subr.mxu0 %v301
    %961 = vmatpush1.msra.mxu0 %v300
    %962 = vmatprep.subr.mxu0 %v309
    %963 = vmatpush1.msra.mxu0 %v308
    %964 = vmatprep.subr.mxu0 %v317
    %965 = vmatpush1.msra.mxu0 %v316
    %966 = vmatprep.subr.mxu0 %v325
    %967 = vmatpush1.msra.mxu0 %v324
    %968 = vmatprep.subr.mxu0 %v333
    %969 = vmatpush1.msra.mxu0 %v332
    %970 = vmatprep.subr.mxu0 %v341
    %971 = vmatpush1.msra.mxu0 %v340
    %972 = vmatprep.subr.mxu0 %v349
    %973 = vmatpush1.msra.mxu0 %v348
    %974 = vmatprep.subr.mxu0 %v357
    %975 = vmatpush1.msra.mxu0 %v356
    %976 = vmatprep.subr.mxu0 %v365
    %977 = vmatpush1.msra.mxu0 %v364
    %978 = vmatprep.subr.mxu0 %v373
    %979 = vmatpush1.msra.mxu0 %v372
    %980 = vmatprep.subr.mxu0 %v381
    %981 = vmatpush1.msra.mxu0 %v380
    %982 = vmatprep.subr.mxu0 %v389
    %983 = vmatpush1.msra.mxu0 %v388
    %984 = vmatprep.subr.mxu0 %v397
    %985 = vmatpush1.msra.mxu0 %v396
    %986 = vmatprep.subr.mxu0 %v405
    %987 = vmatpush1.msra.mxu0 %v404
    %988 = vmatprep.subr.mxu0 0.0
    %989 = vmatpush1.msra.mxu0 0.0
    %990 = vmatprep.subr.mxu0 0.0
    %991 = vmatpush1.msra.mxu0 0.0
    %992 = vmatprep.subr.mxu0 0.0
    %993 = vmatpush1.msra.mxu0 0.0
    %994 = vmatprep.subr.mxu0 0.0
    %995 = vmatpush1.msra.mxu0 0.0
    %996 = vmatprep.subr.mxu0 0.0
    %997 = vmatpush1.msra.mxu0 0.0
    %998 = vmatprep.subr.mxu0 0.0
    %999 = vmatpush1.msra.mxu0 0.0
    %1000 = vmatprep.subr.mxu0 0.0
    %1001 = vmatpush1.msra.mxu0 0.0
    %1002 = vmatprep.subr.mxu0 0.0
    %1003 = vmatpush1.msra.mxu0 0.0
    %1004 = vmatprep.subr.mxu0 0.0
    %1005 = vmatpush1.msra.mxu0 0.0
    %1006 = vmatprep.subr.mxu0 0.0
    %1007 = vmatpush1.msra.mxu0 0.0
    %1008 = vmatprep.subr.mxu0 0.0
    %1009 = vmatpush1.msra.mxu0 0.0
    %1010 = vmatprep.subr.mxu0 0.0
    %1011 = vmatpush1.msra.mxu0 0.0
    %1012 = vmatprep.subr.mxu0 0.0
    %1013 = vmatpush1.msra.mxu0 0.0
    %1014 = vmatprep.subr.mxu0 0.0
    %1015 = vmatpush1.msra.mxu0 0.0
    %1016 = vmatprep.subr.mxu0 0.0
    %1017 = vmatpush1.msra.mxu0 0.0
    %1018 = vmatprep.subr.mxu0 0.0
    %1019 = vmatpush1.msra.mxu0 0.0
    %1020 = vmatprep.mubr.f32.mxu0 0.0
    %1021 = vmatmul.mubr.f32.gmra.mrb[0].mxu0 %v596
    %v1022 = vpop.f32.mrb[0].mxu0
    %v1023 = vadd.f32 %v952, %v1022
    %v1024 = vpop.f32.mrb[0].mxu0
    %v1025 = vadd.f32 %v954, %v1024
    %1026 = vdwg.mxu0
    %1027 = vmatprep.subr.mxu0 %v31
    %1028 = vmatpush1.msra.mxu0 %v30
    %1029 = vmatprep.subr.mxu0 %v39
    %1030 = vmatpush1.msra.mxu0 %v38
    %1031 = vmatprep.subr.mxu0 %v47
    %1032 = vmatpush1.msra.mxu0 %v46
    %1033 = vmatprep.subr.mxu0 %v55
    %1034 = vmatpush1.msra.mxu0 %v54
    %1035 = vmatprep.subr.mxu0 %v63
    %1036 = vmatpush1.msra.mxu0 %v62
    %1037 = vmatprep.subr.mxu0 %v71
    %1038 = vmatpush1.msra.mxu0 %v70
    %1039 = vmatprep.subr.mxu0 %v79
    %1040 = vmatpush1.msra.mxu0 %v78
    %1041 = vmatprep.subr.mxu0 %v87
    %1042 = vmatpush1.msra.mxu0 %v86
    %1043 = vmatprep.subr.mxu0 %v95
    %1044 = vmatpush1.msra.mxu0 %v94
    %1045 = vmatprep.subr.mxu0 %v103
    %1046 = vmatpush1.msra.mxu0 %v102
    %1047 = vmatprep.subr.mxu0 %v111
    %1048 = vmatpush1.msra.mxu0 %v110
    %1049 = vmatprep.subr.mxu0 %v119
    %1050 = vmatpush1.msra.mxu0 %v118
    %1051 = vmatprep.subr.mxu0 %v127
    %1052 = vmatpush1.msra.mxu0 %v126
    %1053 = vmatprep.subr.mxu0 %v135
    %1054 = vmatpush1.msra.mxu0 %v134
    %1055 = vmatprep.subr.mxu0 %v143
    %1056 = vmatpush1.msra.mxu0 %v142
    %1057 = vmatprep.subr.mxu0 %v151
    %1058 = vmatpush1.msra.mxu0 %v150
    %1059 = vmatprep.subr.mxu0 %v159
    %1060 = vmatpush1.msra.mxu0 %v158
    %1061 = vmatprep.subr.mxu0 %v167
    %1062 = vmatpush1.msra.mxu0 %v166
    %1063 = vmatprep.subr.mxu0 %v175
    %1064 = vmatpush1.msra.mxu0 %v174
    %1065 = vmatprep.subr.mxu0 %v183
    %1066 = vmatpush1.msra.mxu0 %v182
    %1067 = vmatprep.subr.mxu0 %v191
    %1068 = vmatpush1.msra.mxu0 %v190
    %1069 = vmatprep.subr.mxu0 %v199
    %1070 = vmatpush1.msra.mxu0 %v198
    %1071 = vmatprep.subr.mxu0 %v207
    %1072 = vmatpush1.msra.mxu0 %v206
    %1073 = vmatprep.subr.mxu0 %v215
    %1074 = vmatpush1.msra.mxu0 %v214
    %1075 = vmatprep.subr.mxu0 %v223
    %1076 = vmatpush1.msra.mxu0 %v222
    %1077 = vmatprep.subr.mxu0 %v231
    %1078 = vmatpush1.msra.mxu0 %v230
    %1079 = vmatprep.subr.mxu0 %v239
    %1080 = vmatpush1.msra.mxu0 %v238
    %1081 = vmatprep.subr.mxu0 %v247
    %1082 = vmatpush1.msra.mxu0 %v246
    %1083 = vmatprep.subr.mxu0 %v255
    %1084 = vmatpush1.msra.mxu0 %v254
    %1085 = vmatprep.subr.mxu0 %v263
    %1086 = vmatpush1.msra.mxu0 %v262
    %1087 = vmatprep.subr.mxu0 %v271
    %1088 = vmatpush1.msra.mxu0 %v270
    %1089 = vmatprep.subr.mxu0 %v279
    %1090 = vmatpush1.msra.mxu0 %v278
    %1091 = vmatprep.mubr.f32.mxu0 %v597
    %1092 = vmatmul.mubr.f32.gmra.mrb[0].mxu0 %v589
    %v1093 = vpop.f32.mrb[0].mxu0
    %v1094 = vadd.f32 %v568, %v1093
    %v1095 = vpop.f32.mrb[0].mxu0
    %v1096 = vadd.f32 %v572, %v1095
    %1097 = vdwg.mxu0
    %1098 = vmatprep.subr.mxu0 %v287
    %1099 = vmatpush1.msra.mxu0 %v286
    %1100 = vmatprep.subr.mxu0 %v295
    %1101 = vmatpush1.msra.mxu0 %v294
    %1102 = vmatprep.subr.mxu0 %v303
    %1103 = vmatpush1.msra.mxu0 %v302
    %1104 = vmatprep.subr.mxu0 %v311
    %1105 = vmatpush1.msra.mxu0 %v310
    %1106 = vmatprep.subr.mxu0 %v319
    %1107 = vmatpush1.msra.mxu0 %v318
    %1108 = vmatprep.subr.mxu0 %v327
    %1109 = vmatpush1.msra.mxu0 %v326
    %1110 = vmatprep.subr.mxu0 %v335
    %1111 = vmatpush1.msra.mxu0 %v334
    %1112 = vmatprep.subr.mxu0 %v343
    %1113 = vmatpush1.msra.mxu0 %v342
    %1114 = vmatprep.subr.mxu0 %v351
    %1115 = vmatpush1.msra.mxu0 %v350
    %1116 = vmatprep.subr.mxu0 %v359
    %1117 = vmatpush1.msra.mxu0 %v358
    %1118 = vmatprep.subr.mxu0 %v367
    %1119 = vmatpush1.msra.mxu0 %v366
    %1120 = vmatprep.subr.mxu0 %v375
    %1121 = vmatpush1.msra.mxu0 %v374
    %1122 = vmatprep.subr.mxu0 %v383
    %1123 = vmatpush1.msra.mxu0 %v382
    %1124 = vmatprep.subr.mxu0 %v391
    %1125 = vmatpush1.msra.mxu0 %v390
    %1126 = vmatprep.subr.mxu0 %v399
    %1127 = vmatpush1.msra.mxu0 %v398
    %1128 = vmatprep.subr.mxu0 %v407
    %1129 = vmatpush1.msra.mxu0 %v406
    %1130 = vmatprep.subr.mxu0 0.0
    %1131 = vmatpush1.msra.mxu0 0.0
    %1132 = vmatprep.subr.mxu0 0.0
    %1133 = vmatpush1.msra.mxu0 0.0
    %1134 = vmatprep.subr.mxu0 0.0
    %1135 = vmatpush1.msra.mxu0 0.0
    %1136 = vmatprep.subr.mxu0 0.0
    %1137 = vmatpush1.msra.mxu0 0.0
    %1138 = vmatprep.subr.mxu0 0.0
    %1139 = vmatpush1.msra.mxu0 0.0
    %1140 = vmatprep.subr.mxu0 0.0
    %1141 = vmatpush1.msra.mxu0 0.0
    %1142 = vmatprep.subr.mxu0 0.0
    %1143 = vmatpush1.msra.mxu0 0.0
    %1144 = vmatprep.subr.mxu0 0.0
    %1145 = vmatpush1.msra.mxu0 0.0
    %1146 = vmatprep.subr.mxu0 0.0
    %1147 = vmatpush1.msra.mxu0 0.0
    %1148 = vmatprep.subr.mxu0 0.0
    %1149 = vmatpush1.msra.mxu0 0.0
    %1150 = vmatprep.subr.mxu0 0.0
    %1151 = vmatpush1.msra.mxu0 0.0
    %1152 = vmatprep.subr.mxu0 0.0
    %1153 = vmatpush1.msra.mxu0 0.0
    %1154 = vmatprep.subr.mxu0 0.0
    %1155 = vmatpush1.msra.mxu0 0.0
    %1156 = vmatprep.subr.mxu0 0.0
    %1157 = vmatpush1.msra.mxu0 0.0
    %1158 = vmatprep.subr.mxu0 0.0
    %1159 = vmatpush1.msra.mxu0 0.0
    %1160 = vmatprep.subr.mxu0 0.0
    %1161 = vmatpush1.msra.mxu0 0.0
    %1162 = vmatprep.mubr.f32.mxu0 0.0
    %1163 = vmatmul.mubr.f32.gmra.mrb[0].mxu0 %v596
    %v1164 = vpop.f32.mrb[0].mxu0
    %v1165 = vadd.f32 %v1094, %v1164
    %v1166 = vpop.f32.mrb[0].mxu0
    %v1167 = vadd.f32 %v1096, %v1166
    %1168 = vdwg.mxu0
    %v1170 = vlaneseq
    %v1171 = vshrl.u32 %v1170, 7
    %v1172 = vsub.s32 0, %v1171
    %v1173 = vrot.slane %v409, %v1172
    %v1174 = vlaneseq
    %v1175 = vshrl.u32 %v1174, 7
    %v1176 = vsub.s32 1, %v1175
    %v1177 = vrot.slane %v409, %v1176
    %v1178 = vlaneseq
    %v1179 = vshrl.u32 %v1178, 7
    %v1180 = vsub.s32 2, %v1179
    %v1181 = vrot.slane %v409, %v1180
    %v1182 = vlaneseq
    %v1183 = vshrl.u32 %v1182, 7
    %v1184 = vsub.s32 3, %v1183
    %v1185 = vrot.slane %v409, %v1184
    %v1186 = vlaneseq
    %v1187 = vshrl.u32 %v1186, 7
    %v1188 = vsub.s32 4, %v1187
    %v1189 = vrot.slane %v409, %v1188
    %v1190 = vlaneseq
    %v1191 = vshrl.u32 %v1190, 7
    %v1192 = vsub.s32 5, %v1191
    %v1193 = vrot.slane %v409, %v1192
    %v1194 = vlaneseq
    %v1195 = vshrl.u32 %v1194, 7
    %v1196 = vsub.s32 6, %v1195
    %v1197 = vrot.slane %v409, %v1196
    %v1198 = vlaneseq
    %v1199 = vshrl.u32 %v1198, 7
    %v1200 = vsub.s32 7, %v1199
    %v1201 = vrot.slane %v409, %v1200
    %v1210 = vmul.f32 %v739, %v1173
    %v1211 = vmul.f32 %v741, %v1177
    %v1212 = vmul.f32 %v881, %v1181
    %v1213 = vmul.f32 %v883, %v1185
    %v1214 = vmul.f32 %v1023, %v1189
    %v1215 = vmul.f32 %v1025, %v1193
    %v1216 = vmul.f32 %v1165, %v1197
    %v1217 = vmul.f32 %v1167, %v1201
    %vm1218 = vcmask 1041408
    %v1219 = vsel %vm1218, %v1210, 0.0
    %v1220 = vsel %vm1218, %v1211, 0.0
    %v1221 = vadd.f32 %v1219, %v1220
    %v1222 = vsel %vm1218, %v1212, 0.0
    %v1223 = vadd.f32 %v1221, %v1222
    %v1224 = vsel %vm1218, %v1213, 0.0
    %v1225 = vadd.f32 %v1223, %v1224
    %v1226 = vsel %vm1218, %v1214, 0.0
    %v1227 = vadd.f32 %v1225, %v1226
    %v1228 = vsel %vm1218, %v1215, 0.0
    %v1229 = vadd.f32 %v1227, %v1228
    %v1230 = vsel %vm1218, %v1216, 0.0
    %v1231 = vadd.f32 %v1229, %v1230
    %v1232 = vsel %vm1218, %v1217, 0.0
    %v1233 = vadd.f32 %v1231, %v1232
    %1234 = vadd.xlane.f32.xlu0 %v1233
    %v1235 = vpop.xlane.xlu0 %1234
    %v1236 = vsel %vm1218, %v1235, -inf
    %v1237 = vrot.slane %v1236, 4
    %v1238 = vmax.f32 %v1236, %v1237
    %v1239 = vrot.slane %v1238, 2
    %v1240 = vmax.f32 %v1238, %v1239
    %v1241 = vrot.slane %v1240, 1
    %v1242 = vmax.f32 %v1240, %v1241
    %v1243 = vsub.f32 %v1235, %v1242
    %v1244 = vmul.f32 %v1243, 1.442695
    %v1245 = vpow.pop %v1244
    %v1246 = vsel %vm1218, %v1245, 0.0
    %v1247 = vrot.slane %v1246, 4
    %v1248 = vadd.f32 %v1246, %v1247
    %v1249 = vrot.slane %v1248, 2
    %v1250 = vadd.f32 %v1248, %v1249
    %v1251 = vrot.slane %v1250, 1
    %v1252 = vadd.f32 %v1250, %v1251
    %v1253 = vrcp.pop %v1252
    %v1254 = vmul.f32 %v1245, %v1253
    %v1255 = vmul.f32 %v1254, %v739
    %v1256 = vmul.f32 %v1254, %v741
    %v1257 = vmul.f32 %v1254, %v881
    %v1258 = vmul.f32 %v1254, %v883
    %v1259 = vmul.f32 %v1254, %v1023
    %v1260 = vmul.f32 %v1254, %v1025
    %v1261 = vmul.f32 %v1254, %v1165
    %v1262 = vmul.f32 %v1254, %v1167
    %v1263 = vsel %vm1218, %v1255, 0.0
    %v1264 = vrot.slane %v1263, 4
    %v1265 = vadd.f32 %v1263, %v1264
    %v1266 = vrot.slane %v1265, 2
    %v1267 = vadd.f32 %v1265, %v1266
    %v1268 = vrot.slane %v1267, 1
    %v1269 = vadd.f32 %v1267, %v1268
    %v1270 = vsel %vm1218, %v1256, 0.0
    %v1271 = vrot.slane %v1270, 4
    %v1272 = vadd.f32 %v1270, %v1271
    %v1273 = vrot.slane %v1272, 2
    %v1274 = vadd.f32 %v1272, %v1273
    %v1275 = vrot.slane %v1274, 1
    %v1276 = vadd.f32 %v1274, %v1275
    %v1277 = vsel %vm1218, %v1257, 0.0
    %v1278 = vrot.slane %v1277, 4
    %v1279 = vadd.f32 %v1277, %v1278
    %v1280 = vrot.slane %v1279, 2
    %v1281 = vadd.f32 %v1279, %v1280
    %v1282 = vrot.slane %v1281, 1
    %v1283 = vadd.f32 %v1281, %v1282
    %v1284 = vsel %vm1218, %v1258, 0.0
    %v1285 = vrot.slane %v1284, 4
    %v1286 = vadd.f32 %v1284, %v1285
    %v1287 = vrot.slane %v1286, 2
    %v1288 = vadd.f32 %v1286, %v1287
    %v1289 = vrot.slane %v1288, 1
    %v1290 = vadd.f32 %v1288, %v1289
    %v1291 = vsel %vm1218, %v1259, 0.0
    %v1292 = vrot.slane %v1291, 4
    %v1293 = vadd.f32 %v1291, %v1292
    %v1294 = vrot.slane %v1293, 2
    %v1295 = vadd.f32 %v1293, %v1294
    %v1296 = vrot.slane %v1295, 1
    %v1297 = vadd.f32 %v1295, %v1296
    %v1298 = vsel %vm1218, %v1260, 0.0
    %v1299 = vrot.slane %v1298, 4
    %v1300 = vadd.f32 %v1298, %v1299
    %v1301 = vrot.slane %v1300, 2
    %v1302 = vadd.f32 %v1300, %v1301
    %v1303 = vrot.slane %v1302, 1
    %v1304 = vadd.f32 %v1302, %v1303
    %v1305 = vsel %vm1218, %v1261, 0.0
    %v1306 = vrot.slane %v1305, 4
    %v1307 = vadd.f32 %v1305, %v1306
    %v1308 = vrot.slane %v1307, 2
    %v1309 = vadd.f32 %v1307, %v1308
    %v1310 = vrot.slane %v1309, 1
    %v1311 = vadd.f32 %v1309, %v1310
    %v1312 = vsel %vm1218, %v1262, 0.0
    %v1313 = vrot.slane %v1312, 4
    %v1314 = vadd.f32 %v1312, %v1313
    %v1315 = vrot.slane %v1314, 2
    %v1316 = vadd.f32 %v1314, %v1315
    %v1317 = vrot.slane %v1316, 1
    %v1318 = vadd.f32 %v1316, %v1317
    %1319 = vmatprep.subr.mxu0 0.0
    %1320 = vmatpush1.msra.mxu0 %v410
    %1321 = vmatprep.subr.mxu0 0.0
    %1322 = vmatpush1.msra.mxu0 %v411
    %1323 = vmatprep.subr.mxu0 0.0
    %1324 = vmatpush1.msra.mxu0 %v412
    %1325 = vmatprep.subr.mxu0 0.0
    %1326 = vmatpush1.msra.mxu0 %v413
    %1327 = vmatprep.subr.mxu0 0.0
    %1328 = vmatpush1.msra.mxu0 %v414
    %1329 = vmatprep.subr.mxu0 0.0
    %1330 = vmatpush1.msra.mxu0 %v415
    %1331 = vmatprep.subr.mxu0 0.0
    %1332 = vmatpush1.msra.mxu0 %v416
    %1333 = vmatprep.subr.mxu0 0.0
    %1334 = vmatpush1.msra.mxu0 %v417
    %1335 = vmatprep.subr.mxu0 0.0
    %1336 = vmatpush1.msra.mxu0 %v418
    %1337 = vmatprep.subr.mxu0 0.0
    %1338 = vmatpush1.msra.mxu0 %v419
    %1339 = vmatprep.subr.mxu0 0.0
    %1340 = vmatpush1.msra.mxu0 %v420
    %1341 = vmatprep.subr.mxu0 0.0
    %1342 = vmatpush1.msra.mxu0 %v421
    %1343 = vmatprep.subr.mxu0 0.0
    %1344 = vmatpush1.msra.mxu0 %v422
    %1345 = vmatprep.subr.mxu0 0.0
    %1346 = vmatpush1.msra.mxu0 %v423
    %1347 = vmatprep.subr.mxu0 0.0
    %1348 = vmatpush1.msra.mxu0 %v424
    %1349 = vmatprep.subr.mxu0 0.0
    %1350 = vmatpush1.msra.mxu0 %v425
    %1351 = vmatprep.subr.mxu0 0.0
    %1352 = vmatpush1.msra.mxu0 %v426
    %1353 = vmatprep.subr.mxu0 0.0
    %1354 = vmatpush1.msra.mxu0 %v427
    %1355 = vmatprep.subr.mxu0 0.0
    %1356 = vmatpush1.msra.mxu0 %v428
    %1357 = vmatprep.subr.mxu0 0.0
    %1358 = vmatpush1.msra.mxu0 %v429
    %1359 = vmatprep.subr.mxu0 0.0
    %1360 = vmatpush1.msra.mxu0 %v430
    %1361 = vmatprep.subr.mxu0 0.0
    %1362 = vmatpush1.msra.mxu0 %v431
    %1363 = vmatprep.subr.mxu0 0.0
    %1364 = vmatpush1.msra.mxu0 %v432
    %1365 = vmatprep.subr.mxu0 0.0
    %1366 = vmatpush1.msra.mxu0 %v433
    %1367 = vmatprep.subr.mxu0 0.0
    %1368 = vmatpush1.msra.mxu0 %v434
    %1369 = vmatprep.subr.mxu0 0.0
    %1370 = vmatpush1.msra.mxu0 %v435
    %1371 = vmatprep.subr.mxu0 0.0
    %1372 = vmatpush1.msra.mxu0 %v436
    %1373 = vmatprep.subr.mxu0 0.0
    %1374 = vmatpush1.msra.mxu0 %v437
    %1375 = vmatprep.subr.mxu0 0.0
    %1376 = vmatpush1.msra.mxu0 %v438
    %1377 = vmatprep.subr.mxu0 0.0
    %1378 = vmatpush1.msra.mxu0 %v439
    %1379 = vmatprep.subr.mxu0 0.0
    %1380 = vmatpush1.msra.mxu0 %v440
    %1381 = vmatprep.subr.mxu0 0.0
    %1382 = vmatpush1.msra.mxu0 %v441
    %1383 = vmatprep.mubr.f32.mxu0 %v1276
    %1384 = vmatmul.mubr.f32.gmra.mrb[0].mxu0 %v1269
    %v1385 = vpop.f32.mrb[0].mxu0
    %v1386 = vadd.f32 %v538, %v1385
    %v1387 = vpop.f32.mrb[0].mxu0
    %1388 = vdwg.mxu0
    %1389 = vmatprep.subr.mxu0 0.0
    %1390 = vmatpush1.msra.mxu0 %v442
    %1391 = vmatprep.subr.mxu0 0.0
    %1392 = vmatpush1.msra.mxu0 %v443
    %1393 = vmatprep.subr.mxu0 0.0
    %1394 = vmatpush1.msra.mxu0 %v444
    %1395 = vmatprep.subr.mxu0 0.0
    %1396 = vmatpush1.msra.mxu0 %v445
    %1397 = vmatprep.subr.mxu0 0.0
    %1398 = vmatpush1.msra.mxu0 %v446
    %1399 = vmatprep.subr.mxu0 0.0
    %1400 = vmatpush1.msra.mxu0 %v447
    %1401 = vmatprep.subr.mxu0 0.0
    %1402 = vmatpush1.msra.mxu0 %v448
    %1403 = vmatprep.subr.mxu0 0.0
    %1404 = vmatpush1.msra.mxu0 %v449
    %1405 = vmatprep.subr.mxu0 0.0
    %1406 = vmatpush1.msra.mxu0 %v450
    %1407 = vmatprep.subr.mxu0 0.0
    %1408 = vmatpush1.msra.mxu0 %v451
    %1409 = vmatprep.subr.mxu0 0.0
    %1410 = vmatpush1.msra.mxu0 %v452
    %1411 = vmatprep.subr.mxu0 0.0
    %1412 = vmatpush1.msra.mxu0 %v453
    %1413 = vmatprep.subr.mxu0 0.0
    %1414 = vmatpush1.msra.mxu0 %v454
    %1415 = vmatprep.subr.mxu0 0.0
    %1416 = vmatpush1.msra.mxu0 %v455
    %1417 = vmatprep.subr.mxu0 0.0
    %1418 = vmatpush1.msra.mxu0 %v456
    %1419 = vmatprep.subr.mxu0 0.0
    %1420 = vmatpush1.msra.mxu0 %v457
    %1421 = vmatprep.subr.mxu0 0.0
    %1422 = vmatpush1.msra.mxu0 %v458
    %1423 = vmatprep.subr.mxu0 0.0
    %1424 = vmatpush1.msra.mxu0 %v459
    %1425 = vmatprep.subr.mxu0 0.0
    %1426 = vmatpush1.msra.mxu0 %v460
    %1427 = vmatprep.subr.mxu0 0.0
    %1428 = vmatpush1.msra.mxu0 %v461
    %1429 = vmatprep.subr.mxu0 0.0
    %1430 = vmatpush1.msra.mxu0 %v462
    %1431 = vmatprep.subr.mxu0 0.0
    %1432 = vmatpush1.msra.mxu0 %v463
    %1433 = vmatprep.subr.mxu0 0.0
    %1434 = vmatpush1.msra.mxu0 %v464
    %1435 = vmatprep.subr.mxu0 0.0
    %1436 = vmatpush1.msra.mxu0 %v465
    %1437 = vmatprep.subr.mxu0 0.0
    %1438 = vmatpush1.msra.mxu0 %v466
    %1439 = vmatprep.subr.mxu0 0.0
    %1440 = vmatpush1.msra.mxu0 %v467
    %1441 = vmatprep.subr.mxu0 0.0
    %1442 = vmatpush1.msra.mxu0 %v468
    %1443 = vmatprep.subr.mxu0 0.0
    %1444 = vmatpush1.msra.mxu0 %v469
    %1445 = vmatprep.subr.mxu0 0.0
    %1446 = vmatpush1.msra.mxu0 %v470
    %1447 = vmatprep.subr.mxu0 0.0
    %1448 = vmatpush1.msra.mxu0 %v471
    %1449 = vmatprep.subr.mxu0 0.0
    %1450 = vmatpush1.msra.mxu0 %v472
    %1451 = vmatprep.subr.mxu0 0.0
    %1452 = vmatpush1.msra.mxu0 %v473
    %1453 = vmatprep.mubr.f32.mxu0 %v1290
    %1454 = vmatmul.mubr.f32.gmra.mrb[0].mxu0 %v1283
    %v1455 = vpop.f32.mrb[0].mxu0
    %v1456 = vadd.f32 %v1386, %v1455
    %v1457 = vpop.f32.mrb[0].mxu0
    %1458 = vdwg.mxu0
    %1459 = vmatprep.subr.mxu0 0.0
    %1460 = vmatpush1.msra.mxu0 %v474
    %1461 = vmatprep.subr.mxu0 0.0
    %1462 = vmatpush1.msra.mxu0 %v475
    %1463 = vmatprep.subr.mxu0 0.0
    %1464 = vmatpush1.msra.mxu0 %v476
    %1465 = vmatprep.subr.mxu0 0.0
    %1466 = vmatpush1.msra.mxu0 %v477
    %1467 = vmatprep.subr.mxu0 0.0
    %1468 = vmatpush1.msra.mxu0 %v478
    %1469 = vmatprep.subr.mxu0 0.0
    %1470 = vmatpush1.msra.mxu0 %v479
    %1471 = vmatprep.subr.mxu0 0.0
    %1472 = vmatpush1.msra.mxu0 %v480
    %1473 = vmatprep.subr.mxu0 0.0
    %1474 = vmatpush1.msra.mxu0 %v481
    %1475 = vmatprep.subr.mxu0 0.0
    %1476 = vmatpush1.msra.mxu0 %v482
    %1477 = vmatprep.subr.mxu0 0.0
    %1478 = vmatpush1.msra.mxu0 %v483
    %1479 = vmatprep.subr.mxu0 0.0
    %1480 = vmatpush1.msra.mxu0 %v484
    %1481 = vmatprep.subr.mxu0 0.0
    %1482 = vmatpush1.msra.mxu0 %v485
    %1483 = vmatprep.subr.mxu0 0.0
    %1484 = vmatpush1.msra.mxu0 %v486
    %1485 = vmatprep.subr.mxu0 0.0
    %1486 = vmatpush1.msra.mxu0 %v487
    %1487 = vmatprep.subr.mxu0 0.0
    %1488 = vmatpush1.msra.mxu0 %v488
    %1489 = vmatprep.subr.mxu0 0.0
    %1490 = vmatpush1.msra.mxu0 %v489
    %1491 = vmatprep.subr.mxu0 0.0
    %1492 = vmatpush1.msra.mxu0 %v490
    %1493 = vmatprep.subr.mxu0 0.0
    %1494 = vmatpush1.msra.mxu0 %v491
    %1495 = vmatprep.subr.mxu0 0.0
    %1496 = vmatpush1.msra.mxu0 %v492
    %1497 = vmatprep.subr.mxu0 0.0
    %1498 = vmatpush1.msra.mxu0 %v493
    %1499 = vmatprep.subr.mxu0 0.0
    %1500 = vmatpush1.msra.mxu0 %v494
    %1501 = vmatprep.subr.mxu0 0.0
    %1502 = vmatpush1.msra.mxu0 %v495
    %1503 = vmatprep.subr.mxu0 0.0
    %1504 = vmatpush1.msra.mxu0 %v496
    %1505 = vmatprep.subr.mxu0 0.0
    %1506 = vmatpush1.msra.mxu0 %v497
    %1507 = vmatprep.subr.mxu0 0.0
    %1508 = vmatpush1.msra.mxu0 %v498
    %1509 = vmatprep.subr.mxu0 0.0
    %1510 = vmatpush1.msra.mxu0 %v499
    %1511 = vmatprep.subr.mxu0 0.0
    %1512 = vmatpush1.msra.mxu0 %v500
    %1513 = vmatprep.subr.mxu0 0.0
    %1514 = vmatpush1.msra.mxu0 %v501
    %1515 = vmatprep.subr.mxu0 0.0
    %1516 = vmatpush1.msra.mxu0 %v502
    %1517 = vmatprep.subr.mxu0 0.0
    %1518 = vmatpush1.msra.mxu0 %v503
    %1519 = vmatprep.subr.mxu0 0.0
    %1520 = vmatpush1.msra.mxu0 %v504
    %1521 = vmatprep.subr.mxu0 0.0
    %1522 = vmatpush1.msra.mxu0 %v505
    %1523 = vmatprep.mubr.f32.mxu0 %v1304
    %1524 = vmatmul.mubr.f32.gmra.mrb[0].mxu0 %v1297
    %v1525 = vpop.f32.mrb[0].mxu0
    %v1526 = vadd.f32 %v1456, %v1525
    %v1527 = vpop.f32.mrb[0].mxu0
    %1528 = vdwg.mxu0
    %1529 = vmatprep.subr.mxu0 0.0
    %1530 = vmatpush1.msra.mxu0 %v506
    %1531 = vmatprep.subr.mxu0 0.0
    %1532 = vmatpush1.msra.mxu0 %v507
    %1533 = vmatprep.subr.mxu0 0.0
    %1534 = vmatpush1.msra.mxu0 %v508
    %1535 = vmatprep.subr.mxu0 0.0
    %1536 = vmatpush1.msra.mxu0 %v509
    %1537 = vmatprep.subr.mxu0 0.0
    %1538 = vmatpush1.msra.mxu0 %v510
    %1539 = vmatprep.subr.mxu0 0.0
    %1540 = vmatpush1.msra.mxu0 %v511
    %1541 = vmatprep.subr.mxu0 0.0
    %1542 = vmatpush1.msra.mxu0 %v512
    %1543 = vmatprep.subr.mxu0 0.0
    %1544 = vmatpush1.msra.mxu0 %v513
    %1545 = vmatprep.subr.mxu0 0.0
    %1546 = vmatpush1.msra.mxu0 %v514
    %1547 = vmatprep.subr.mxu0 0.0
    %1548 = vmatpush1.msra.mxu0 %v515
    %1549 = vmatprep.subr.mxu0 0.0
    %1550 = vmatpush1.msra.mxu0 %v516
    %1551 = vmatprep.subr.mxu0 0.0
    %1552 = vmatpush1.msra.mxu0 %v517
    %1553 = vmatprep.subr.mxu0 0.0
    %1554 = vmatpush1.msra.mxu0 %v518
    %1555 = vmatprep.subr.mxu0 0.0
    %1556 = vmatpush1.msra.mxu0 %v519
    %1557 = vmatprep.subr.mxu0 0.0
    %1558 = vmatpush1.msra.mxu0 %v520
    %1559 = vmatprep.subr.mxu0 0.0
    %1560 = vmatpush1.msra.mxu0 %v521
    %1561 = vmatprep.subr.mxu0 0.0
    %1562 = vmatpush1.msra.mxu0 %v522
    %1563 = vmatprep.subr.mxu0 0.0
    %1564 = vmatpush1.msra.mxu0 %v523
    %1565 = vmatprep.subr.mxu0 0.0
    %1566 = vmatpush1.msra.mxu0 %v524
    %1567 = vmatprep.subr.mxu0 0.0
    %1568 = vmatpush1.msra.mxu0 %v525
    %1569 = vmatprep.subr.mxu0 0.0
    %1570 = vmatpush1.msra.mxu0 %v526
    %1571 = vmatprep.subr.mxu0 0.0
    %1572 = vmatpush1.msra.mxu0 %v527
    %1573 = vmatprep.subr.mxu0 0.0
    %1574 = vmatpush1.msra.mxu0 %v528
    %1575 = vmatprep.subr.mxu0 0.0
    %1576 = vmatpush1.msra.mxu0 %v529
    %1577 = vmatprep.subr.mxu0 0.0
    %1578 = vmatpush1.msra.mxu0 %v530
    %1579 = vmatprep.subr.mxu0 0.0
    %1580 = vmatpush1.msra.mxu0 %v531
    %1581 = vmatprep.subr.mxu0 0.0
    %1582 = vmatpush1.msra.mxu0 %v532
    %1583 = vmatprep.subr.mxu0 0.0
    %1584 = vmatpush1.msra.mxu0 %v533
    %1585 = vmatprep.subr.mxu0 0.0
    %1586 = vmatpush1.msra.mxu0 %v534
    %1587 = vmatprep.subr.mxu0 0.0
    %1588 = vmatpush1.msra.mxu0 %v535
    %1589 = vmatprep.subr.mxu0 0.0
    %1590 = vmatpush1.msra.mxu0 %v536
    %1591 = vmatprep.subr.mxu0 0.0
    %1592 = vmatpush1.msra.mxu0 %v537
    %1593 = vmatprep.mubr.f32.mxu0 %v1318
    %1594 = vmatmul.mubr.f32.gmra.mrb[0].mxu0 %v1311
    %v1595 = vpop.f32.mrb[0].mxu0
    %v1596 = vadd.f32 %v1526, %v1595
    %v1597 = vpop.f32.mrb[0].mxu0
    %1598 = vdwg.mxu0
    %1599 = vst [vmem:[#allocation2] sm:$0x1] %v1596
    %s1600 = scalar_lea.vmem %s0, 6
    %v1601 = vld [vmem:[%s1600] sm:$0x3f]
    %v1603 = vcombine.high %v1601, %v1601
    %v1605 = vunpack.c.l.s4 1983009808
    %v1606 = vunpack.c.0.s8 %v1605
    %v1607 = vlaneseq
    %v1608 = vshrl.u32 %v1607, 7
    %v1609 = vsub.s32 %v1606, %v1608
    %v1610 = vrot.slane %v1601, %v1609
    %v1612 = vunpack.c.l.s4 1983009808
    %v1613 = vunpack.c.0.s8 %v1612
    %v1614 = vlaneseq
    %v1615 = vshrl.u32 %v1614, 7
    %v1616 = vsub.s32 %v1613, %v1615
    %v1617 = vrot.slane %v1603, %v1616
    %v1618 = vcombine.high %v1610, %v1610
    %1622 = vmatprep.subr.mxu0 %v25
    %1623 = vmatpush1.msra.mxu0 %v24
    %1624 = vmatprep.subr.mxu0 %v33
    %1625 = vmatpush1.msra.mxu0 %v32
    %1626 = vmatprep.subr.mxu0 %v41
    %1627 = vmatpush1.msra.mxu0 %v40
    %1628 = vmatprep.subr.mxu0 %v49
    %1629 = vmatpush1.msra.mxu0 %v48
    %1630 = vmatprep.subr.mxu0 %v57
    %1631 = vmatpush1.msra.mxu0 %v56
    %1632 = vmatprep.subr.mxu0 %v65
    %1633 = vmatpush1.msra.mxu0 %v64
    %1634 = vmatprep.subr.mxu0 %v73
    %1635 = vmatpush1.msra.mxu0 %v72
    %1636 = vmatprep.subr.mxu0 %v81
    %1637 = vmatpush1.msra.mxu0 %v80
    %1638 = vmatprep.subr.mxu0 %v89
    %1639 = vmatpush1.msra.mxu0 %v88
    %1640 = vmatprep.subr.mxu0 %v97
    %1641 = vmatpush1.msra.mxu0 %v96
    %1642 = vmatprep.subr.mxu0 %v105
    %1643 = vmatpush1.msra.mxu0 %v104
    %1644 = vmatprep.subr.mxu0 %v113
    %1645 = vmatpush1.msra.mxu0 %v112
    %1646 = vmatprep.subr.mxu0 %v121
    %1647 = vmatpush1.msra.mxu0 %v120
    %1648 = vmatprep.subr.mxu0 %v129
    %1649 = vmatpush1.msra.mxu0 %v128
    %1650 = vmatprep.subr.mxu0 %v137
    %1651 = vmatpush1.msra.mxu0 %v136
    %1652 = vmatprep.subr.mxu0 %v145
    %1653 = vmatpush1.msra.mxu0 %v144
    %1654 = vmatprep.subr.mxu0 %v153
    %1655 = vmatpush1.msra.mxu0 %v152
    %1656 = vmatprep.subr.mxu0 %v161
    %1657 = vmatpush1.msra.mxu0 %v160
    %1658 = vmatprep.subr.mxu0 %v169
    %1659 = vmatpush1.msra.mxu0 %v168
    %1660 = vmatprep.subr.mxu0 %v177
    %1661 = vmatpush1.msra.mxu0 %v176
    %1662 = vmatprep.subr.mxu0 %v185
    %1663 = vmatpush1.msra.mxu0 %v184
    %1664 = vmatprep.subr.mxu0 %v193
    %1665 = vmatpush1.msra.mxu0 %v192
    %1666 = vmatprep.subr.mxu0 %v201
    %1667 = vmatpush1.msra.mxu0 %v200
    %1668 = vmatprep.subr.mxu0 %v209
    %1669 = vmatpush1.msra.mxu0 %v208
    %1670 = vmatprep.subr.mxu0 %v217
    %1671 = vmatpush1.msra.mxu0 %v216
    %1672 = vmatprep.subr.mxu0 %v225
    %1673 = vmatpush1.msra.mxu0 %v224
    %1674 = vmatprep.subr.mxu0 %v233
    %1675 = vmatpush1.msra.mxu0 %v232
    %1676 = vmatprep.subr.mxu0 %v241
    %1677 = vmatpush1.msra.mxu0 %v240
    %1678 = vmatprep.subr.mxu0 %v249
    %1679 = vmatpush1.msra.mxu0 %v248
    %1680 = vmatprep.subr.mxu0 %v257
    %1681 = vmatpush1.msra.mxu0 %v256
    %1682 = vmatprep.subr.mxu0 %v265
    %1683 = vmatpush1.msra.mxu0 %v264
    %1684 = vmatprep.subr.mxu0 %v273
    %1685 = vmatpush1.msra.mxu0 %v272
    %1686 = vmatprep.mubr.f32.mxu0 %v1618
    %1687 = vmatmul.mubr.f32.gmra.mrb[0].mxu0 %v1610
    %v1688 = vpop.f32.mrb[0].mxu0
    %v1689 = vadd.f32 %v544, %v1688
    %v1690 = vpop.f32.mrb[0].mxu0
    %v1691 = vadd.f32 %v548, %v1690
    %1692 = vdwg.mxu0
    %1693 = vmatprep.subr.mxu0 %v281
    %1694 = vmatpush1.msra.mxu0 %v280
    %1695 = vmatprep.subr.mxu0 %v289
    %1696 = vmatpush1.msra.mxu0 %v288
    %1697 = vmatprep.subr.mxu0 %v297
    %1698 = vmatpush1.msra.mxu0 %v296
    %1699 = vmatprep.subr.mxu0 %v305
    %1700 = vmatpush1.msra.mxu0 %v304
    %1701 = vmatprep.subr.mxu0 %v313
    %1702 = vmatpush1.msra.mxu0 %v312
    %1703 = vmatprep.subr.mxu0 %v321
    %1704 = vmatpush1.msra.mxu0 %v320
    %1705 = vmatprep.subr.mxu0 %v329
    %1706 = vmatpush1.msra.mxu0 %v328
    %1707 = vmatprep.subr.mxu0 %v337
    %1708 = vmatpush1.msra.mxu0 %v336
    %1709 = vmatprep.subr.mxu0 %v345
    %1710 = vmatpush1.msra.mxu0 %v344
    %1711 = vmatprep.subr.mxu0 %v353
    %1712 = vmatpush1.msra.mxu0 %v352
    %1713 = vmatprep.subr.mxu0 %v361
    %1714 = vmatpush1.msra.mxu0 %v360
    %1715 = vmatprep.subr.mxu0 %v369
    %1716 = vmatpush1.msra.mxu0 %v368
    %1717 = vmatprep.subr.mxu0 %v377
    %1718 = vmatpush1.msra.mxu0 %v376
    %1719 = vmatprep.subr.mxu0 %v385
    %1720 = vmatpush1.msra.mxu0 %v384
    %1721 = vmatprep.subr.mxu0 %v393
    %1722 = vmatpush1.msra.mxu0 %v392
    %1723 = vmatprep.subr.mxu0 %v401
    %1724 = vmatpush1.msra.mxu0 %v400
    %1725 = vmatprep.subr.mxu0 0.0
    %1726 = vmatpush1.msra.mxu0 0.0
    %1727 = vmatprep.subr.mxu0 0.0
    %1728 = vmatpush1.msra.mxu0 0.0
    %1729 = vmatprep.subr.mxu0 0.0
    %1730 = vmatpush1.msra.mxu0 0.0
    %1731 = vmatprep.subr.mxu0 0.0
    %1732 = vmatpush1.msra.mxu0 0.0
    %1733 = vmatprep.subr.mxu0 0.0
    %1734 = vmatpush1.msra.mxu0 0.0
    %1735 = vmatprep.subr.mxu0 0.0
    %1736 = vmatpush1.msra.mxu0 0.0
    %1737 = vmatprep.subr.mxu0 0.0
    %1738 = vmatpush1.msra.mxu0 0.0
    %1739 = vmatprep.subr.mxu0 0.0
    %1740 = vmatpush1.msra.mxu0 0.0
    %1741 = vmatprep.subr.mxu0 0.0
    %1742 = vmatpush1.msra.mxu0 0.0
    %1743 = vmatprep.subr.mxu0 0.0
    %1744 = vmatpush1.msra.mxu0 0.0
    %1745 = vmatprep.subr.mxu0 0.0
    %1746 = vmatpush1.msra.mxu0 0.0
    %1747 = vmatprep.subr.mxu0 0.0
    %1748 = vmatpush1.msra.mxu0 0.0
    %1749 = vmatprep.subr.mxu0 0.0
    %1750 = vmatpush1.msra.mxu0 0.0
    %1751 = vmatprep.subr.mxu0 0.0
    %1752 = vmatpush1.msra.mxu0 0.0
    %1753 = vmatprep.subr.mxu0 0.0
    %1754 = vmatpush1.msra.mxu0 0.0
    %1755 = vmatprep.subr.mxu0 0.0
    %1756 = vmatpush1.msra.mxu0 0.0
    %1757 = vmatprep.mubr.f32.mxu0 0.0
    %1758 = vmatmul.mubr.f32.gmra.mrb[0].mxu0 %v1617
    %v1759 = vpop.f32.mrb[0].mxu0
    %v1760 = vadd.f32 %v1689, %v1759
    %v1761 = vpop.f32.mrb[0].mxu0
    %v1762 = vadd.f32 %v1691, %v1761
    %1763 = vdwg.mxu0
    %1764 = vmatprep.subr.mxu0 %v27
    %1765 = vmatpush1.msra.mxu0 %v26
    %1766 = vmatprep.subr.mxu0 %v35
    %1767 = vmatpush1.msra.mxu0 %v34
    %1768 = vmatprep.subr.mxu0 %v43
    %1769 = vmatpush1.msra.mxu0 %v42
    %1770 = vmatprep.subr.mxu0 %v51
    %1771 = vmatpush1.msra.mxu0 %v50
    %1772 = vmatprep.subr.mxu0 %v59
    %1773 = vmatpush1.msra.mxu0 %v58
    %1774 = vmatprep.subr.mxu0 %v67
    %1775 = vmatpush1.msra.mxu0 %v66
    %1776 = vmatprep.subr.mxu0 %v75
    %1777 = vmatpush1.msra.mxu0 %v74
    %1778 = vmatprep.subr.mxu0 %v83
    %1779 = vmatpush1.msra.mxu0 %v82
    %1780 = vmatprep.subr.mxu0 %v91
    %1781 = vmatpush1.msra.mxu0 %v90
    %1782 = vmatprep.subr.mxu0 %v99
    %1783 = vmatpush1.msra.mxu0 %v98
    %1784 = vmatprep.subr.mxu0 %v107
    %1785 = vmatpush1.msra.mxu0 %v106
    %1786 = vmatprep.subr.mxu0 %v115
    %1787 = vmatpush1.msra.mxu0 %v114
    %1788 = vmatprep.subr.mxu0 %v123
    %1789 = vmatpush1.msra.mxu0 %v122
    %1790 = vmatprep.subr.mxu0 %v131
    %1791 = vmatpush1.msra.mxu0 %v130
    %1792 = vmatprep.subr.mxu0 %v139
    %1793 = vmatpush1.msra.mxu0 %v138
    %1794 = vmatprep.subr.mxu0 %v147
    %1795 = vmatpush1.msra.mxu0 %v146
    %1796 = vmatprep.subr.mxu0 %v155
    %1797 = vmatpush1.msra.mxu0 %v154
    %1798 = vmatprep.subr.mxu0 %v163
    %1799 = vmatpush1.msra.mxu0 %v162
    %1800 = vmatprep.subr.mxu0 %v171
    %1801 = vmatpush1.msra.mxu0 %v170
    %1802 = vmatprep.subr.mxu0 %v179
    %1803 = vmatpush1.msra.mxu0 %v178
    %1804 = vmatprep.subr.mxu0 %v187
    %1805 = vmatpush1.msra.mxu0 %v186
    %1806 = vmatprep.subr.mxu0 %v195
    %1807 = vmatpush1.msra.mxu0 %v194
    %1808 = vmatprep.subr.mxu0 %v203
    %1809 = vmatpush1.msra.mxu0 %v202
    %1810 = vmatprep.subr.mxu0 %v211
    %1811 = vmatpush1.msra.mxu0 %v210
    %1812 = vmatprep.subr.mxu0 %v219
    %1813 = vmatpush1.msra.mxu0 %v218
    %1814 = vmatprep.subr.mxu0 %v227
    %1815 = vmatpush1.msra.mxu0 %v226
    %1816 = vmatprep.subr.mxu0 %v235
    %1817 = vmatpush1.msra.mxu0 %v234
    %1818 = vmatprep.subr.mxu0 %v243
    %1819 = vmatpush1.msra.mxu0 %v242
    %1820 = vmatprep.subr.mxu0 %v251
    %1821 = vmatpush1.msra.mxu0 %v250
    %1822 = vmatprep.subr.mxu0 %v259
    %1823 = vmatpush1.msra.mxu0 %v258
    %1824 = vmatprep.subr.mxu0 %v267
    %1825 = vmatpush1.msra.mxu0 %v266
    %1826 = vmatprep.subr.mxu0 %v275
    %1827 = vmatpush1.msra.mxu0 %v274
    %1828 = vmatprep.mubr.f32.mxu0 %v1618
    %1829 = vmatmul.mubr.f32.gmra.mrb[0].mxu0 %v1610
    %v1830 = vpop.f32.mrb[0].mxu0
    %v1831 = vadd.f32 %v552, %v1830
    %v1832 = vpop.f32.mrb[0].mxu0
    %v1833 = vadd.f32 %v556, %v1832
    %1834 = vdwg.mxu0
    %1835 = vmatprep.subr.mxu0 %v283
    %1836 = vmatpush1.msra.mxu0 %v282
    %1837 = vmatprep.subr.mxu0 %v291
    %1838 = vmatpush1.msra.mxu0 %v290
    %1839 = vmatprep.subr.mxu0 %v299
    %1840 = vmatpush1.msra.mxu0 %v298
    %1841 = vmatprep.subr.mxu0 %v307
    %1842 = vmatpush1.msra.mxu0 %v306
    %1843 = vmatprep.subr.mxu0 %v315
    %1844 = vmatpush1.msra.mxu0 %v314
    %1845 = vmatprep.subr.mxu0 %v323
    %1846 = vmatpush1.msra.mxu0 %v322
    %1847 = vmatprep.subr.mxu0 %v331
    %1848 = vmatpush1.msra.mxu0 %v330
    %1849 = vmatprep.subr.mxu0 %v339
    %1850 = vmatpush1.msra.mxu0 %v338
    %1851 = vmatprep.subr.mxu0 %v347
    %1852 = vmatpush1.msra.mxu0 %v346
    %1853 = vmatprep.subr.mxu0 %v355
    %1854 = vmatpush1.msra.mxu0 %v354
    %1855 = vmatprep.subr.mxu0 %v363
    %1856 = vmatpush1.msra.mxu0 %v362
    %1857 = vmatprep.subr.mxu0 %v371
    %1858 = vmatpush1.msra.mxu0 %v370
    %1859 = vmatprep.subr.mxu0 %v379
    %1860 = vmatpush1.msra.mxu0 %v378
    %1861 = vmatprep.subr.mxu0 %v387
    %1862 = vmatpush1.msra.mxu0 %v386
    %1863 = vmatprep.subr.mxu0 %v395
    %1864 = vmatpush1.msra.mxu0 %v394
    %1865 = vmatprep.subr.mxu0 %v403
    %1866 = vmatpush1.msra.mxu0 %v402
    %1867 = vmatprep.subr.mxu0 0.0
    %1868 = vmatpush1.msra.mxu0 0.0
    %1869 = vmatprep.subr.mxu0 0.0
    %1870 = vmatpush1.msra.mxu0 0.0
    %1871 = vmatprep.subr.mxu0 0.0
    %1872 = vmatpush1.msra.mxu0 0.0
    %1873 = vmatprep.subr.mxu0 0.0
    %1874 = vmatpush1.msra.mxu0 0.0
    %1875 = vmatprep.subr.mxu0 0.0
    %1876 = vmatpush1.msra.mxu0 0.0
    %1877 = vmatprep.subr.mxu0 0.0
    %1878 = vmatpush1.msra.mxu0 0.0
    %1879 = vmatprep.subr.mxu0 0.0
    %1880 = vmatpush1.msra.mxu0 0.0
    %1881 = vmatprep.subr.mxu0 0.0
    %1882 = vmatpush1.msra.mxu0 0.0
    %1883 = vmatprep.subr.mxu0 0.0
    %1884 = vmatpush1.msra.mxu0 0.0
    %1885 = vmatprep.subr.mxu0 0.0
    %1886 = vmatpush1.msra.mxu0 0.0
    %1887 = vmatprep.subr.mxu0 0.0
    %1888 = vmatpush1.msra.mxu0 0.0
    %1889 = vmatprep.subr.mxu0 0.0
    %1890 = vmatpush1.msra.mxu0 0.0
    %1891 = vmatprep.subr.mxu0 0.0
    %1892 = vmatpush1.msra.mxu0 0.0
    %1893 = vmatprep.subr.mxu0 0.0
    %1894 = vmatpush1.msra.mxu0 0.0
    %1895 = vmatprep.subr.mxu0 0.0
    %1896 = vmatpush1.msra.mxu0 0.0
    %1897 = vmatprep.subr.mxu0 0.0
    %1898 = vmatpush1.msra.mxu0 0.0
    %1899 = vmatprep.mubr.f32.mxu0 0.0
    %1900 = vmatmul.mubr.f32.gmra.mrb[0].mxu0 %v1617
    %v1901 = vpop.f32.mrb[0].mxu0
    %v1902 = vadd.f32 %v1831, %v1901
    %v1903 = vpop.f32.mrb[0].mxu0
    %v1904 = vadd.f32 %v1833, %v1903
    %1905 = vdwg.mxu0
    %1906 = vmatprep.subr.mxu0 %v29
    %1907 = vmatpush1.msra.mxu0 %v28
    %1908 = vmatprep.subr.mxu0 %v37
    %1909 = vmatpush1.msra.mxu0 %v36
    %1910 = vmatprep.subr.mxu0 %v45
    %1911 = vmatpush1.msra.mxu0 %v44
    %1912 = vmatprep.subr.mxu0 %v53
    %1913 = vmatpush1.msra.mxu0 %v52
    %1914 = vmatprep.subr.mxu0 %v61
    %1915 = vmatpush1.msra.mxu0 %v60
    %1916 = vmatprep.subr.mxu0 %v69
    %1917 = vmatpush1.msra.mxu0 %v68
    %1918 = vmatprep.subr.mxu0 %v77
    %1919 = vmatpush1.msra.mxu0 %v76
    %1920 = vmatprep.subr.mxu0 %v85
    %1921 = vmatpush1.msra.mxu0 %v84
    %1922 = vmatprep.subr.mxu0 %v93
    %1923 = vmatpush1.msra.mxu0 %v92
    %1924 = vmatprep.subr.mxu0 %v101
    %1925 = vmatpush1.msra.mxu0 %v100
    %1926 = vmatprep.subr.mxu0 %v109
    %1927 = vmatpush1.msra.mxu0 %v108
    %1928 = vmatprep.subr.mxu0 %v117
    %1929 = vmatpush1.msra.mxu0 %v116
    %1930 = vmatprep.subr.mxu0 %v125
    %1931 = vmatpush1.msra.mxu0 %v124
    %1932 = vmatprep.subr.mxu0 %v133
    %1933 = vmatpush1.msra.mxu0 %v132
    %1934 = vmatprep.subr.mxu0 %v141
    %1935 = vmatpush1.msra.mxu0 %v140
    %1936 = vmatprep.subr.mxu0 %v149
    %1937 = vmatpush1.msra.mxu0 %v148
    %1938 = vmatprep.subr.mxu0 %v157
    %1939 = vmatpush1.msra.mxu0 %v156
    %1940 = vmatprep.subr.mxu0 %v165
    %1941 = vmatpush1.msra.mxu0 %v164
    %1942 = vmatprep.subr.mxu0 %v173
    %1943 = vmatpush1.msra.mxu0 %v172
    %1944 = vmatprep.subr.mxu0 %v181
    %1945 = vmatpush1.msra.mxu0 %v180
    %1946 = vmatprep.subr.mxu0 %v189
    %1947 = vmatpush1.msra.mxu0 %v188
    %1948 = vmatprep.subr.mxu0 %v197
    %1949 = vmatpush1.msra.mxu0 %v196
    %1950 = vmatprep.subr.mxu0 %v205
    %1951 = vmatpush1.msra.mxu0 %v204
    %1952 = vmatprep.subr.mxu0 %v213
    %1953 = vmatpush1.msra.mxu0 %v212
    %1954 = vmatprep.subr.mxu0 %v221
    %1955 = vmatpush1.msra.mxu0 %v220
    %1956 = vmatprep.subr.mxu0 %v229
    %1957 = vmatpush1.msra.mxu0 %v228
    %1958 = vmatprep.subr.mxu0 %v237
    %1959 = vmatpush1.msra.mxu0 %v236
    %1960 = vmatprep.subr.mxu0 %v245
    %1961 = vmatpush1.msra.mxu0 %v244
    %1962 = vmatprep.subr.mxu0 %v253
    %1963 = vmatpush1.msra.mxu0 %v252
    %1964 = vmatprep.subr.mxu0 %v261
    %1965 = vmatpush1.msra.mxu0 %v260
    %1966 = vmatprep.subr.mxu0 %v269
    %1967 = vmatpush1.msra.mxu0 %v268
    %1968 = vmatprep.subr.mxu0 %v277
    %1969 = vmatpush1.msra.mxu0 %v276
    %1970 = vmatprep.mubr.f32.mxu0 %v1618
    %1971 = vmatmul.mubr.f32.gmra.mrb[0].mxu0 %v1610
    %v1972 = vpop.f32.mrb[0].mxu0
    %v1973 = vadd.f32 %v560, %v1972
    %v1974 = vpop.f32.mrb[0].mxu0
    %v1975 = vadd.f32 %v564, %v1974
    %1976 = vdwg.mxu0
    %1977 = vmatprep.subr.mxu0 %v285
    %1978 = vmatpush1.msra.mxu0 %v284
    %1979 = vmatprep.subr.mxu0 %v293
    %1980 = vmatpush1.msra.mxu0 %v292
    %1981 = vmatprep.subr.mxu0 %v301
    %1982 = vmatpush1.msra.mxu0 %v300
    %1983 = vmatprep.subr.mxu0 %v309
    %1984 = vmatpush1.msra.mxu0 %v308
    %1985 = vmatprep.subr.mxu0 %v317
    %1986 = vmatpush1.msra.mxu0 %v316
    %1987 = vmatprep.subr.mxu0 %v325
    %1988 = vmatpush1.msra.mxu0 %v324
    %1989 = vmatprep.subr.mxu0 %v333
    %1990 = vmatpush1.msra.mxu0 %v332
    %1991 = vmatprep.subr.mxu0 %v341
    %1992 = vmatpush1.msra.mxu0 %v340
    %1993 = vmatprep.subr.mxu0 %v349
    %1994 = vmatpush1.msra.mxu0 %v348
    %1995 = vmatprep.subr.mxu0 %v357
    %1996 = vmatpush1.msra.mxu0 %v356
    %1997 = vmatprep.subr.mxu0 %v365
    %1998 = vmatpush1.msra.mxu0 %v364
    %1999 = vmatprep.subr.mxu0 %v373
    %2000 = vmatpush1.msra.mxu0 %v372
    %2001 = vmatprep.subr.mxu0 %v381
    %2002 = vmatpush1.msra.mxu0 %v380
    %2003 = vmatprep.subr.mxu0 %v389
    %2004 = vmatpush1.msra.mxu0 %v388
    %2005 = vmatprep.subr.mxu0 %v397
    %2006 = vmatpush1.msra.mxu0 %v396
    %2007 = vmatprep.subr.mxu0 %v405
    %2008 = vmatpush1.msra.mxu0 %v404
    %2009 = vmatprep.subr.mxu0 0.0
    %2010 = vmatpush1.msra.mxu0 0.0
    %2011 = vmatprep.subr.mxu0 0.0
    %2012 = vmatpush1.msra.mxu0 0.0
    %2013 = vmatprep.subr.mxu0 0.0
    %2014 = vmatpush1.msra.mxu0 0.0
    %2015 = vmatprep.subr.mxu0 0.0
    %2016 = vmatpush1.msra.mxu0 0.0
    %2017 = vmatprep.subr.mxu0 0.0
    %2018 = vmatpush1.msra.mxu0 0.0
    %2019 = vmatprep.subr.mxu0 0.0
    %2020 = vmatpush1.msra.mxu0 0.0
    %2021 = vmatprep.subr.mxu0 0.0
    %2022 = vmatpush1.msra.mxu0 0.0
    %2023 = vmatprep.subr.mxu0 0.0
    %2024 = vmatpush1.msra.mxu0 0.0
    %2025 = vmatprep.subr.mxu0 0.0
    %2026 = vmatpush1.msra.mxu0 0.0
    %2027 = vmatprep.subr.mxu0 0.0
    %2028 = vmatpush1.msra.mxu0 0.0
    %2029 = vmatprep.subr.mxu0 0.0
    %2030 = vmatpush1.msra.mxu0 0.0
    %2031 = vmatprep.subr.mxu0 0.0
    %2032 = vmatpush1.msra.mxu0 0.0
    %2033 = vmatprep.subr.mxu0 0.0
    %2034 = vmatpush1.msra.mxu0 0.0
    %2035 = vmatprep.subr.mxu0 0.0
    %2036 = vmatpush1.msra.mxu0 0.0
    %2037 = vmatprep.subr.mxu0 0.0
    %2038 = vmatpush1.msra.mxu0 0.0
    %2039 = vmatprep.subr.mxu0 0.0
    %2040 = vmatpush1.msra.mxu0 0.0
    %2041 = vmatprep.mubr.f32.mxu0 0.0
    %2042 = vmatmul.mubr.f32.gmra.mrb[0].mxu0 %v1617
    %v2043 = vpop.f32.mrb[0].mxu0
    %v2044 = vadd.f32 %v1973, %v2043
    %v2045 = vpop.f32.mrb[0].mxu0
    %v2046 = vadd.f32 %v1975, %v2045
    %2047 = vdwg.mxu0
    %2048 = vmatprep.subr.mxu0 %v31
    %2049 = vmatpush1.msra.mxu0 %v30
    %2050 = vmatprep.subr.mxu0 %v39
    %2051 = vmatpush1.msra.mxu0 %v38
    %2052 = vmatprep.subr.mxu0 %v47
    %2053 = vmatpush1.msra.mxu0 %v46
    %2054 = vmatprep.subr.mxu0 %v55
    %2055 = vmatpush1.msra.mxu0 %v54
    %2056 = vmatprep.subr.mxu0 %v63
    %2057 = vmatpush1.msra.mxu0 %v62
    %2058 = vmatprep.subr.mxu0 %v71
    %2059 = vmatpush1.msra.mxu0 %v70
    %2060 = vmatprep.subr.mxu0 %v79
    %2061 = vmatpush1.msra.mxu0 %v78
    %2062 = vmatprep.subr.mxu0 %v87
    %2063 = vmatpush1.msra.mxu0 %v86
    %2064 = vmatprep.subr.mxu0 %v95
    %2065 = vmatpush1.msra.mxu0 %v94
    %2066 = vmatprep.subr.mxu0 %v103
    %2067 = vmatpush1.msra.mxu0 %v102
    %2068 = vmatprep.subr.mxu0 %v111
    %2069 = vmatpush1.msra.mxu0 %v110
    %2070 = vmatprep.subr.mxu0 %v119
    %2071 = vmatpush1.msra.mxu0 %v118
    %2072 = vmatprep.subr.mxu0 %v127
    %2073 = vmatpush1.msra.mxu0 %v126
    %2074 = vmatprep.subr.mxu0 %v135
    %2075 = vmatpush1.msra.mxu0 %v134
    %2076 = vmatprep.subr.mxu0 %v143
    %2077 = vmatpush1.msra.mxu0 %v142
    %2078 = vmatprep.subr.mxu0 %v151
    %2079 = vmatpush1.msra.mxu0 %v150
    %2080 = vmatprep.subr.mxu0 %v159
    %2081 = vmatpush1.msra.mxu0 %v158
    %2082 = vmatprep.subr.mxu0 %v167
    %2083 = vmatpush1.msra.mxu0 %v166
    %2084 = vmatprep.subr.mxu0 %v175
    %2085 = vmatpush1.msra.mxu0 %v174
    %2086 = vmatprep.subr.mxu0 %v183
    %2087 = vmatpush1.msra.mxu0 %v182
    %2088 = vmatprep.subr.mxu0 %v191
    %2089 = vmatpush1.msra.mxu0 %v190
    %2090 = vmatprep.subr.mxu0 %v199
    %2091 = vmatpush1.msra.mxu0 %v198
    %2092 = vmatprep.subr.mxu0 %v207
    %2093 = vmatpush1.msra.mxu0 %v206
    %2094 = vmatprep.subr.mxu0 %v215
    %2095 = vmatpush1.msra.mxu0 %v214
    %2096 = vmatprep.subr.mxu0 %v223
    %2097 = vmatpush1.msra.mxu0 %v222
    %2098 = vmatprep.subr.mxu0 %v231
    %2099 = vmatpush1.msra.mxu0 %v230
    %2100 = vmatprep.subr.mxu0 %v239
    %2101 = vmatpush1.msra.mxu0 %v238
    %2102 = vmatprep.subr.mxu0 %v247
    %2103 = vmatpush1.msra.mxu0 %v246
    %2104 = vmatprep.subr.mxu0 %v255
    %2105 = vmatpush1.msra.mxu0 %v254
    %2106 = vmatprep.subr.mxu0 %v263
    %2107 = vmatpush1.msra.mxu0 %v262
    %2108 = vmatprep.subr.mxu0 %v271
    %2109 = vmatpush1.msra.mxu0 %v270
    %2110 = vmatprep.subr.mxu0 %v279
    %2111 = vmatpush1.msra.mxu0 %v278
    %2112 = vmatprep.mubr.f32.mxu0 %v1618
    %2113 = vmatmul.mubr.f32.gmra.mrb[0].mxu0 %v1610
    %v2114 = vpop.f32.mrb[0].mxu0
    %v2115 = vadd.f32 %v568, %v2114
    %v2116 = vpop.f32.mrb[0].mxu0
    %v2117 = vadd.f32 %v572, %v2116
    %2118 = vdwg.mxu0
    %2119 = vmatprep.subr.mxu0 %v287
    %2120 = vmatpush1.msra.mxu0 %v286
    %2121 = vmatprep.subr.mxu0 %v295
    %2122 = vmatpush1.msra.mxu0 %v294
    %2123 = vmatprep.subr.mxu0 %v303
    %2124 = vmatpush1.msra.mxu0 %v302
    %2125 = vmatprep.subr.mxu0 %v311
    %2126 = vmatpush1.msra.mxu0 %v310
    %2127 = vmatprep.subr.mxu0 %v319
    %2128 = vmatpush1.msra.mxu0 %v318
    %2129 = vmatprep.subr.mxu0 %v327
    %2130 = vmatpush1.msra.mxu0 %v326
    %2131 = vmatprep.subr.mxu0 %v335
    %2132 = vmatpush1.msra.mxu0 %v334
    %2133 = vmatprep.subr.mxu0 %v343
    %2134 = vmatpush1.msra.mxu0 %v342
    %2135 = vmatprep.subr.mxu0 %v351
    %2136 = vmatpush1.msra.mxu0 %v350
    %2137 = vmatprep.subr.mxu0 %v359
    %2138 = vmatpush1.msra.mxu0 %v358
    %2139 = vmatprep.subr.mxu0 %v367
    %2140 = vmatpush1.msra.mxu0 %v366
    %2141 = vmatprep.subr.mxu0 %v375
    %2142 = vmatpush1.msra.mxu0 %v374
    %2143 = vmatprep.subr.mxu0 %v383
    %2144 = vmatpush1.msra.mxu0 %v382
    %2145 = vmatprep.subr.mxu0 %v391
    %2146 = vmatpush1.msra.mxu0 %v390
    %2147 = vmatprep.subr.mxu0 %v399
    %2148 = vmatpush1.msra.mxu0 %v398
    %2149 = vmatprep.subr.mxu0 %v407
    %2150 = vmatpush1.msra.mxu0 %v406
    %2151 = vmatprep.subr.mxu0 0.0
    %2152 = vmatpush1.msra.mxu0 0.0
    %2153 = vmatprep.subr.mxu0 0.0
    %2154 = vmatpush1.msra.mxu0 0.0
    %2155 = vmatprep.subr.mxu0 0.0
    %2156 = vmatpush1.msra.mxu0 0.0
    %2157 = vmatprep.subr.mxu0 0.0
    %2158 = vmatpush1.msra.mxu0 0.0
    %2159 = vmatprep.subr.mxu0 0.0
    %2160 = vmatpush1.msra.mxu0 0.0
    %2161 = vmatprep.subr.mxu0 0.0
    %2162 = vmatpush1.msra.mxu0 0.0
    %2163 = vmatprep.subr.mxu0 0.0
    %2164 = vmatpush1.msra.mxu0 0.0
    %2165 = vmatprep.subr.mxu0 0.0
    %2166 = vmatpush1.msra.mxu0 0.0
    %2167 = vmatprep.subr.mxu0 0.0
    %2168 = vmatpush1.msra.mxu0 0.0
    %2169 = vmatprep.subr.mxu0 0.0
    %2170 = vmatpush1.msra.mxu0 0.0
    %2171 = vmatprep.subr.mxu0 0.0
    %2172 = vmatpush1.msra.mxu0 0.0
    %2173 = vmatprep.subr.mxu0 0.0
    %2174 = vmatpush1.msra.mxu0 0.0
    %2175 = vmatprep.subr.mxu0 0.0
    %2176 = vmatpush1.msra.mxu0 0.0
    %2177 = vmatprep.subr.mxu0 0.0
    %2178 = vmatpush1.msra.mxu0 0.0
    %2179 = vmatprep.subr.mxu0 0.0
    %2180 = vmatpush1.msra.mxu0 0.0
    %2181 = vmatprep.subr.mxu0 0.0
    %2182 = vmatpush1.msra.mxu0 0.0
    %2183 = vmatprep.mubr.f32.mxu0 0.0
    %2184 = vmatmul.mubr.f32.gmra.mrb[0].mxu0 %v1617
    %v2185 = vpop.f32.mrb[0].mxu0
    %v2186 = vadd.f32 %v2115, %v2185
    %v2187 = vpop.f32.mrb[0].mxu0
    %v2188 = vadd.f32 %v2117, %v2187
    %2189 = vdwg.mxu0
    %v2190 = vmul.f32 %v1760, %v1173
    %v2191 = vmul.f32 %v1762, %v1177
    %v2192 = vmul.f32 %v1902, %v1181
    %v2193 = vmul.f32 %v1904, %v1185
    %v2194 = vmul.f32 %v2044, %v1189
    %v2195 = vmul.f32 %v2046, %v1193
    %v2196 = vmul.f32 %v2186, %v1197
    %v2197 = vmul.f32 %v2188, %v1201
    %v2198 = vsel %vm1218, %v2190, 0.0
    %v2199 = vsel %vm1218, %v2191, 0.0
    %v2200 = vadd.f32 %v2198, %v2199
    %v2201 = vsel %vm1218, %v2192, 0.0
    %v2202 = vadd.f32 %v2200, %v2201
    %v2203 = vsel %vm1218, %v2193, 0.0
    %v2204 = vadd.f32 %v2202, %v2203
    %v2205 = vsel %vm1218, %v2194, 0.0
    %v2206 = vadd.f32 %v2204, %v2205
    %v2207 = vsel %vm1218, %v2195, 0.0
    %v2208 = vadd.f32 %v2206, %v2207
    %v2209 = vsel %vm1218, %v2196, 0.0
    %v2210 = vadd.f32 %v2208, %v2209
    %v2211 = vsel %vm1218, %v2197, 0.0
    %v2212 = vadd.f32 %v2210, %v2211
    %2213 = vadd.xlane.f32.xlu0 %v2212
    %v2214 = vpop.xlane.xlu0 %2213
    %v2215 = vsel %vm1218, %v2214, -inf
    %v2216 = vrot.slane %v2215, 4
    %v2217 = vmax.f32 %v2215, %v2216
    %v2218 = vrot.slane %v2217, 2
    %v2219 = vmax.f32 %v2217, %v2218
    %v2220 = vrot.slane %v2219, 1
    %v2221 = vmax.f32 %v2219, %v2220
    %v2222 = vsub.f32 %v2214, %v2221
    %v2223 = vmul.f32 %v2222, 1.442695
    %v2224 = vpow.pop %v2223
    %v2225 = vsel %vm1218, %v2224, 0.0
    %v2226 = vrot.slane %v2225, 4
    %v2227 = vadd.f32 %v2225, %v2226
    %v2228 = vrot.slane %v2227, 2
    %v2229 = vadd.f32 %v2227, %v2228
    %v2230 = vrot.slane %v2229, 1
    %v2231 = vadd.f32 %v2229, %v2230
    %v2232 = vrcp.pop %v2231
    %v2233 = vmul.f32 %v2224, %v2232
    %v2234 = vmul.f32 %v2233, %v1760
    %v2235 = vmul.f32 %v2233, %v1762
    %v2236 = vmul.f32 %v2233, %v1902
    %v2237 = vmul.f32 %v2233, %v1904
    %v2238 = vmul.f32 %v2233, %v2044
    %v2239 = vmul.f32 %v2233, %v2046
    %v2240 = vmul.f32 %v2233, %v2186
    %v2241 = vmul.f32 %v2233, %v2188
    %v2242 = vsel %vm1218, %v2234, 0.0
    %v2243 = vrot.slane %v2242, 4
    %v2244 = vadd.f32 %v2242, %v2243
    %v2245 = vrot.slane %v2244, 2
    %v2246 = vadd.f32 %v2244, %v2245
    %v2247 = vrot.slane %v2246, 1
    %v2248 = vadd.f32 %v2246, %v2247
    %v2249 = vsel %vm1218, %v2235, 0.0
    %v2250 = vrot.slane %v2249, 4
    %v2251 = vadd.f32 %v2249, %v2250
    %v2252 = vrot.slane %v2251, 2
    %v2253 = vadd.f32 %v2251, %v2252
    %v2254 = vrot.slane %v2253, 1
    %v2255 = vadd.f32 %v2253, %v2254
    %v2256 = vsel %vm1218, %v2236, 0.0
    %v2257 = vrot.slane %v2256, 4
    %v2258 = vadd.f32 %v2256, %v2257
    %v2259 = vrot.slane %v2258, 2
    %v2260 = vadd.f32 %v2258, %v2259
    %v2261 = vrot.slane %v2260, 1
    %v2262 = vadd.f32 %v2260, %v2261
    %v2263 = vsel %vm1218, %v2237, 0.0
    %v2264 = vrot.slane %v2263, 4
    %v2265 = vadd.f32 %v2263, %v2264
    %v2266 = vrot.slane %v2265, 2
    %v2267 = vadd.f32 %v2265, %v2266
    %v2268 = vrot.slane %v2267, 1
    %v2269 = vadd.f32 %v2267, %v2268
    %v2270 = vsel %vm1218, %v2238, 0.0
    %v2271 = vrot.slane %v2270, 4
    %v2272 = vadd.f32 %v2270, %v2271
    %v2273 = vrot.slane %v2272, 2
    %v2274 = vadd.f32 %v2272, %v2273
    %v2275 = vrot.slane %v2274, 1
    %v2276 = vadd.f32 %v2274, %v2275
    %v2277 = vsel %vm1218, %v2239, 0.0
    %v2278 = vrot.slane %v2277, 4
    %v2279 = vadd.f32 %v2277, %v2278
    %v2280 = vrot.slane %v2279, 2
    %v2281 = vadd.f32 %v2279, %v2280
    %v2282 = vrot.slane %v2281, 1
    %v2283 = vadd.f32 %v2281, %v2282
    %v2284 = vsel %vm1218, %v2240, 0.0
    %v2285 = vrot.slane %v2284, 4
    %v2286 = vadd.f32 %v2284, %v2285
    %v2287 = vrot.slane %v2286, 2
    %v2288 = vadd.f32 %v2286, %v2287
    %v2289 = vrot.slane %v2288, 1
    %v2290 = vadd.f32 %v2288, %v2289
    %v2291 = vsel %vm1218, %v2241, 0.0
    %v2292 = vrot.slane %v2291, 4
    %v2293 = vadd.f32 %v2291, %v2292
    %v2294 = vrot.slane %v2293, 2
    %v2295 = vadd.f32 %v2293, %v2294
    %v2296 = vrot.slane %v2295, 1
    %v2297 = vadd.f32 %v2295, %v2296
    %2298 = vmatprep.subr.mxu0 0.0
    %2299 = vmatpush1.msra.mxu0 %v410
    %2300 = vmatprep.subr.mxu0 0.0
    %2301 = vmatpush1.msra.mxu0 %v411
    %2302 = vmatprep.subr.mxu0 0.0
    %2303 = vmatpush1.msra.mxu0 %v412
    %2304 = vmatprep.subr.mxu0 0.0
    %2305 = vmatpush1.msra.mxu0 %v413
    %2306 = vmatprep.subr.mxu0 0.0
    %2307 = vmatpush1.msra.mxu0 %v414
    %2308 = vmatprep.subr.mxu0 0.0
    %2309 = vmatpush1.msra.mxu0 %v415
    %2310 = vmatprep.subr.mxu0 0.0
    %2311 = vmatpush1.msra.mxu0 %v416
    %2312 = vmatprep.subr.mxu0 0.0
    %2313 = vmatpush1.msra.mxu0 %v417
    %2314 = vmatprep.subr.mxu0 0.0
    %2315 = vmatpush1.msra.mxu0 %v418
    %2316 = vmatprep.subr.mxu0 0.0
    %2317 = vmatpush1.msra.mxu0 %v419
    %2318 = vmatprep.subr.mxu0 0.0
    %2319 = vmatpush1.msra.mxu0 %v420
    %2320 = vmatprep.subr.mxu0 0.0
    %2321 = vmatpush1.msra.mxu0 %v421
    %2322 = vmatprep.subr.mxu0 0.0
    %2323 = vmatpush1.msra.mxu0 %v422
    %2324 = vmatprep.subr.mxu0 0.0
    %2325 = vmatpush1.msra.mxu0 %v423
    %2326 = vmatprep.subr.mxu0 0.0
    %2327 = vmatpush1.msra.mxu0 %v424
    %2328 = vmatprep.subr.mxu0 0.0
    %2329 = vmatpush1.msra.mxu0 %v425
    %2330 = vmatprep.subr.mxu0 0.0
    %2331 = vmatpush1.msra.mxu0 %v426
    %2332 = vmatprep.subr.mxu0 0.0
    %2333 = vmatpush1.msra.mxu0 %v427
    %2334 = vmatprep.subr.mxu0 0.0
    %2335 = vmatpush1.msra.mxu0 %v428
    %2336 = vmatprep.subr.mxu0 0.0
    %2337 = vmatpush1.msra.mxu0 %v429
    %2338 = vmatprep.subr.mxu0 0.0
    %2339 = vmatpush1.msra.mxu0 %v430
    %2340 = vmatprep.subr.mxu0 0.0
    %2341 = vmatpush1.msra.mxu0 %v431
    %2342 = vmatprep.subr.mxu0 0.0
    %2343 = vmatpush1.msra.mxu0 %v432
    %2344 = vmatprep.subr.mxu0 0.0
    %2345 = vmatpush1.msra.mxu0 %v433
    %2346 = vmatprep.subr.mxu0 0.0
    %2347 = vmatpush1.msra.mxu0 %v434
    %2348 = vmatprep.subr.mxu0 0.0
    %2349 = vmatpush1.msra.mxu0 %v435
    %2350 = vmatprep.subr.mxu0 0.0
    %2351 = vmatpush1.msra.mxu0 %v436
    %2352 = vmatprep.subr.mxu0 0.0
    %2353 = vmatpush1.msra.mxu0 %v437
    %2354 = vmatprep.subr.mxu0 0.0
    %2355 = vmatpush1.msra.mxu0 %v438
    %2356 = vmatprep.subr.mxu0 0.0
    %2357 = vmatpush1.msra.mxu0 %v439
    %2358 = vmatprep.subr.mxu0 0.0
    %2359 = vmatpush1.msra.mxu0 %v440
    %2360 = vmatprep.subr.mxu0 0.0
    %2361 = vmatpush1.msra.mxu0 %v441
    %2362 = vmatprep.mubr.f32.mxu0 %v2255
    %2363 = vmatmul.mubr.f32.gmra.mrb[0].mxu0 %v2248
    %v2364 = vpop.f32.mrb[0].mxu0
    %v2365 = vadd.f32 %v538, %v2364
    %v2366 = vpop.f32.mrb[0].mxu0
    %2367 = vdwg.mxu0
    %2368 = vmatprep.subr.mxu0 0.0
    %2369 = vmatpush1.msra.mxu0 %v442
    %2370 = vmatprep.subr.mxu0 0.0
    %2371 = vmatpush1.msra.mxu0 %v443
    %2372 = vmatprep.subr.mxu0 0.0
    %2373 = vmatpush1.msra.mxu0 %v444
    %2374 = vmatprep.subr.mxu0 0.0
    %2375 = vmatpush1.msra.mxu0 %v445
    %2376 = vmatprep.subr.mxu0 0.0
    %2377 = vmatpush1.msra.mxu0 %v446
    %2378 = vmatprep.subr.mxu0 0.0
    %2379 = vmatpush1.msra.mxu0 %v447
    %2380 = vmatprep.subr.mxu0 0.0
    %2381 = vmatpush1.msra.mxu0 %v448
    %2382 = vmatprep.subr.mxu0 0.0
    %2383 = vmatpush1.msra.mxu0 %v449
    %2384 = vmatprep.subr.mxu0 0.0
    %2385 = vmatpush1.msra.mxu0 %v450
    %2386 = vmatprep.subr.mxu0 0.0
    %2387 = vmatpush1.msra.mxu0 %v451
    %2388 = vmatprep.subr.mxu0 0.0
    %2389 = vmatpush1.msra.mxu0 %v452
    %2390 = vmatprep.subr.mxu0 0.0
    %2391 = vmatpush1.msra.mxu0 %v453
    %2392 = vmatprep.subr.mxu0 0.0
    %2393 = vmatpush1.msra.mxu0 %v454
    %2394 = vmatprep.subr.mxu0 0.0
    %2395 = vmatpush1.msra.mxu0 %v455
    %2396 = vmatprep.subr.mxu0 0.0
    %2397 = vmatpush1.msra.mxu0 %v456
    %2398 = vmatprep.subr.mxu0 0.0
    %2399 = vmatpush1.msra.mxu0 %v457
    %2400 = vmatprep.subr.mxu0 0.0
    %2401 = vmatpush1.msra.mxu0 %v458
    %2402 = vmatprep.subr.mxu0 0.0
    %2403 = vmatpush1.msra.mxu0 %v459
    %2404 = vmatprep.subr.mxu0 0.0
    %2405 = vmatpush1.msra.mxu0 %v460
    %2406 = vmatprep.subr.mxu0 0.0
    %2407 = vmatpush1.msra.mxu0 %v461
    %2408 = vmatprep.subr.mxu0 0.0
    %2409 = vmatpush1.msra.mxu0 %v462
    %2410 = vmatprep.subr.mxu0 0.0
    %2411 = vmatpush1.msra.mxu0 %v463
    %2412 = vmatprep.subr.mxu0 0.0
    %2413 = vmatpush1.msra.mxu0 %v464
    %2414 = vmatprep.subr.mxu0 0.0
    %2415 = vmatpush1.msra.mxu0 %v465
    %2416 = vmatprep.subr.mxu0 0.0
    %2417 = vmatpush1.msra.mxu0 %v466
    %2418 = vmatprep.subr.mxu0 0.0
    %2419 = vmatpush1.msra.mxu0 %v467
    %2420 = vmatprep.subr.mxu0 0.0
    %2421 = vmatpush1.msra.mxu0 %v468
    %2422 = vmatprep.subr.mxu0 0.0
    %2423 = vmatpush1.msra.mxu0 %v469
    %2424 = vmatprep.subr.mxu0 0.0
    %2425 = vmatpush1.msra.mxu0 %v470
    %2426 = vmatprep.subr.mxu0 0.0
    %2427 = vmatpush1.msra.mxu0 %v471
    %2428 = vmatprep.subr.mxu0 0.0
    %2429 = vmatpush1.msra.mxu0 %v472
    %2430 = vmatprep.subr.mxu0 0.0
    %2431 = vmatpush1.msra.mxu0 %v473
    %2432 = vmatprep.mubr.f32.mxu0 %v2269
    %2433 = vmatmul.mubr.f32.gmra.mrb[0].mxu0 %v2262
    %v2434 = vpop.f32.mrb[0].mxu0
    %v2435 = vadd.f32 %v2365, %v2434
    %v2436 = vpop.f32.mrb[0].mxu0
    %2437 = vdwg.mxu0
    %2438 = vmatprep.subr.mxu0 0.0
    %2439 = vmatpush1.msra.mxu0 %v474
    %2440 = vmatprep.subr.mxu0 0.0
    %2441 = vmatpush1.msra.mxu0 %v475
    %2442 = vmatprep.subr.mxu0 0.0
    %2443 = vmatpush1.msra.mxu0 %v476
    %2444 = vmatprep.subr.mxu0 0.0
    %2445 = vmatpush1.msra.mxu0 %v477
    %2446 = vmatprep.subr.mxu0 0.0
    %2447 = vmatpush1.msra.mxu0 %v478
    %2448 = vmatprep.subr.mxu0 0.0
    %2449 = vmatpush1.msra.mxu0 %v479
    %2450 = vmatprep.subr.mxu0 0.0
    %2451 = vmatpush1.msra.mxu0 %v480
    %2452 = vmatprep.subr.mxu0 0.0
    %2453 = vmatpush1.msra.mxu0 %v481
    %2454 = vmatprep.subr.mxu0 0.0
    %2455 = vmatpush1.msra.mxu0 %v482
    %2456 = vmatprep.subr.mxu0 0.0
    %2457 = vmatpush1.msra.mxu0 %v483
    %2458 = vmatprep.subr.mxu0 0.0
    %2459 = vmatpush1.msra.mxu0 %v484
    %2460 = vmatprep.subr.mxu0 0.0
    %2461 = vmatpush1.msra.mxu0 %v485
    %2462 = vmatprep.subr.mxu0 0.0
    %2463 = vmatpush1.msra.mxu0 %v486
    %2464 = vmatprep.subr.mxu0 0.0
    %2465 = vmatpush1.msra.mxu0 %v487
    %2466 = vmatprep.subr.mxu0 0.0
    %2467 = vmatpush1.msra.mxu0 %v488
    %2468 = vmatprep.subr.mxu0 0.0
    %2469 = vmatpush1.msra.mxu0 %v489
    %2470 = vmatprep.subr.mxu0 0.0
    %2471 = vmatpush1.msra.mxu0 %v490
    %2472 = vmatprep.subr.mxu0 0.0
    %2473 = vmatpush1.msra.mxu0 %v491
    %2474 = vmatprep.subr.mxu0 0.0
    %2475 = vmatpush1.msra.mxu0 %v492
    %2476 = vmatprep.subr.mxu0 0.0
    %2477 = vmatpush1.msra.mxu0 %v493
    %2478 = vmatprep.subr.mxu0 0.0
    %2479 = vmatpush1.msra.mxu0 %v494
    %2480 = vmatprep.subr.mxu0 0.0
    %2481 = vmatpush1.msra.mxu0 %v495
    %2482 = vmatprep.subr.mxu0 0.0
    %2483 = vmatpush1.msra.mxu0 %v496
    %2484 = vmatprep.subr.mxu0 0.0
    %2485 = vmatpush1.msra.mxu0 %v497
    %2486 = vmatprep.subr.mxu0 0.0
    %2487 = vmatpush1.msra.mxu0 %v498
    %2488 = vmatprep.subr.mxu0 0.0
    %2489 = vmatpush1.msra.mxu0 %v499
    %2490 = vmatprep.subr.mxu0 0.0
    %2491 = vmatpush1.msra.mxu0 %v500
    %2492 = vmatprep.subr.mxu0 0.0
    %2493 = vmatpush1.msra.mxu0 %v501
    %2494 = vmatprep.subr.mxu0 0.0
    %2495 = vmatpush1.msra.mxu0 %v502
    %2496 = vmatprep.subr.mxu0 0.0
    %2497 = vmatpush1.msra.mxu0 %v503
    %2498 = vmatprep.subr.mxu0 0.0
    %2499 = vmatpush1.msra.mxu0 %v504
    %2500 = vmatprep.subr.mxu0 0.0
    %2501 = vmatpush1.msra.mxu0 %v505
    %2502 = vmatprep.mubr.f32.mxu0 %v2283
    %2503 = vmatmul.mubr.f32.gmra.mrb[0].mxu0 %v2276
    %v2504 = vpop.f32.mrb[0].mxu0
    %v2505 = vadd.f32 %v2435, %v2504
    %v2506 = vpop.f32.mrb[0].mxu0
    %2507 = vdwg.mxu0
    %2508 = vmatprep.subr.mxu0 0.0
    %2509 = vmatpush1.msra.mxu0 %v506
    %2510 = vmatprep.subr.mxu0 0.0
    %2511 = vmatpush1.msra.mxu0 %v507
    %2512 = vmatprep.subr.mxu0 0.0
    %2513 = vmatpush1.msra.mxu0 %v508
    %2514 = vmatprep.subr.mxu0 0.0
    %2515 = vmatpush1.msra.mxu0 %v509
    %2516 = vmatprep.subr.mxu0 0.0
    %2517 = vmatpush1.msra.mxu0 %v510
    %2518 = vmatprep.subr.mxu0 0.0
    %2519 = vmatpush1.msra.mxu0 %v511
    %2520 = vmatprep.subr.mxu0 0.0
    %2521 = vmatpush1.msra.mxu0 %v512
    %2522 = vmatprep.subr.mxu0 0.0
    %2523 = vmatpush1.msra.mxu0 %v513
    %2524 = vmatprep.subr.mxu0 0.0
    %2525 = vmatpush1.msra.mxu0 %v514
    %2526 = vmatprep.subr.mxu0 0.0
    %2527 = vmatpush1.msra.mxu0 %v515
    %2528 = vmatprep.subr.mxu0 0.0
    %2529 = vmatpush1.msra.mxu0 %v516
    %2530 = vmatprep.subr.mxu0 0.0
    %2531 = vmatpush1.msra.mxu0 %v517
    %2532 = vmatprep.subr.mxu0 0.0
    %2533 = vmatpush1.msra.mxu0 %v518
    %2534 = vmatprep.subr.mxu0 0.0
    %2535 = vmatpush1.msra.mxu0 %v519
    %2536 = vmatprep.subr.mxu0 0.0
    %2537 = vmatpush1.msra.mxu0 %v520
    %2538 = vmatprep.subr.mxu0 0.0
    %2539 = vmatpush1.msra.mxu0 %v521
    %2540 = vmatprep.subr.mxu0 0.0
    %2541 = vmatpush1.msra.mxu0 %v522
    %2542 = vmatprep.subr.mxu0 0.0
    %2543 = vmatpush1.msra.mxu0 %v523
    %2544 = vmatprep.subr.mxu0 0.0
    %2545 = vmatpush1.msra.mxu0 %v524
    %2546 = vmatprep.subr.mxu0 0.0
    %2547 = vmatpush1.msra.mxu0 %v525
    %2548 = vmatprep.subr.mxu0 0.0
    %2549 = vmatpush1.msra.mxu0 %v526
    %2550 = vmatprep.subr.mxu0 0.0
    %2551 = vmatpush1.msra.mxu0 %v527
    %2552 = vmatprep.subr.mxu0 0.0
    %2553 = vmatpush1.msra.mxu0 %v528
    %2554 = vmatprep.subr.mxu0 0.0
    %2555 = vmatpush1.msra.mxu0 %v529
    %2556 = vmatprep.subr.mxu0 0.0
    %2557 = vmatpush1.msra.mxu0 %v530
    %2558 = vmatprep.subr.mxu0 0.0
    %2559 = vmatpush1.msra.mxu0 %v531
    %2560 = vmatprep.subr.mxu0 0.0
    %2561 = vmatpush1.msra.mxu0 %v532
    %2562 = vmatprep.subr.mxu0 0.0
    %2563 = vmatpush1.msra.mxu0 %v533
    %2564 = vmatprep.subr.mxu0 0.0
    %2565 = vmatpush1.msra.mxu0 %v534
    %2566 = vmatprep.subr.mxu0 0.0
    %2567 = vmatpush1.msra.mxu0 %v535
    %2568 = vmatprep.subr.mxu0 0.0
    %2569 = vmatpush1.msra.mxu0 %v536
    %2570 = vmatprep.subr.mxu0 0.0
    %2571 = vmatpush1.msra.mxu0 %v537
    %2572 = vmatprep.mubr.f32.mxu0 %v2297
    %2573 = vmatmul.mubr.f32.gmra.mrb[0].mxu0 %v2290
    %v2574 = vpop.f32.mrb[0].mxu0
    %v2575 = vadd.f32 %v2505, %v2574
    %v2576 = vpop.f32.mrb[0].mxu0
    %2577 = vdwg.mxu0
    %2578 = vst [vmem:[#allocation2 + $0x1] sm:$0x1] %v2575
    // Predicated region
    $region26: #{_lambda_.3} parent=1 // pred_check
      _
    $region27: #{_lambda_.3} parent=1 // pred_check_branch
      %2580 = sbr.rel (0) target = $region29
    $region28: #{_lambda_.3} parent=1 // pred_region
      %s2582 = ssub.s32 32, 32
      %2583 = vsyncadd [#allocation3], %s2582
      %s2585 = sshll.u32 [#allocation2], 4
      %s2586 = int_to_ptr.vmem [resolvable:$true] %s2585
      %2588 = dma.vmem_to_hbm [thread:$0]  %s2586, 32, %s6, [#allocation3]
    $region29: #{_lambda_.3} parent=1 // pred_fallthru
      _
    // Predicated region
    $region30: #{_lambda_.3} parent=1 // pred_check
      _
    $region31: #{_lambda_.3} parent=1 // pred_check_branch
      %2590 = sbr.rel (0) target = $region33
    $region32: #{_lambda_.3} parent=1 // pred_region
      %2591 = dma.done [#allocation3], 32
    $region33: #{_lambda_.3} parent=1 // pred_fallthru
      _
    %2592 = vsyncpa [#allocation3], 1

// kernel: _lambda_.2
$region0: #{_lambda_.2}
  #allocation0 [shape = 'u32[]', space=smem, size = 0x4, offset = 0x4, fixed_abs, tag = 'smem constant byte address 0x4 - core index']
  #allocation1 [shape = 'u32[144,128]{1,0:T(1,128)}', space=vmem, size = 0x12000, scoped, tag = 'internal scratch']
  #allocation2 [shape = 'f32[48,224]{1,0:T(8,128)}', space=vmem, size = 0xc000, scoped, tag = 'scratch operand']
  %s0 = inlined_call_operand.hbm [shape: f32[3], index: 0, kind: input, shape index: {}]
  %s1 = inlined_call_operand.hbm [shape: f32[8,224], index: 1, kind: input, shape index: {}]
  %s2 = inlined_call_operand.hbm [shape: f32[224,128], index: 2, kind: input, shape index: {}]
  %s3 = inlined_call_operand.hbm [shape: f32[8,128], index: 3, kind: input, shape index: {}]
  %s4 = inlined_call_operand.hbm [shape: f32[2,7,3,224,224], index: 4, kind: input, shape index: {}, may-alias: {4,5}]
  %s5 = inlined_call_operand.hbm [shape: f32[2,7,3,224,224], index: 5, kind: input, shape index: {}, may-alias: {4,5}]
  %s6 = inlined_call_operand.vmem [shape: f32[2,6,128], index: 6, kind: output, shape index: {}]
  %s7 = sld [smem:[#allocation0]]
  $region85: #{_lambda_.2} parent=0
    _
  %s9 = ssub.s32 1, %s7
  %s10 = scalar_select 0, %s9, %s7
  $region1: #{_lambda_.2} parent=0
    #allocation3 [shape = 'u8[512]{0}', space=smem, size = 0x200, scoped, tag = 'input window, operand 0, single buffered']
    #allocation4 [shape = 's32[2]{0}', space=sflag, size = 0x8, scoped, tag = 'scoped memory for _lambda_.2']
    #allocation5 [shape = 's32[2]{0}', space=sflag, size = 0x8, scoped, tag = 'scoped memory for _lambda_.2']
    #allocation6 [shape = 'u8[8192]{0}', space=vmem, size = 0x2000, scoped, tag = 'input window, operand 1, single buffered']
    #allocation7 [shape = 'u8[114688]{0}', space=vmem, size = 0x1c000, scoped, tag = 'input window, operand 2, single buffered']
    #allocation8 [shape = 's32[1]{0}', space=sflag, size = 0x4, scoped, tag = 'scoped memory for _lambda_.2']
    #allocation9 [shape = 'u8[4096]{0}', space=vmem, size = 0x1000, scoped, tag = 'input window, operand 3, single buffered']
    #allocation10 [shape = 'u8[1376256]{0}', space=vmem, size = 0x150000, scoped, tag = 'input window, operand 4']
    #allocation11 [shape = 's32[2]{0}', space=sflag, size = 0x8, scoped, tag = 'scoped memory for _lambda_.2']
    #allocation12 [shape = 'u8[1376256]{0}', space=vmem, size = 0x150000, scoped, tag = 'input window, operand 5']
    %11 = vsyncpa [#allocation5], 0
    %12 = vsyncpa [#allocation4], 0
    %13 = vsyncpa [#allocation8], 0
    %14 = vsyncpa [#allocation11], 0
    %s15 = scalar_lea.sflag [#allocation11], 1
    %16 = vsyncpa %s15, 0
    loop: start=0, step=1, limit=14
    $region2: #{_lambda_.2} parent=1 // loop_pre_header
      _
    $region3: #{_lambda_.2} parent=1 // loop_header
      %s18 = sphi 0, %s22
      %p19 = scmp.ge.s32.totalorder %s18, 14
      %s25 = sphi 0, %s37
      %s26 = sphi 0, %s33
      %s27 = sphi 0, %s25
      %s28 = sphi 0, %s26
      %s29 = sphi 0, %s27
      %s30 = sphi 0, %s28
      %s38 = sphi 0, %s38
      %s40 = sphi 0, %s38
      %s41 = sphi 0, %s40
      %s55 = sphi 0, %s41
      %s59 = sphi 0, %s59
      %s61 = sphi 0, %s59
      %s62 = sphi 0, %s61
      %s76 = sphi 0, %s62
      %s80 = sphi 0, %s80
      %s82 = sphi 0, %s80
      %s83 = sphi 0, %s82
      %s97 = sphi 0, %s83
      %s101 = sphi 0, %s101
      %s103 = sphi 0, %s101
      %s104 = sphi 0, %s103
      %s118 = sphi 0, %s104
      %s126 = sphi 0, %s128
      %s129 = sphi 0, %s126
      %s130 = sphi 0, %s129
      %s146 = sphi 0, %s130
      %s156 = sphi 0, %s158
      %s159 = sphi 0, %s156
      %s160 = sphi 0, %s159
      %s176 = sphi 0, %s160
      %s182 = sphi 0, %s184
      %s185 = sphi 0, %s182
      %s186 = sphi 0, %s185
      %s202 = sphi 0, %s186
    $region4: #{_lambda_.2} parent=1 // loop_header_branch
      %21 = sbr.rel (%p19) target = $region8
    $region5: #{_lambda_.2} parent=1 // loop_body
      %s23 = ssub.s32 %s18, 1
      %s24 = ssub.s32 %s18, 2
      %s31 = sadd.s32 1, %s26
      %p32 = scmp.ge.s32.totalorder %s31, 6
      %s33 = scalar_select %p32, 0, %s31
      %s34 = sadd.s32 1, %s25
      %s35 = scalar_select %p32, %s34, %s25
      %p36 = scmp.ge.s32.totalorder %s35, 2
      %s37 = scalar_select %p36, 0, %s35
      %s39 = sadd.s32 %s38, 1
      %p42 = scmp.eq.s32.totalorder %s18, 11
      %p43 = scmp.ne.s32.totalorder %s38, %s40
      %p44 = scmp.eq.s32.totalorder %s18, 0
      %p45 = por %p43, %p44
      %p46 = scmp.ne.s32.totalorder %s38, %s40
      %p47 = scmp.eq.s32.totalorder %s23, 11
      %p48 = por %p46, %p47
      %p49 = scmp.ne.s32.totalorder %s40, %s41
      %p50 = scmp.eq.s32.totalorder %s23, 0
      %p51 = por %p49, %p50
      %p52 = scmp.ne.s32.totalorder %s40, %s41
      %p53 = scmp.eq.s32.totalorder %s24, 11
      %p54 = por %p52, %p53
      %p56 = scmp.ne.s32.totalorder %s41, %s55
      %p57 = scmp.eq.s32.totalorder %s24, 0
      %p58 = por %p56, %p57
      %s60 = sadd.s32 %s59, 1
      %p63 = scmp.eq.s32.totalorder %s18, 11
      %p64 = scmp.ne.s32.totalorder %s59, %s61
      %p65 = scmp.eq.s32.totalorder %s18, 0
      %p66 = por %p64, %p65
      %p67 = scmp.ne.s32.totalorder %s59, %s61
      %p68 = scmp.eq.s32.totalorder %s23, 11
      %p69 = por %p67, %p68
      %p70 = scmp.ne.s32.totalorder %s61, %s62
      %p71 = scmp.eq.s32.totalorder %s23, 0
      %p72 = por %p70, %p71
      %p73 = scmp.ne.s32.totalorder %s61, %s62
      %p74 = scmp.eq.s32.totalorder %s24, 11
      %p75 = por %p73, %p74
      %p77 = scmp.ne.s32.totalorder %s62, %s76
      %p78 = scmp.eq.s32.totalorder %s24, 0
      %p79 = por %p77, %p78
      %s81 = sadd.s32 %s80, 1
      %p84 = scmp.eq.s32.totalorder %s18, 11
      %p85 = scmp.ne.s32.totalorder %s80, %s82
      %p86 = scmp.eq.s32.totalorder %s18, 0
      %p87 = por %p85, %p86
      %p88 = scmp.ne.s32.totalorder %s80, %s82
      %p89 = scmp.eq.s32.totalorder %s23, 11
      %p90 = por %p88, %p89
      %p91 = scmp.ne.s32.totalorder %s82, %s83
      %p92 = scmp.eq.s32.totalorder %s23, 0
      %p93 = por %p91, %p92
      %p94 = scmp.ne.s32.totalorder %s82, %s83
      %p95 = scmp.eq.s32.totalorder %s24, 11
      %p96 = por %p94, %p95
      %p98 = scmp.ne.s32.totalorder %s83, %s97
      %p99 = scmp.eq.s32.totalorder %s24, 0
      %p100 = por %p98, %p99
      %s102 = sadd.s32 %s101, 1
      %p105 = scmp.eq.s32.totalorder %s18, 11
      %p106 = scmp.ne.s32.totalorder %s101, %s103
      %p107 = scmp.eq.s32.totalorder %s18, 0
      %p108 = por %p106, %p107
      %p109 = scmp.ne.s32.totalorder %s101, %s103
      %p110 = scmp.eq.s32.totalorder %s23, 11
      %p111 = por %p109, %p110
      %p112 = scmp.ne.s32.totalorder %s103, %s104
      %p113 = scmp.eq.s32.totalorder %s23, 0
      %p114 = por %p112, %p113
      %p115 = scmp.ne.s32.totalorder %s103, %s104
      %p116 = scmp.eq.s32.totalorder %s24, 11
      %p117 = por %p115, %p116
      %p119 = scmp.ne.s32.totalorder %s104, %s118
      %p120 = scmp.eq.s32.totalorder %s24, 0
      %p121 = por %p119, %p120
      %s122 = ssub.s32 %s25, %s37
      %s123 = ssub.s32 %s26, %s33
      %s124 = sor.u32 %s122, %s123
      %p125 = scmp.eq.s32.totalorder %s124, 0
      %s127 = sadd.s32 %s126, 1
      %s128 = scalar_select %p125, %s126, %s127
      %p131 = pneg %p125
      %p132 = scmp.eq.s32.totalorder %s18, 11
      %p133 = por %p131, %p132
      %p134 = scmp.ne.s32.totalorder %s126, %s129
      %p135 = scmp.eq.s32.totalorder %s18, 0
      %p136 = por %p134, %p135
      %p137 = scmp.ne.s32.totalorder %s126, %s129
      %p138 = scmp.eq.s32.totalorder %s23, 11
      %p139 = por %p137, %p138
      %p140 = scmp.ne.s32.totalorder %s129, %s130
      %p141 = scmp.eq.s32.totalorder %s23, 0
      %p142 = por %p140, %p141
      %p143 = scmp.ne.s32.totalorder %s129, %s130
      %p144 = scmp.eq.s32.totalorder %s24, 11
      %p145 = por %p143, %p144
      %p147 = scmp.ne.s32.totalorder %s130, %s146
      %p148 = scmp.eq.s32.totalorder %s24, 0
      %p149 = por %p147, %p148
      %s150 = sadd.s32 %s26, 1
      %s151 = sadd.s32 %s33, 1
      %s152 = ssub.s32 %s25, %s37
      %s153 = ssub.s32 %s150, %s151
      %s154 = sor.u32 %s152, %s153
      %p155 = scmp.eq.s32.totalorder %s154, 0
      %s157 = sadd.s32 %s156, 1
      %s158 = scalar_select %p155, %s156, %s157
      %p161 = pneg %p155
      %p162 = scmp.eq.s32.totalorder %s18, 11
      %p163 = por %p161, %p162
      %p164 = scmp.ne.s32.totalorder %s156, %s159
      %p165 = scmp.eq.s32.totalorder %s18, 0
      %p166 = por %p164, %p165
      %p167 = scmp.ne.s32.totalorder %s156, %s159
      %p168 = scmp.eq.s32.totalorder %s23, 11
      %p169 = por %p167, %p168
      %p170 = scmp.ne.s32.totalorder %s159, %s160
      %p171 = scmp.eq.s32.totalorder %s23, 0
      %p172 = por %p170, %p171
      %p173 = scmp.ne.s32.totalorder %s159, %s160
      %p174 = scmp.eq.s32.totalorder %s24, 11
      %p175 = por %p173, %p174
      %p177 = scmp.ne.s32.totalorder %s160, %s176
      %p178 = scmp.eq.s32.totalorder %s24, 0
      %p179 = por %p177, %p178
      %s180 = ssub.s32 %s25, %s37
      %p181 = scmp.eq.s32.totalorder %s180, 0
      %s183 = sadd.s32 %s182, 1
      %s184 = scalar_select %p181, %s182, %s183
      %p187 = pneg %p181
      %p188 = scmp.eq.s32.totalorder %s18, 11
      %p189 = por %p187, %p188
      %p190 = scmp.ne.s32.totalorder %s182, %s185
      %p191 = scmp.eq.s32.totalorder %s18, 0
      %p192 = por %p190, %p191
      %p193 = scmp.ne.s32.totalorder %s182, %s185
      %p194 = scmp.eq.s32.totalorder %s23, 11
      %p195 = por %p193, %p194
      %p196 = scmp.ne.s32.totalorder %s185, %s186
      %p197 = scmp.eq.s32.totalorder %s23, 0
      %p198 = por %p196, %p197
      %p199 = scmp.ne.s32.totalorder %s185, %s186
      %p200 = scmp.eq.s32.totalorder %s24, 11
      %p201 = por %p199, %p200
      %p203 = scmp.ne.s32.totalorder %s186, %s202
      %p204 = scmp.eq.s32.totalorder %s24, 0
      %p205 = por %p203, %p204
      %p206 = scmp.le.s32.totalorder 1, %s18
      %p207 = scmp.lt.s32.totalorder %s18, 13
      %p208 = pnand %p206, %p207
      %p209 = pneg %p208
      // Predicated region
      $region9: #{_lambda_.2} parent=5 // pred_check
        _
      $region10: #{_lambda_.2} parent=5 // pred_check_branch
        %211 = sbr.rel (%p208) target = $region12
      $region11: #{_lambda_.2} parent=5 // pred_region
        %s212 = ssub.s32 %s18, 1
        // Predicated region
        $region13: #{_lambda_.2} parent=11 // pred_check
          %p213 = pneg %p51
        $region14: #{_lambda_.2} parent=11 // pred_check_branch
          %215 = sbr.rel (%p213) target = $region16
        $region15: #{_lambda_.2} parent=11 // pred_region
          %s217 = ssub.s32 16, 16
          %218 = vsyncadd [#allocation5], %s217
          %221 = dma.hbm_to_smem %s0, 16, [#allocation3], [#allocation5]
        $region16: #{_lambda_.2} parent=11 // pred_fallthru
          _
        // Predicated region
        $region17: #{_lambda_.2} parent=11 // pred_check
          %p222 = pneg %p72
        $region18: #{_lambda_.2} parent=11 // pred_check_branch
          %224 = sbr.rel (%p222) target = $region20
        $region19: #{_lambda_.2} parent=11 // pred_region
          %s226 = ssub.s32 256, 256
          %227 = vsyncadd [#allocation4], %s226
          %s229 = sshll.u32 [#allocation6], 4
          %s230 = int_to_ptr.vmem [resolvable:$true] %s229
          %232 = dma.hbm_to_vmem [thread:$0]  %s1, 256, %s230, [#allocation4]
        $region20: #{_lambda_.2} parent=11 // pred_fallthru
          _
        // Predicated region
        $region21: #{_lambda_.2} parent=11 // pred_check
          %p233 = pneg %p93
        $region22: #{_lambda_.2} parent=11 // pred_check_branch
          %235 = sbr.rel (%p233) target = $region24
        $region23: #{_lambda_.2} parent=11 // pred_region
          %s237 = ssub.s32 3584, 3584
          %238 = vsyncadd [#allocation8], %s237
          %s239 = sshll.u32 [#allocation7], 4
          %s240 = int_to_ptr.vmem [resolvable:$true] %s239
          %245 = dma.hbm_to_vmem [thread:$0]  %s2, 3584, %s240, [#allocation8], 128, 128, 8
        $region24: #{_lambda_.2} parent=11 // pred_fallthru
          _
        // Predicated region
        $region25: #{_lambda_.2} parent=11 // pred_check
          %p246 = pneg %p114
        $region26: #{_lambda_.2} parent=11 // pred_check_branch
          %248 = sbr.rel (%p246) target = $region28
        $region27: #{_lambda_.2} parent=11 // pred_region
          %s250 = ssub.s32 128, 128
          %251 = vsyncadd [#allocation8], %s250
          %s253 = sshll.u32 [#allocation9], 4
          %s254 = int_to_ptr.vmem [resolvable:$true] %s253
          %256 = dma.hbm_to_vmem [thread:$0]  %s3, 128, %s254, [#allocation8]
        $region28: #{_lambda_.2} parent=11 // pred_fallthru
          _
      $region12: #{_lambda_.2} parent=5 // pred_fallthru
        _
      %p257 = scmp.lt.s32.totalorder %s18, 12
      // Predicated region
      $region29: #{_lambda_.2} parent=5 // pred_check
        %p258 = pneg %p257
      $region30: #{_lambda_.2} parent=5 // pred_check_branch
        %260 = sbr.rel (%p258) target = $region32
      $region31: #{_lambda_.2} parent=5 // pred_region
        // Predicated region
        $region33: #{_lambda_.2} parent=31 // pred_check
          %p261 = pneg %p136
        $region34: #{_lambda_.2} parent=31 // pred_check_branch
          %263 = sbr.rel (%p261) target = $region36
        $region35: #{_lambda_.2} parent=31 // pred_region
          %s264 = sand.u32 %s18, 1
          %s265 = scalar_lea.sflag [#allocation11], %s264
          %s266 = sand.u32 %s126, 1
          %s267 = smul.addr %s266, 1344
          %s268 = scalar_lea.vmem [#allocation10], %s267
          %s270 = ssub.s32 21504, 21504
          %271 = vsyncadd %s265, %s270
          %s272 = smul.addr %s26, 168
          %s273 = smul.addr %s25, 1176
          %s274 = sadd.s32 %s272, %s273
          %s275 = smul.addr %s274, 128
          %s276 = scalar_lea.hbm %s4, %s275
          %s277 = sshll.u32 %s268, 4
          %s278 = int_to_ptr.vmem [resolvable:$true] %s277
          %283 = dma.hbm_to_vmem [thread:$0]  %s276, 21504, %s278, %s265, 256, 256, 16
        $region36: #{_lambda_.2} parent=31 // pred_fallthru
          _
        // Predicated region
        $region37: #{_lambda_.2} parent=31 // pred_check
          %p284 = pneg %p166
        $region38: #{_lambda_.2} parent=31 // pred_check_branch
          %286 = sbr.rel (%p284) target = $region40
        $region39: #{_lambda_.2} parent=31 // pred_region
          %s287 = sand.u32 %s18, 1
          %s288 = scalar_lea.sflag [#allocation11], %s287
          %s289 = sand.u32 %s156, 1
          %s290 = smul.addr %s289, 1344
          %s291 = scalar_lea.vmem [#allocation12], %s290
          %s292 = sadd.s32 %s26, 1
          %s294 = ssub.s32 21504, 21504
          %295 = vsyncadd %s288, %s294
          %s296 = smul.addr %s292, 168
          %s297 = smul.addr %s25, 1176
          %s298 = sadd.s32 %s296, %s297
          %s299 = smul.addr %s298, 128
          %s300 = scalar_lea.hbm %s5, %s299
          %s301 = sshll.u32 %s291, 4
          %s302 = int_to_ptr.vmem [resolvable:$true] %s301
          %307 = dma.hbm_to_vmem [thread:$0]  %s300, 21504, %s302, %s288, 256, 256, 16
        $region40: #{_lambda_.2} parent=31 // pred_fallthru
          _
      $region32: #{_lambda_.2} parent=5 // pred_fallthru
        _
      %p308 = scmp.le.s32.totalorder 1, %s18
      %p309 = scmp.lt.s32.totalorder %s18, 13
      %p310 = pnand %p308, %p309
      %p311 = pneg %p310
      // Predicated region
      $region41: #{_lambda_.2} parent=5 // pred_check
        _
      $region42: #{_lambda_.2} parent=5 // pred_check_branch
        %313 = sbr.rel (%p310) target = $region44
      $region43: #{_lambda_.2} parent=5 // pred_region
        %s314 = ssub.s32 %s18, 1
        // Predicated region
        $region45: #{_lambda_.2} parent=43 // pred_check
          %p315 = pneg %p51
        $region46: #{_lambda_.2} parent=43 // pred_check_branch
          %317 = sbr.rel (%p315) target = $region48
        $region47: #{_lambda_.2} parent=43 // pred_region
          %318 = dma.done [#allocation5], 16
        $region48: #{_lambda_.2} parent=43 // pred_fallthru
          _
        // Predicated region
        $region49: #{_lambda_.2} parent=43 // pred_check
          %p319 = pneg %p72
        $region50: #{_lambda_.2} parent=43 // pred_check_branch
          %321 = sbr.rel (%p319) target = $region52
        $region51: #{_lambda_.2} parent=43 // pred_region
          %322 = dma.done [#allocation4], 256
        $region52: #{_lambda_.2} parent=43 // pred_fallthru
          _
        // Predicated region
        $region53: #{_lambda_.2} parent=43 // pred_check
          %p323 = pneg %p93
        $region54: #{_lambda_.2} parent=43 // pred_check_branch
          %325 = sbr.rel (%p323) target = $region56
        $region55: #{_lambda_.2} parent=43 // pred_region
          %326 = dma.done [#allocation8], 3584
        $region56: #{_lambda_.2} parent=43 // pred_fallthru
          _
        // Predicated region
        $region57: #{_lambda_.2} parent=43 // pred_check
          %p327 = pneg %p114
        $region58: #{_lambda_.2} parent=43 // pred_check_branch
          %329 = sbr.rel (%p327) target = $region60
        $region59: #{_lambda_.2} parent=43 // pred_region
          %330 = dma.done [#allocation8], 128
        $region60: #{_lambda_.2} parent=43 // pred_fallthru
          _
        %s331 = sand.u32 %s23, 1
        %s332 = scalar_lea.sflag [#allocation11], %s331
        %s333 = sand.u32 %s129, 1
        %s334 = smul.addr %s333, 1344
        %s335 = scalar_lea.vmem [#allocation10], %s334
        // Predicated region
        $region61: #{_lambda_.2} parent=43 // pred_check
          %p336 = pneg %p142
        $region62: #{_lambda_.2} parent=43 // pred_check_branch
          %338 = sbr.rel (%p336) target = $region64
        $region63: #{_lambda_.2} parent=43 // pred_region
          %339 = dma.done %s332, 21504
        $region64: #{_lambda_.2} parent=43 // pred_fallthru
          _
        %s340 = sand.u32 %s23, 1
        %s341 = scalar_lea.sflag [#allocation11], %s340
        %s342 = sand.u32 %s159, 1
        %s343 = smul.addr %s342, 1344
        %s344 = scalar_lea.vmem [#allocation12], %s343
        // Predicated region
        $region65: #{_lambda_.2} parent=43 // pred_check
          %p345 = pneg %p172
        $region66: #{_lambda_.2} parent=43 // pred_check_branch
          %347 = sbr.rel (%p345) target = $region68
        $region67: #{_lambda_.2} parent=43 // pred_region
          %348 = dma.done %s341, 21504
        $region68: #{_lambda_.2} parent=43 // pred_fallthru
          _
        %349 = sfence
        %p350 = pneg %p51
        %p351 = pneg %p48
        %p352 = pneg %p72
        %p353 = pneg %p69
        %p354 = pneg %p93
        %p355 = pneg %p90
        %p356 = pneg %p114
        %p357 = pneg %p111
        %s358 = sand.u32 %s23, 1
        %s359 = scalar_lea.sflag [#allocation11], %s358
        %s360 = sand.u32 %s129, 1
        %s361 = smul.addr %s360, 1344
        %s362 = scalar_lea.vmem [#allocation10], %s361
        %p363 = pneg %p142
        %p364 = pneg %p139
        %s365 = sand.u32 %s23, 1
        %s366 = scalar_lea.sflag [#allocation11], %s365
        %s367 = sand.u32 %s159, 1
        %s368 = smul.addr %s367, 1344
        %s369 = scalar_lea.vmem [#allocation12], %s368
        %p370 = pneg %p172
        %p371 = pneg %p169
        %p372 = pneg %p198
        %p373 = pneg %p195
        %p374 = scmp.lt.s32.totalorder %s27, 1
        %s375 = scalar_select %p374, %s27, 1
        %s376 = smul.addr %s375, 8
        %s377 = scalar_lea.vmem %s6, %s376
        %s378 = sadd.s32 %s28, 1
        %p379 = scmp.lt.s32.totalorder %s27, 1
        %s380 = scalar_select %p379, %s27, 1
        %s381 = smul.addr %s380, 8
        %s382 = scalar_lea.vmem %s6, %s381
        %v383 = vld [vmem:[#allocation6] sm:$0xff]
        %v384 = vld [vmem:[#allocation6 + $0x8] sm:$0xff]
        %v385 = vld [vmem:[%s335] sm:$0xff]
        %v386 = vld [vmem:[%s335 + $0x8] sm:$0xff]
        %v387 = vld [vmem:[%s335 + $0x10] sm:$0xff]
        %v388 = vld [vmem:[%s335 + $0x18] sm:$0xff]
        %v389 = vld [vmem:[%s335 + $0x20] sm:$0xff]
        %v390 = vld [vmem:[%s335 + $0x28] sm:$0xff]
        %v391 = vld [vmem:[%s335 + $0x30] sm:$0xff]
        %v392 = vld [vmem:[%s335 + $0x38] sm:$0xff]
        %v393 = vld [vmem:[%s335 + $0x40] sm:$0xff]
        %v394 = vld [vmem:[%s335 + $0x48] sm:$0xff]
        %v395 = vld [vmem:[%s335 + $0x50] sm:$0xff]
        %v396 = vld [vmem:[%s335 + $0x58] sm:$0xff]
        %v397 = vld [vmem:[%s335 + $0x60] sm:$0xff]
        %v398 = vld [vmem:[%s335 + $0x68] sm:$0xff]
        %v399 = vld [vmem:[%s335 + $0x70] sm:$0xff]
        %v400 = vld [vmem:[%s335 + $0x78] sm:$0xff]
        %v401 = vld [vmem:[%s335 + $0x80] sm:$0xff]
        %v402 = vld [vmem:[%s335 + $0x88] sm:$0xff]
        %v403 = vld [vmem:[%s335 + $0x90] sm:$0xff]
        %v404 = vld [vmem:[%s335 + $0x98] sm:$0xff]
        %v405 = vld [vmem:[%s335 + $0xa0] sm:$0xff]
        %v406 = vld [vmem:[%s335 + $0xa8] sm:$0xff]
        %v407 = vld [vmem:[%s335 + $0xb0] sm:$0xff]
        %v408 = vld [vmem:[%s335 + $0xb8] sm:$0xff]
        %v409 = vld [vmem:[%s335 + $0xc0] sm:$0xff]
        %v410 = vld [vmem:[%s335 + $0xc8] sm:$0xff]
        %v411 = vld [vmem:[%s335 + $0xd0] sm:$0xff]
        %v412 = vld [vmem:[%s335 + $0xd8] sm:$0xff]
        %v413 = vld [vmem:[%s335 + $0xe0] sm:$0xff]
        %v414 = vld [vmem:[%s335 + $0xe8] sm:$0xff]
        %v415 = vld [vmem:[%s335 + $0xf0] sm:$0xff]
        %v416 = vld [vmem:[%s335 + $0xf8] sm:$0xff]
        %v417 = vld [vmem:[%s335 + $0x100] sm:$0xff]
        %v418 = vld [vmem:[%s335 + $0x108] sm:$0xff]
        %v419 = vld [vmem:[%s335 + $0x110] sm:$0xff]
        %v420 = vld [vmem:[%s335 + $0x118] sm:$0xff]
        %v421 = vld [vmem:[%s335 + $0x120] sm:$0xff]
        %v422 = vld [vmem:[%s335 + $0x128] sm:$0xff]
        %v423 = vld [vmem:[%s335 + $0x130] sm:$0xff]
        %v424 = vld [vmem:[%s335 + $0x138] sm:$0xff]
        %v425 = vld [vmem:[%s335 + $0x140] sm:$0xff]
        %v426 = vld [vmem:[%s335 + $0x148] sm:$0xff]
        %v427 = vld [vmem:[%s335 + $0x150] sm:$0xff]
        %v428 = vld [vmem:[%s335 + $0x158] sm:$0xff]
        %v429 = vld [vmem:[%s335 + $0x160] sm:$0xff]
        %v430 = vld [vmem:[%s335 + $0x168] sm:$0xff]
        %v431 = vld [vmem:[%s335 + $0x170] sm:$0xff]
        %v432 = vld [vmem:[%s335 + $0x178] sm:$0xff]
        %v433 = vld [vmem:[%s335 + $0x180] sm:$0xff]
        %v434 = vld [vmem:[%s335 + $0x188] sm:$0xff]
        %v435 = vld [vmem:[%s335 + $0x190] sm:$0xff]
        %v436 = vld [vmem:[%s335 + $0x198] sm:$0xff]
        %v437 = vld [vmem:[%s335 + $0x1a0] sm:$0xff]
        %v438 = vld [vmem:[%s335 + $0x1a8] sm:$0xff]
        %v439 = vld [vmem:[%s335 + $0x1b0] sm:$0xff]
        %v440 = vld [vmem:[%s335 + $0x1b8] sm:$0xff]
        %v441 = vld [vmem:[%s344] sm:$0xff]
        %v442 = vld [vmem:[%s344 + $0x8] sm:$0xff]
        %v443 = vld [vmem:[%s344 + $0x10] sm:$0xff]
        %v444 = vld [vmem:[%s344 + $0x18] sm:$0xff]
        %v445 = vld [vmem:[%s344 + $0x20] sm:$0xff]
        %v446 = vld [vmem:[%s344 + $0x28] sm:$0xff]
        %v447 = vld [vmem:[%s344 + $0x30] sm:$0xff]
        %v448 = vld [vmem:[%s344 + $0x38] sm:$0xff]
        %v449 = vld [vmem:[%s344 + $0x40] sm:$0xff]
        %v450 = vld [vmem:[%s344 + $0x48] sm:$0xff]
        %v451 = vld [vmem:[%s344 + $0x50] sm:$0xff]
        %v452 = vld [vmem:[%s344 + $0x58] sm:$0xff]
        %v453 = vld [vmem:[%s344 + $0x60] sm:$0xff]
        %v454 = vld [vmem:[%s344 + $0x68] sm:$0xff]
        %v455 = vld [vmem:[%s344 + $0x70] sm:$0xff]
        %v456 = vld [vmem:[%s344 + $0x78] sm:$0xff]
        %v457 = vld [vmem:[%s344 + $0x80] sm:$0xff]
        %v458 = vld [vmem:[%s344 + $0x88] sm:$0xff]
        %v459 = vld [vmem:[%s344 + $0x90] sm:$0xff]
        %v460 = vld [vmem:[%s344 + $0x98] sm:$0xff]
        %v461 = vld [vmem:[%s344 + $0xa0] sm:$0xff]
        %v462 = vld [vmem:[%s344 + $0xa8] sm:$0xff]
        %v463 = vld [vmem:[%s344 + $0xb0] sm:$0xff]
        %v464 = vld [vmem:[%s344 + $0xb8] sm:$0xff]
        %v465 = vld [vmem:[%s344 + $0xc0] sm:$0xff]
        %v466 = vld [vmem:[%s344 + $0xc8] sm:$0xff]
        %v467 = vld [vmem:[%s344 + $0xd0] sm:$0xff]
        %v468 = vld [vmem:[%s344 + $0xd8] sm:$0xff]
        %v469 = vld [vmem:[%s344 + $0xe0] sm:$0xff]
        %v470 = vld [vmem:[%s344 + $0xe8] sm:$0xff]
        %v471 = vld [vmem:[%s344 + $0xf0] sm:$0xff]
        %v472 = vld [vmem:[%s344 + $0xf8] sm:$0xff]
        %v473 = vld [vmem:[%s344 + $0x100] sm:$0xff]
        %v474 = vld [vmem:[%s344 + $0x108] sm:$0xff]
        %v475 = vld [vmem:[%s344 + $0x110] sm:$0xff]
        %v476 = vld [vmem:[%s344 + $0x118] sm:$0xff]
        %v477 = vld [vmem:[%s344 + $0x120] sm:$0xff]
        %v478 = vld [vmem:[%s344 + $0x128] sm:$0xff]
        %v479 = vld [vmem:[%s344 + $0x130] sm:$0xff]
        %v480 = vld [vmem:[%s344 + $0x138] sm:$0xff]
        %v481 = vld [vmem:[%s344 + $0x140] sm:$0xff]
        %v482 = vld [vmem:[%s344 + $0x148] sm:$0xff]
        %v483 = vld [vmem:[%s344 + $0x150] sm:$0xff]
        %v484 = vld [vmem:[%s344 + $0x158] sm:$0xff]
        %v485 = vld [vmem:[%s344 + $0x160] sm:$0xff]
        %v486 = vld [vmem:[%s344 + $0x168] sm:$0xff]
        %v487 = vld [vmem:[%s344 + $0x170] sm:$0xff]
        %v488 = vld [vmem:[%s344 + $0x178] sm:$0xff]
        %v489 = vld [vmem:[%s344 + $0x180] sm:$0xff]
        %v490 = vld [vmem:[%s344 + $0x188] sm:$0xff]
        %v491 = vld [vmem:[%s344 + $0x190] sm:$0xff]
        %v492 = vld [vmem:[%s344 + $0x198] sm:$0xff]
        %v493 = vld [vmem:[%s344 + $0x1a0] sm:$0xff]
        %v494 = vld [vmem:[%s344 + $0x1a8] sm:$0xff]
        %v495 = vld [vmem:[%s344 + $0x1b0] sm:$0xff]
        %v496 = vld [vmem:[%s344 + $0x1b8] sm:$0xff]
        %s497 = sld [smem:[#allocation3]]
        %s498 = smul.f32 %s497, 0.5
        %v499 = vsub.f32 %v441, %v385
        %v500 = vsub.f32 %v442, %v386
        %v501 = vsub.f32 %v443, %v387
        %v502 = vsub.f32 %v444, %v388
        %v503 = vsub.f32 %v445, %v389
        %v504 = vsub.f32 %v446, %v390
        %v505 = vsub.f32 %v447, %v391
        %v506 = vsub.f32 %v448, %v392
        %v507 = vsub.f32 %v449, %v393
        %v508 = vsub.f32 %v450, %v394
        %v509 = vsub.f32 %v451, %v395
        %v510 = vsub.f32 %v452, %v396
        %v511 = vsub.f32 %v453, %v397
        %v512 = vsub.f32 %v454, %v398
        %v513 = vsub.f32 %v455, %v399
        %v514 = vsub.f32 %v456, %v400
        %v515 = vsub.f32 %v457, %v401
        %v516 = vsub.f32 %v458, %v402
        %v517 = vsub.f32 %v459, %v403
        %v518 = vsub.f32 %v460, %v404
        %v519 = vsub.f32 %v461, %v405
        %v520 = vsub.f32 %v462, %v406
        %v521 = vsub.f32 %v463, %v407
        %v522 = vsub.f32 %v464, %v408
        %v523 = vsub.f32 %v465, %v409
        %v524 = vsub.f32 %v466, %v410
        %v525 = vsub.f32 %v467, %v411
        %v526 = vsub.f32 %v468, %v412
        %v527 = vsub.f32 %v469, %v413
        %v528 = vsub.f32 %v470, %v414
        %v529 = vsub.f32 %v471, %v415
        %v530 = vsub.f32 %v472, %v416
        %v531 = vsub.f32 %v473, %v417
        %v532 = vsub.f32 %v474, %v418
        %v533 = vsub.f32 %v475, %v419
        %v534 = vsub.f32 %v476, %v420
        %v535 = vsub.f32 %v477, %v421
        %v536 = vsub.f32 %v478, %v422
        %v537 = vsub.f32 %v479, %v423
        %v538 = vsub.f32 %v480, %v424
        %v539 = vsub.f32 %v481, %v425
        %v540 = vsub.f32 %v482, %v426
        %v541 = vsub.f32 %v483, %v427
        %v542 = vsub.f32 %v484, %v428
        %v543 = vsub.f32 %v485, %v429
        %v544 = vsub.f32 %v486, %v430
        %v545 = vsub.f32 %v487, %v431
        %v546 = vsub.f32 %v488, %v432
        %v547 = vsub.f32 %v489, %v433
        %v548 = vsub.f32 %v490, %v434
        %v549 = vsub.f32 %v491, %v435
        %v550 = vsub.f32 %v492, %v436
        %v551 = vsub.f32 %v493, %v437
        %v552 = vsub.f32 %v494, %v438
        %v553 = vsub.f32 %v495, %v439
        %v554 = vsub.f32 %v496, %v440
        %v555 = vstv %s498
        %v556 = vmul.f32 %v555, %v499
        %v557 = vmul.f32 %v555, %v500
        %v558 = vmul.f32 %v555, %v501
        %v559 = vmul.f32 %v555, %v502
        %v560 = vmul.f32 %v555, %v503
        %v561 = vmul.f32 %v555, %v504
        %v562 = vmul.f32 %v555, %v505
        %v563 = vmul.f32 %v555, %v506
        %v564 = vmul.f32 %v555, %v507
        %v565 = vmul.f32 %v555, %v508
        %v566 = vmul.f32 %v555, %v509
        %v567 = vmul.f32 %v555, %v510
        %v568 = vmul.f32 %v555, %v511
        %v569 = vmul.f32 %v555, %v512
        %v570 = vmul.f32 %v555, %v513
        %v571 = vmul.f32 %v555, %v514
        %v572 = vmul.f32 %v555, %v515
        %v573 = vmul.f32 %v555, %v516
        %v574 = vmul.f32 %v555, %v517
        %v575 = vmul.f32 %v555, %v518
        %v576 = vmul.f32 %v555, %v519
        %v577 = vmul.f32 %v555, %v520
        %v578 = vmul.f32 %v555, %v521
        %v579 = vmul.f32 %v555, %v522
        %v580 = vmul.f32 %v555, %v523
        %v581 = vmul.f32 %v555, %v524
        %v582 = vmul.f32 %v555, %v525
        %v583 = vmul.f32 %v555, %v526
        %v584 = vmul.f32 %v555, %v527
        %v585 = vmul.f32 %v555, %v528
        %v586 = vmul.f32 %v555, %v529
        %v587 = vmul.f32 %v555, %v530
        %v588 = vmul.f32 %v555, %v531
        %v589 = vmul.f32 %v555, %v532
        %v590 = vmul.f32 %v555, %v533
        %v591 = vmul.f32 %v555, %v534
        %v592 = vmul.f32 %v555, %v535
        %v593 = vmul.f32 %v555, %v536
        %v594 = vmul.f32 %v555, %v537
        %v595 = vmul.f32 %v555, %v538
        %v596 = vmul.f32 %v555, %v539
        %v597 = vmul.f32 %v555, %v540
        %v598 = vmul.f32 %v555, %v541
        %v599 = vmul.f32 %v555, %v542
        %v600 = vmul.f32 %v555, %v543
        %v601 = vmul.f32 %v555, %v544
        %v602 = vmul.f32 %v555, %v545
        %v603 = vmul.f32 %v555, %v546
        %v604 = vmul.f32 %v555, %v547
        %v605 = vmul.f32 %v555, %v548
        %v606 = vmul.f32 %v555, %v549
        %v607 = vmul.f32 %v555, %v550
        %v608 = vmul.f32 %v555, %v551
        %v609 = vmul.f32 %v555, %v552
        %v610 = vmul.f32 %v555, %v553
        %v611 = vmul.f32 %v555, %v554
        %v612 = vtanh.pop %v556
        %v613 = vtanh.pop %v557
        %v614 = vtanh.pop %v558
        %v615 = vtanh.pop %v559
        %v616 = vtanh.pop %v560
        %v617 = vtanh.pop %v561
        %v618 = vtanh.pop %v562
        %v619 = vtanh.pop %v563
        %v620 = vtanh.pop %v564
        %v621 = vtanh.pop %v565
        %v622 = vtanh.pop %v566
        %v623 = vtanh.pop %v567
        %v624 = vtanh.pop %v568
        %v625 = vtanh.pop %v569
        %v626 = vtanh.pop %v570
        %v627 = vtanh.pop %v571
        %v628 = vtanh.pop %v572
        %v629 = vtanh.pop %v573
        %v630 = vtanh.pop %v574
        %v631 = vtanh.pop %v575
        %v632 = vtanh.pop %v576
        %v633 = vtanh.pop %v577
        %v634 = vtanh.pop %v578
        %v635 = vtanh.pop %v579
        %v636 = vtanh.pop %v580
        %v637 = vtanh.pop %v581
        %v638 = vtanh.pop %v582
        %v639 = vtanh.pop %v583
        %v640 = vtanh.pop %v584
        %v641 = vtanh.pop %v585
        %v642 = vtanh.pop %v586
        %v643 = vtanh.pop %v587
        %v644 = vtanh.pop %v588
        %v645 = vtanh.pop %v589
        %v646 = vtanh.pop %v590
        %v647 = vtanh.pop %v591
        %v648 = vtanh.pop %v592
        %v649 = vtanh.pop %v593
        %v650 = vtanh.pop %v594
        %v651 = vtanh.pop %v595
        %v652 = vtanh.pop %v596
        %v653 = vtanh.pop %v597
        %v654 = vtanh.pop %v598
        %v655 = vtanh.pop %v599
        %v656 = vtanh.pop %v600
        %v657 = vtanh.pop %v601
        %v658 = vtanh.pop %v602
        %v659 = vtanh.pop %v603
        %v660 = vtanh.pop %v604
        %v661 = vtanh.pop %v605
        %v662 = vtanh.pop %v606
        %v663 = vtanh.pop %v607
        %v664 = vtanh.pop %v608
        %v665 = vtanh.pop %v609
        %v666 = vtanh.pop %v610
        %v667 = vtanh.pop %v611
        %v668 = vmul.f32 %v612, 0.5
        %v669 = vmul.f32 %v613, 0.5
        %v670 = vmul.f32 %v614, 0.5
        %v671 = vmul.f32 %v615, 0.5
        %v672 = vmul.f32 %v616, 0.5
        %v673 = vmul.f32 %v617, 0.5
        %v674 = vmul.f32 %v618, 0.5
        %v675 = vmul.f32 %v619, 0.5
        %v676 = vmul.f32 %v620, 0.5
        %v677 = vmul.f32 %v621, 0.5
        %v678 = vmul.f32 %v622, 0.5
        %v679 = vmul.f32 %v623, 0.5
        %v680 = vmul.f32 %v624, 0.5
        %v681 = vmul.f32 %v625, 0.5
        %v682 = vmul.f32 %v626, 0.5
        %v683 = vmul.f32 %v627, 0.5
        %v684 = vmul.f32 %v628, 0.5
        %v685 = vmul.f32 %v629, 0.5
        %v686 = vmul.f32 %v630, 0.5
        %v687 = vmul.f32 %v631, 0.5
        %v688 = vmul.f32 %v632, 0.5
        %v689 = vmul.f32 %v633, 0.5
        %v690 = vmul.f32 %v634, 0.5
        %v691 = vmul.f32 %v635, 0.5
        %v692 = vmul.f32 %v636, 0.5
        %v693 = vmul.f32 %v637, 0.5
        %v694 = vmul.f32 %v638, 0.5
        %v695 = vmul.f32 %v639, 0.5
        %v696 = vmul.f32 %v640, 0.5
        %v697 = vmul.f32 %v641, 0.5
        %v698 = vmul.f32 %v642, 0.5
        %v699 = vmul.f32 %v643, 0.5
        %v700 = vmul.f32 %v644, 0.5
        %v701 = vmul.f32 %v645, 0.5
        %v702 = vmul.f32 %v646, 0.5
        %v703 = vmul.f32 %v647, 0.5
        %v704 = vmul.f32 %v648, 0.5
        %v705 = vmul.f32 %v649, 0.5
        %v706 = vmul.f32 %v650, 0.5
        %v707 = vmul.f32 %v651, 0.5
        %v708 = vmul.f32 %v652, 0.5
        %v709 = vmul.f32 %v653, 0.5
        %v710 = vmul.f32 %v654, 0.5
        %v711 = vmul.f32 %v655, 0.5
        %v712 = vmul.f32 %v656, 0.5
        %v713 = vmul.f32 %v657, 0.5
        %v714 = vmul.f32 %v658, 0.5
        %v715 = vmul.f32 %v659, 0.5
        %v716 = vmul.f32 %v660, 0.5
        %v717 = vmul.f32 %v661, 0.5
        %v718 = vmul.f32 %v662, 0.5
        %v719 = vmul.f32 %v663, 0.5
        %v720 = vmul.f32 %v664, 0.5
        %v721 = vmul.f32 %v665, 0.5
        %v722 = vmul.f32 %v666, 0.5
        %v723 = vmul.f32 %v667, 0.5
        %v724 = vadd.f32 %v668, 0.5
        %v725 = vadd.f32 %v669, 0.5
        %v726 = vadd.f32 %v670, 0.5
        %v727 = vadd.f32 %v671, 0.5
        %v728 = vadd.f32 %v672, 0.5
        %v729 = vadd.f32 %v673, 0.5
        %v730 = vadd.f32 %v674, 0.5
        %v731 = vadd.f32 %v675, 0.5
        %v732 = vadd.f32 %v676, 0.5
        %v733 = vadd.f32 %v677, 0.5
        %v734 = vadd.f32 %v678, 0.5
        %v735 = vadd.f32 %v679, 0.5
        %v736 = vadd.f32 %v680, 0.5
        %v737 = vadd.f32 %v681, 0.5
        %v738 = vadd.f32 %v682, 0.5
        %v739 = vadd.f32 %v683, 0.5
        %v740 = vadd.f32 %v684, 0.5
        %v741 = vadd.f32 %v685, 0.5
        %v742 = vadd.f32 %v686, 0.5
        %v743 = vadd.f32 %v687, 0.5
        %v744 = vadd.f32 %v688, 0.5
        %v745 = vadd.f32 %v689, 0.5
        %v746 = vadd.f32 %v690, 0.5
        %v747 = vadd.f32 %v691, 0.5
        %v748 = vadd.f32 %v692, 0.5
        %v749 = vadd.f32 %v693, 0.5
        %v750 = vadd.f32 %v694, 0.5
        %v751 = vadd.f32 %v695, 0.5
        %v752 = vadd.f32 %v696, 0.5
        %v753 = vadd.f32 %v697, 0.5
        %v754 = vadd.f32 %v698, 0.5
        %v755 = vadd.f32 %v699, 0.5
        %v756 = vadd.f32 %v700, 0.5
        %v757 = vadd.f32 %v701, 0.5
        %v758 = vadd.f32 %v702, 0.5
        %v759 = vadd.f32 %v703, 0.5
        %v760 = vadd.f32 %v704, 0.5
        %v761 = vadd.f32 %v705, 0.5
        %v762 = vadd.f32 %v706, 0.5
        %v763 = vadd.f32 %v707, 0.5
        %v764 = vadd.f32 %v708, 0.5
        %v765 = vadd.f32 %v709, 0.5
        %v766 = vadd.f32 %v710, 0.5
        %v767 = vadd.f32 %v711, 0.5
        %v768 = vadd.f32 %v712, 0.5
        %v769 = vadd.f32 %v713, 0.5
        %v770 = vadd.f32 %v714, 0.5
        %v771 = vadd.f32 %v715, 0.5
        %v772 = vadd.f32 %v716, 0.5
        %v773 = vadd.f32 %v717, 0.5
        %v774 = vadd.f32 %v718, 0.5
        %v775 = vadd.f32 %v719, 0.5
        %v776 = vadd.f32 %v720, 0.5
        %v777 = vadd.f32 %v721, 0.5
        %v778 = vadd.f32 %v722, 0.5
        %v779 = vadd.f32 %v723, 0.5
        %v780 = vmul.f32 %v441, %v724
        %v781 = vmul.f32 %v442, %v725
        %v782 = vmul.f32 %v443, %v726
        %v783 = vmul.f32 %v444, %v727
        %v784 = vmul.f32 %v445, %v728
        %v785 = vmul.f32 %v446, %v729
        %v786 = vmul.f32 %v447, %v730
        %v787 = vmul.f32 %v448, %v731
        %v788 = vmul.f32 %v449, %v732
        %v789 = vmul.f32 %v450, %v733
        %v790 = vmul.f32 %v451, %v734
        %v791 = vmul.f32 %v452, %v735
        %v792 = vmul.f32 %v453, %v736
        %v793 = vmul.f32 %v454, %v737
        %v794 = vmul.f32 %v455, %v738
        %v795 = vmul.f32 %v456, %v739
        %v796 = vmul.f32 %v457, %v740
        %v797 = vmul.f32 %v458, %v741
        %v798 = vmul.f32 %v459, %v742
        %v799 = vmul.f32 %v460, %v743
        %v800 = vmul.f32 %v461, %v744
        %v801 = vmul.f32 %v462, %v745
        %v802 = vmul.f32 %v463, %v746
        %v803 = vmul.f32 %v464, %v747
        %v804 = vmul.f32 %v465, %v748
        %v805 = vmul.f32 %v466, %v749
        %v806 = vmul.f32 %v467, %v750
        %v807 = vmul.f32 %v468, %v751
        %v808 = vmul.f32 %v469, %v752
        %v809 = vmul.f32 %v470, %v753
        %v810 = vmul.f32 %v471, %v754
        %v811 = vmul.f32 %v472, %v755
        %v812 = vmul.f32 %v473, %v756
        %v813 = vmul.f32 %v474, %v757
        %v814 = vmul.f32 %v475, %v758
        %v815 = vmul.f32 %v476, %v759
        %v816 = vmul.f32 %v477, %v760
        %v817 = vmul.f32 %v478, %v761
        %v818 = vmul.f32 %v479, %v762
        %v819 = vmul.f32 %v480, %v763
        %v820 = vmul.f32 %v481, %v764
        %v821 = vmul.f32 %v482, %v765
        %v822 = vmul.f32 %v483, %v766
        %v823 = vmul.f32 %v484, %v767
        %v824 = vmul.f32 %v485, %v768
        %v825 = vmul.f32 %v486, %v769
        %v826 = vmul.f32 %v487, %v770
        %v827 = vmul.f32 %v488, %v771
        %v828 = vmul.f32 %v489, %v772
        %v829 = vmul.f32 %v490, %v773
        %v830 = vmul.f32 %v491, %v774
        %v831 = vmul.f32 %v492, %v775
        %v832 = vmul.f32 %v493, %v776
        %v833 = vmul.f32 %v494, %v777
        %v834 = vmul.f32 %v495, %v778
        %v835 = vmul.f32 %v496, %v779
        %s836 = scalar_lea.vmem %s335, 448 [#allocation10]
        %v837 = vld [vmem:[%s836] sm:$0xff]
        %v838 = vld [vmem:[%s836 + $0x8] sm:$0xff]
        %v839 = vld [vmem:[%s836 + $0x10] sm:$0xff]
        %v840 = vld [vmem:[%s836 + $0x18] sm:$0xff]
        %v841 = vld [vmem:[%s836 + $0x20] sm:$0xff]
        %v842 = vld [vmem:[%s836 + $0x28] sm:$0xff]
        %v843 = vld [vmem:[%s836 + $0x30] sm:$0xff]
        %v844 = vld [vmem:[%s836 + $0x38] sm:$0xff]
        %v845 = vld [vmem:[%s836 + $0x40] sm:$0xff]
        %v846 = vld [vmem:[%s836 + $0x48] sm:$0xff]
        %v847 = vld [vmem:[%s836 + $0x50] sm:$0xff]
        %v848 = vld [vmem:[%s836 + $0x58] sm:$0xff]
        %v849 = vld [vmem:[%s836 + $0x60] sm:$0xff]
        %v850 = vld [vmem:[%s836 + $0x68] sm:$0xff]
        %v851 = vld [vmem:[%s836 + $0x70] sm:$0xff]
        %v852 = vld [vmem:[%s836 + $0x78] sm:$0xff]
        %v853 = vld [vmem:[%s836 + $0x80] sm:$0xff]
        %v854 = vld [vmem:[%s836 + $0x88] sm:$0xff]
        %v855 = vld [vmem:[%s836 + $0x90] sm:$0xff]
        %v856 = vld [vmem:[%s836 + $0x98] sm:$0xff]
        %v857 = vld [vmem:[%s836 + $0xa0] sm:$0xff]
        %v858 = vld [vmem:[%s836 + $0xa8] sm:$0xff]
        %v859 = vld [vmem:[%s836 + $0xb0] sm:$0xff]
        %v860 = vld [vmem:[%s836 + $0xb8] sm:$0xff]
        %v861 = vld [vmem:[%s836 + $0xc0] sm:$0xff]
        %v862 = vld [vmem:[%s836 + $0xc8] sm:$0xff]
        %v863 = vld [vmem:[%s836 + $0xd0] sm:$0xff]
        %v864 = vld [vmem:[%s836 + $0xd8] sm:$0xff]
        %v865 = vld [vmem:[%s836 + $0xe0] sm:$0xff]
        %v866 = vld [vmem:[%s836 + $0xe8] sm:$0xff]
        %v867 = vld [vmem:[%s836 + $0xf0] sm:$0xff]
        %v868 = vld [vmem:[%s836 + $0xf8] sm:$0xff]
        %v869 = vld [vmem:[%s836 + $0x100] sm:$0xff]
        %v870 = vld [vmem:[%s836 + $0x108] sm:$0xff]
        %v871 = vld [vmem:[%s836 + $0x110] sm:$0xff]
        %v872 = vld [vmem:[%s836 + $0x118] sm:$0xff]
        %v873 = vld [vmem:[%s836 + $0x120] sm:$0xff]
        %v874 = vld [vmem:[%s836 + $0x128] sm:$0xff]
        %v875 = vld [vmem:[%s836 + $0x130] sm:$0xff]
        %v876 = vld [vmem:[%s836 + $0x138] sm:$0xff]
        %v877 = vld [vmem:[%s836 + $0x140] sm:$0xff]
        %v878 = vld [vmem:[%s836 + $0x148] sm:$0xff]
        %v879 = vld [vmem:[%s836 + $0x150] sm:$0xff]
        %v880 = vld [vmem:[%s836 + $0x158] sm:$0xff]
        %v881 = vld [vmem:[%s836 + $0x160] sm:$0xff]
        %v882 = vld [vmem:[%s836 + $0x168] sm:$0xff]
        %v883 = vld [vmem:[%s836 + $0x170] sm:$0xff]
        %v884 = vld [vmem:[%s836 + $0x178] sm:$0xff]
        %v885 = vld [vmem:[%s836 + $0x180] sm:$0xff]
        %v886 = vld [vmem:[%s836 + $0x188] sm:$0xff]
        %v887 = vld [vmem:[%s836 + $0x190] sm:$0xff]
        %v888 = vld [vmem:[%s836 + $0x198] sm:$0xff]
        %v889 = vld [vmem:[%s836 + $0x1a0] sm:$0xff]
        %v890 = vld [vmem:[%s836 + $0x1a8] sm:$0xff]
        %v891 = vld [vmem:[%s836 + $0x1b0] sm:$0xff]
        %v892 = vld [vmem:[%s836 + $0x1b8] sm:$0xff]
        %s893 = scalar_lea.vmem %s344, 448 [#allocation12]
        %v894 = vld [vmem:[%s893] sm:$0xff]
        %v895 = vld [vmem:[%s893 + $0x8] sm:$0xff]
        %v896 = vld [vmem:[%s893 + $0x10] sm:$0xff]
        %v897 = vld [vmem:[%s893 + $0x18] sm:$0xff]
        %v898 = vld [vmem:[%s893 + $0x20] sm:$0xff]
        %v899 = vld [vmem:[%s893 + $0x28] sm:$0xff]
        %v900 = vld [vmem:[%s893 + $0x30] sm:$0xff]
        %v901 = vld [vmem:[%s893 + $0x38] sm:$0xff]
        %v902 = vld [vmem:[%s893 + $0x40] sm:$0xff]
        %v903 = vld [vmem:[%s893 + $0x48] sm:$0xff]
        %v904 = vld [vmem:[%s893 + $0x50] sm:$0xff]
        %v905 = vld [vmem:[%s893 + $0x58] sm:$0xff]
        %v906 = vld [vmem:[%s893 + $0x60] sm:$0xff]
        %v907 = vld [vmem:[%s893 + $0x68] sm:$0xff]
        %v908 = vld [vmem:[%s893 + $0x70] sm:$0xff]
        %v909 = vld [vmem:[%s893 + $0x78] sm:$0xff]
        %v910 = vld [vmem:[%s893 + $0x80] sm:$0xff]
        %v911 = vld [vmem:[%s893 + $0x88] sm:$0xff]
        %v912 = vld [vmem:[%s893 + $0x90] sm:$0xff]
        %v913 = vld [vmem:[%s893 + $0x98] sm:$0xff]
        %v914 = vld [vmem:[%s893 + $0xa0] sm:$0xff]
        %v915 = vld [vmem:[%s893 + $0xa8] sm:$0xff]
        %v916 = vld [vmem:[%s893 + $0xb0] sm:$0xff]
        %v917 = vld [vmem:[%s893 + $0xb8] sm:$0xff]
        %v918 = vld [vmem:[%s893 + $0xc0] sm:$0xff]
        %v919 = vld [vmem:[%s893 + $0xc8] sm:$0xff]
        %v920 = vld [vmem:[%s893 + $0xd0] sm:$0xff]
        %v921 = vld [vmem:[%s893 + $0xd8] sm:$0xff]
        %v922 = vld [vmem:[%s893 + $0xe0] sm:$0xff]
        %v923 = vld [vmem:[%s893 + $0xe8] sm:$0xff]
        %v924 = vld [vmem:[%s893 + $0xf0] sm:$0xff]
        %v925 = vld [vmem:[%s893 + $0xf8] sm:$0xff]
        %v926 = vld [vmem:[%s893 + $0x100] sm:$0xff]
        %v927 = vld [vmem:[%s893 + $0x108] sm:$0xff]
        %v928 = vld [vmem:[%s893 + $0x110] sm:$0xff]
        %v929 = vld [vmem:[%s893 + $0x118] sm:$0xff]
        %v930 = vld [vmem:[%s893 + $0x120] sm:$0xff]
        %v931 = vld [vmem:[%s893 + $0x128] sm:$0xff]
        %v932 = vld [vmem:[%s893 + $0x130] sm:$0xff]
        %v933 = vld [vmem:[%s893 + $0x138] sm:$0xff]
        %v934 = vld [vmem:[%s893 + $0x140] sm:$0xff]
        %v935 = vld [vmem:[%s893 + $0x148] sm:$0xff]
        %v936 = vld [vmem:[%s893 + $0x150] sm:$0xff]
        %v937 = vld [vmem:[%s893 + $0x158] sm:$0xff]
        %v938 = vld [vmem:[%s893 + $0x160] sm:$0xff]
        %v939 = vld [vmem:[%s893 + $0x168] sm:$0xff]
        %v940 = vld [vmem:[%s893 + $0x170] sm:$0xff]
        %v941 = vld [vmem:[%s893 + $0x178] sm:$0xff]
        %v942 = vld [vmem:[%s893 + $0x180] sm:$0xff]
        %v943 = vld [vmem:[%s893 + $0x188] sm:$0xff]
        %v944 = vld [vmem:[%s893 + $0x190] sm:$0xff]
        %v945 = vld [vmem:[%s893 + $0x198] sm:$0xff]
        %v946 = vld [vmem:[%s893 + $0x1a0] sm:$0xff]
        %v947 = vld [vmem:[%s893 + $0x1a8] sm:$0xff]
        %v948 = vld [vmem:[%s893 + $0x1b0] sm:$0xff]
        %v949 = vld [vmem:[%s893 + $0x1b8] sm:$0xff]
        %s950 = sld [smem:[#allocation3 + $0x1]]
        %s951 = smul.f32 %s950, 0.5
        %v952 = vsub.f32 %v894, %v837
        %v953 = vsub.f32 %v895, %v838
        %v954 = vsub.f32 %v896, %v839
        %v955 = vsub.f32 %v897, %v840
        %v956 = vsub.f32 %v898, %v841
        %v957 = vsub.f32 %v899, %v842
        %v958 = vsub.f32 %v900, %v843
        %v959 = vsub.f32 %v901, %v844
        %v960 = vsub.f32 %v902, %v845
        %v961 = vsub.f32 %v903, %v846
        %v962 = vsub.f32 %v904, %v847
        %v963 = vsub.f32 %v905, %v848
        %v964 = vsub.f32 %v906, %v849
        %v965 = vsub.f32 %v907, %v850
        %v966 = vsub.f32 %v908, %v851
        %v967 = vsub.f32 %v909, %v852
        %v968 = vsub.f32 %v910, %v853
        %v969 = vsub.f32 %v911, %v854
        %v970 = vsub.f32 %v912, %v855
        %v971 = vsub.f32 %v913, %v856
        %v972 = vsub.f32 %v914, %v857
        %v973 = vsub.f32 %v915, %v858
        %v974 = vsub.f32 %v916, %v859
        %v975 = vsub.f32 %v917, %v860
        %v976 = vsub.f32 %v918, %v861
        %v977 = vsub.f32 %v919, %v862
        %v978 = vsub.f32 %v920, %v863
        %v979 = vsub.f32 %v921, %v864
        %v980 = vsub.f32 %v922, %v865
        %v981 = vsub.f32 %v923, %v866
        %v982 = vsub.f32 %v924, %v867
        %v983 = vsub.f32 %v925, %v868
        %v984 = vsub.f32 %v926, %v869
        %v985 = vsub.f32 %v927, %v870
        %v986 = vsub.f32 %v928, %v871
        %v987 = vsub.f32 %v929, %v872
        %v988 = vsub.f32 %v930, %v873
        %v989 = vsub.f32 %v931, %v874
        %v990 = vsub.f32 %v932, %v875
        %v991 = vsub.f32 %v933, %v876
        %v992 = vsub.f32 %v934, %v877
        %v993 = vsub.f32 %v935, %v878
        %v994 = vsub.f32 %v936, %v879
        %v995 = vsub.f32 %v937, %v880
        %v996 = vsub.f32 %v938, %v881
        %v997 = vsub.f32 %v939, %v882
        %v998 = vsub.f32 %v940, %v883
        %v999 = vsub.f32 %v941, %v884
        %v1000 = vsub.f32 %v942, %v885
        %v1001 = vsub.f32 %v943, %v886
        %v1002 = vsub.f32 %v944, %v887
        %v1003 = vsub.f32 %v945, %v888
        %v1004 = vsub.f32 %v946, %v889
        %v1005 = vsub.f32 %v947, %v890
        %v1006 = vsub.f32 %v948, %v891
        %v1007 = vsub.f32 %v949, %v892
        %v1008 = vstv %s951
        %v1009 = vmul.f32 %v1008, %v952
        %v1010 = vmul.f32 %v1008, %v953
        %v1011 = vmul.f32 %v1008, %v954
        %v1012 = vmul.f32 %v1008, %v955
        %v1013 = vmul.f32 %v1008, %v956
        %v1014 = vmul.f32 %v1008, %v957
        %v1015 = vmul.f32 %v1008, %v958
        %v1016 = vmul.f32 %v1008, %v959
        %v1017 = vmul.f32 %v1008, %v960
        %v1018 = vmul.f32 %v1008, %v961
        %v1019 = vmul.f32 %v1008, %v962
        %v1020 = vmul.f32 %v1008, %v963
        %v1021 = vmul.f32 %v1008, %v964
        %v1022 = vmul.f32 %v1008, %v965
        %v1023 = vmul.f32 %v1008, %v966
        %v1024 = vmul.f32 %v1008, %v967
        %v1025 = vmul.f32 %v1008, %v968
        %v1026 = vmul.f32 %v1008, %v969
        %v1027 = vmul.f32 %v1008, %v970
        %v1028 = vmul.f32 %v1008, %v971
        %v1029 = vmul.f32 %v1008, %v972
        %v1030 = vmul.f32 %v1008, %v973
        %v1031 = vmul.f32 %v1008, %v974
        %v1032 = vmul.f32 %v1008, %v975
        %v1033 = vmul.f32 %v1008, %v976
        %v1034 = vmul.f32 %v1008, %v977
        %v1035 = vmul.f32 %v1008, %v978
        %v1036 = vmul.f32 %v1008, %v979
        %v1037 = vmul.f32 %v1008, %v980
        %v1038 = vmul.f32 %v1008, %v981
        %v1039 = vmul.f32 %v1008, %v982
        %v1040 = vmul.f32 %v1008, %v983
        %v1041 = vmul.f32 %v1008, %v984
        %v1042 = vmul.f32 %v1008, %v985
        %v1043 = vmul.f32 %v1008, %v986
        %v1044 = vmul.f32 %v1008, %v987
        %v1045 = vmul.f32 %v1008, %v988
        %v1046 = vmul.f32 %v1008, %v989
        %v1047 = vmul.f32 %v1008, %v990
        %v1048 = vmul.f32 %v1008, %v991
        %v1049 = vmul.f32 %v1008, %v992
        %v1050 = vmul.f32 %v1008, %v993
        %v1051 = vmul.f32 %v1008, %v994
        %v1052 = vmul.f32 %v1008, %v995
        %v1053 = vmul.f32 %v1008, %v996
        %v1054 = vmul.f32 %v1008, %v997
        %v1055 = vmul.f32 %v1008, %v998
        %v1056 = vmul.f32 %v1008, %v999
        %v1057 = vmul.f32 %v1008, %v1000
        %v1058 = vmul.f32 %v1008, %v1001
        %v1059 = vmul.f32 %v1008, %v1002
        %v1060 = vmul.f32 %v1008, %v1003
        %v1061 = vmul.f32 %v1008, %v1004
        %v1062 = vmul.f32 %v1008, %v1005
        %v1063 = vmul.f32 %v1008, %v1006
        %v1064 = vmul.f32 %v1008, %v1007
        %v1065 = vtanh.pop %v1009
        %v1066 = vtanh.pop %v1010
        %v1067 = vtanh.pop %v1011
        %v1068 = vtanh.pop %v1012
        %v1069 = vtanh.pop %v1013
        %v1070 = vtanh.pop %v1014
        %v1071 = vtanh.pop %v1015
        %v1072 = vtanh.pop %v1016
        %v1073 = vtanh.pop %v1017
        %v1074 = vtanh.pop %v1018
        %v1075 = vtanh.pop %v1019
        %v1076 = vtanh.pop %v1020
        %v1077 = vtanh.pop %v1021
        %v1078 = vtanh.pop %v1022
        %v1079 = vtanh.pop %v1023
        %v1080 = vtanh.pop %v1024
        %v1081 = vtanh.pop %v1025
        %v1082 = vtanh.pop %v1026
        %v1083 = vtanh.pop %v1027
        %v1084 = vtanh.pop %v1028
        %v1085 = vtanh.pop %v1029
        %v1086 = vtanh.pop %v1030
        %v1087 = vtanh.pop %v1031
        %v1088 = vtanh.pop %v1032
        %v1089 = vtanh.pop %v1033
        %v1090 = vtanh.pop %v1034
        %v1091 = vtanh.pop %v1035
        %v1092 = vtanh.pop %v1036
        %v1093 = vtanh.pop %v1037
        %v1094 = vtanh.pop %v1038
        %v1095 = vtanh.pop %v1039
        %v1096 = vtanh.pop %v1040
        %v1097 = vtanh.pop %v1041
        %v1098 = vtanh.pop %v1042
        %v1099 = vtanh.pop %v1043
        %v1100 = vtanh.pop %v1044
        %v1101 = vtanh.pop %v1045
        %v1102 = vtanh.pop %v1046
        %v1103 = vtanh.pop %v1047
        %v1104 = vtanh.pop %v1048
        %v1105 = vtanh.pop %v1049
        %v1106 = vtanh.pop %v1050
        %v1107 = vtanh.pop %v1051
        %v1108 = vtanh.pop %v1052
        %v1109 = vtanh.pop %v1053
        %v1110 = vtanh.pop %v1054
        %v1111 = vtanh.pop %v1055
        %v1112 = vtanh.pop %v1056
        %v1113 = vtanh.pop %v1057
        %v1114 = vtanh.pop %v1058
        %v1115 = vtanh.pop %v1059
        %v1116 = vtanh.pop %v1060
        %v1117 = vtanh.pop %v1061
        %v1118 = vtanh.pop %v1062
        %v1119 = vtanh.pop %v1063
        %v1120 = vtanh.pop %v1064
        %v1121 = vmul.f32 %v1065, 0.5
        %v1122 = vmul.f32 %v1066, 0.5
        %v1123 = vmul.f32 %v1067, 0.5
        %v1124 = vmul.f32 %v1068, 0.5
        %v1125 = vmul.f32 %v1069, 0.5
        %v1126 = vmul.f32 %v1070, 0.5
        %v1127 = vmul.f32 %v1071, 0.5
        %v1128 = vmul.f32 %v1072, 0.5
        %v1129 = vmul.f32 %v1073, 0.5
        %v1130 = vmul.f32 %v1074, 0.5
        %v1131 = vmul.f32 %v1075, 0.5
        %v1132 = vmul.f32 %v1076, 0.5
        %v1133 = vmul.f32 %v1077, 0.5
        %v1134 = vmul.f32 %v1078, 0.5
        %v1135 = vmul.f32 %v1079, 0.5
        %v1136 = vmul.f32 %v1080, 0.5
        %v1137 = vmul.f32 %v1081, 0.5
        %v1138 = vmul.f32 %v1082, 0.5
        %v1139 = vmul.f32 %v1083, 0.5
        %v1140 = vmul.f32 %v1084, 0.5
        %v1141 = vmul.f32 %v1085, 0.5
        %v1142 = vmul.f32 %v1086, 0.5
        %v1143 = vmul.f32 %v1087, 0.5
        %v1144 = vmul.f32 %v1088, 0.5
        %v1145 = vmul.f32 %v1089, 0.5
        %v1146 = vmul.f32 %v1090, 0.5
        %v1147 = vmul.f32 %v1091, 0.5
        %v1148 = vmul.f32 %v1092, 0.5
        %v1149 = vmul.f32 %v1093, 0.5
        %v1150 = vmul.f32 %v1094, 0.5
        %v1151 = vmul.f32 %v1095, 0.5
        %v1152 = vmul.f32 %v1096, 0.5
        %v1153 = vmul.f32 %v1097, 0.5
        %v1154 = vmul.f32 %v1098, 0.5
        %v1155 = vmul.f32 %v1099, 0.5
        %v1156 = vmul.f32 %v1100, 0.5
        %v1157 = vmul.f32 %v1101, 0.5
        %v1158 = vmul.f32 %v1102, 0.5
        %v1159 = vmul.f32 %v1103, 0.5
        %v1160 = vmul.f32 %v1104, 0.5
        %v1161 = vmul.f32 %v1105, 0.5
        %v1162 = vmul.f32 %v1106, 0.5
        %v1163 = vmul.f32 %v1107, 0.5
        %v1164 = vmul.f32 %v1108, 0.5
        %v1165 = vmul.f32 %v1109, 0.5
        %v1166 = vmul.f32 %v1110, 0.5
        %v1167 = vmul.f32 %v1111, 0.5
        %v1168 = vmul.f32 %v1112, 0.5
        %v1169 = vmul.f32 %v1113, 0.5
        %v1170 = vmul.f32 %v1114, 0.5
        %v1171 = vmul.f32 %v1115, 0.5
        %v1172 = vmul.f32 %v1116, 0.5
        %v1173 = vmul.f32 %v1117, 0.5
        %v1174 = vmul.f32 %v1118, 0.5
        %v1175 = vmul.f32 %v1119, 0.5
        %v1176 = vmul.f32 %v1120, 0.5
        %v1177 = vadd.f32 %v1121, 0.5
        %v1178 = vadd.f32 %v1122, 0.5
        %v1179 = vadd.f32 %v1123, 0.5
        %v1180 = vadd.f32 %v1124, 0.5
        %v1181 = vadd.f32 %v1125, 0.5
        %v1182 = vadd.f32 %v1126, 0.5
        %v1183 = vadd.f32 %v1127, 0.5
        %v1184 = vadd.f32 %v1128, 0.5
        %v1185 = vadd.f32 %v1129, 0.5
        %v1186 = vadd.f32 %v1130, 0.5
        %v1187 = vadd.f32 %v1131, 0.5
        %v1188 = vadd.f32 %v1132, 0.5
        %v1189 = vadd.f32 %v1133, 0.5
        %v1190 = vadd.f32 %v1134, 0.5
        %v1191 = vadd.f32 %v1135, 0.5
        %v1192 = vadd.f32 %v1136, 0.5
        %v1193 = vadd.f32 %v1137, 0.5
        %v1194 = vadd.f32 %v1138, 0.5
        %v1195 = vadd.f32 %v1139, 0.5
        %v1196 = vadd.f32 %v1140, 0.5
        %v1197 = vadd.f32 %v1141, 0.5
        %v1198 = vadd.f32 %v1142, 0.5
        %v1199 = vadd.f32 %v1143, 0.5
        %v1200 = vadd.f32 %v1144, 0.5
        %v1201 = vadd.f32 %v1145, 0.5
        %v1202 = vadd.f32 %v1146, 0.5
        %v1203 = vadd.f32 %v1147, 0.5
        %v1204 = vadd.f32 %v1148, 0.5
        %v1205 = vadd.f32 %v1149, 0.5
        %v1206 = vadd.f32 %v1150, 0.5
        %v1207 = vadd.f32 %v1151, 0.5
        %v1208 = vadd.f32 %v1152, 0.5
        %v1209 = vadd.f32 %v1153, 0.5
        %v1210 = vadd.f32 %v1154, 0.5
        %v1211 = vadd.f32 %v1155, 0.5
        %v1212 = vadd.f32 %v1156, 0.5
        %v1213 = vadd.f32 %v1157, 0.5
        %v1214 = vadd.f32 %v1158, 0.5
        %v1215 = vadd.f32 %v1159, 0.5
        %v1216 = vadd.f32 %v1160, 0.5
        %v1217 = vadd.f32 %v1161, 0.5
        %v1218 = vadd.f32 %v1162, 0.5
        %v1219 = vadd.f32 %v1163, 0.5
        %v1220 = vadd.f32 %v1164, 0.5
        %v1221 = vadd.f32 %v1165, 0.5
        %v1222 = vadd.f32 %v1166, 0.5
        %v1223 = vadd.f32 %v1167, 0.5
        %v1224 = vadd.f32 %v1168, 0.5
        %v1225 = vadd.f32 %v1169, 0.5
        %v1226 = vadd.f32 %v1170, 0.5
        %v1227 = vadd.f32 %v1171, 0.5
        %v1228 = vadd.f32 %v1172, 0.5
        %v1229 = vadd.f32 %v1173, 0.5
        %v1230 = vadd.f32 %v1174, 0.5
        %v1231 = vadd.f32 %v1175, 0.5
        %v1232 = vadd.f32 %v1176, 0.5
        %v1233 = vmul.f32 %v894, %v1177
        %v1234 = vmul.f32 %v895, %v1178
        %v1235 = vmul.f32 %v896, %v1179
        %v1236 = vmul.f32 %v897, %v1180
        %v1237 = vmul.f32 %v898, %v1181
        %v1238 = vmul.f32 %v899, %v1182
        %v1239 = vmul.f32 %v900, %v1183
        %v1240 = vmul.f32 %v901, %v1184
        %v1241 = vmul.f32 %v902, %v1185
        %v1242 = vmul.f32 %v903, %v1186
        %v1243 = vmul.f32 %v904, %v1187
        %v1244 = vmul.f32 %v905, %v1188
        %v1245 = vmul.f32 %v906, %v1189
        %v1246 = vmul.f32 %v907, %v1190
        %v1247 = vmul.f32 %v908, %v1191
        %v1248 = vmul.f32 %v909, %v1192
        %v1249 = vmul.f32 %v910, %v1193
        %v1250 = vmul.f32 %v911, %v1194
        %v1251 = vmul.f32 %v912, %v1195
        %v1252 = vmul.f32 %v913, %v1196
        %v1253 = vmul.f32 %v914, %v1197
        %v1254 = vmul.f32 %v915, %v1198
        %v1255 = vmul.f32 %v916, %v1199
        %v1256 = vmul.f32 %v917, %v1200
        %v1257 = vmul.f32 %v918, %v1201
        %v1258 = vmul.f32 %v919, %v1202
        %v1259 = vmul.f32 %v920, %v1203
        %v1260 = vmul.f32 %v921, %v1204
        %v1261 = vmul.f32 %v922, %v1205
        %v1262 = vmul.f32 %v923, %v1206
        %v1263 = vmul.f32 %v924, %v1207
        %v1264 = vmul.f32 %v925, %v1208
        %v1265 = vmul.f32 %v926, %v1209
        %v1266 = vmul.f32 %v927, %v1210
        %v1267 = vmul.f32 %v928, %v1211
        %v1268 = vmul.f32 %v929, %v1212
        %v1269 = vmul.f32 %v930, %v1213
        %v1270 = vmul.f32 %v931, %v1214
        %v1271 = vmul.f32 %v932, %v1215
        %v1272 = vmul.f32 %v933, %v1216
        %v1273 = vmul.f32 %v934, %v1217
        %v1274 = vmul.f32 %v935, %v1218
        %v1275 = vmul.f32 %v936, %v1219
        %v1276 = vmul.f32 %v937, %v1220
        %v1277 = vmul.f32 %v938, %v1221
        %v1278 = vmul.f32 %v939, %v1222
        %v1279 = vmul.f32 %v940, %v1223
        %v1280 = vmul.f32 %v941, %v1224
        %v1281 = vmul.f32 %v942, %v1225
        %v1282 = vmul.f32 %v943, %v1226
        %v1283 = vmul.f32 %v944, %v1227
        %v1284 = vmul.f32 %v945, %v1228
        %v1285 = vmul.f32 %v946, %v1229
        %v1286 = vmul.f32 %v947, %v1230
        %v1287 = vmul.f32 %v948, %v1231
        %v1288 = vmul.f32 %v949, %v1232
        %vm1289 = vcmask 785408
        %v1291 = vsel %vm1289, %v384, 0
        %1293 = vmatprep.subr.mxu0 %v1234
        %1294 = vmatpush1.msra.mxu0 %v1233
        %1295 = vmatprep.subr.mxu0 %v1236
        %1296 = vmatpush1.msra.mxu0 %v1235
        %1297 = vmatprep.subr.mxu0 %v1238
        %1298 = vmatpush1.msra.mxu0 %v1237
        %1299 = vmatprep.subr.mxu0 %v1240
        %1300 = vmatpush1.msra.mxu0 %v1239
        %1301 = vmatprep.subr.mxu0 %v1242
        %1302 = vmatpush1.msra.mxu0 %v1241
        %1303 = vmatprep.subr.mxu0 %v1244
        %1304 = vmatpush1.msra.mxu0 %v1243
        %1305 = vmatprep.subr.mxu0 %v1246
        %1306 = vmatpush1.msra.mxu0 %v1245
        %1307 = vmatprep.subr.mxu0 %v1248
        %1308 = vmatpush1.msra.mxu0 %v1247
        %1309 = vmatprep.subr.mxu0 %v1250
        %1310 = vmatpush1.msra.mxu0 %v1249
        %1311 = vmatprep.subr.mxu0 %v1252
        %1312 = vmatpush1.msra.mxu0 %v1251
        %1313 = vmatprep.subr.mxu0 %v1254
        %1314 = vmatpush1.msra.mxu0 %v1253
        %1315 = vmatprep.subr.mxu0 %v1256
        %1316 = vmatpush1.msra.mxu0 %v1255
        %1317 = vmatprep.subr.mxu0 %v1258
        %1318 = vmatpush1.msra.mxu0 %v1257
        %1319 = vmatprep.subr.mxu0 %v1260
        %1320 = vmatpush1.msra.mxu0 %v1259
        %1321 = vmatprep.subr.mxu0 %v1262
        %1322 = vmatpush1.msra.mxu0 %v1261
        %1323 = vmatprep.subr.mxu0 %v1264
        %1324 = vmatpush1.msra.mxu0 %v1263
        %1325 = vmatprep.subr.mxu0 %v1266
        %1326 = vmatpush1.msra.mxu0 %v1265
        %1327 = vmatprep.subr.mxu0 %v1268
        %1328 = vmatpush1.msra.mxu0 %v1267
        %1329 = vmatprep.subr.mxu0 %v1270
        %1330 = vmatpush1.msra.mxu0 %v1269
        %1331 = vmatprep.subr.mxu0 %v1272
        %1332 = vmatpush1.msra.mxu0 %v1271
        %1333 = vmatprep.subr.mxu0 %v1274
        %1334 = vmatpush1.msra.mxu0 %v1273
        %1335 = vmatprep.subr.mxu0 %v1276
        %1336 = vmatpush1.msra.mxu0 %v1275
        %1337 = vmatprep.subr.mxu0 %v1278
        %1338 = vmatpush1.msra.mxu0 %v1277
        %1339 = vmatprep.subr.mxu0 %v1280
        %1340 = vmatpush1.msra.mxu0 %v1279
        %1341 = vmatprep.subr.mxu0 %v1282
        %1342 = vmatpush1.msra.mxu0 %v1281
        %1343 = vmatprep.subr.mxu0 %v1284
        %1344 = vmatpush1.msra.mxu0 %v1283
        %1345 = vmatprep.subr.mxu0 %v1286
        %1346 = vmatpush1.msra.mxu0 %v1285
        %1347 = vmatprep.subr.mxu0 %v1288
        %1348 = vmatpush1.msra.mxu0 %v1287
        %1349 = vmatprep.subr.mxu0 0.0
        %1350 = vmatpush1.msra.mxu0 0.0
        %1351 = vmatprep.subr.mxu0 0.0
        %1352 = vmatpush1.msra.mxu0 0.0
        %1353 = vmatprep.subr.mxu0 0.0
        %1354 = vmatpush1.msra.mxu0 0.0
        %1355 = vmatprep.subr.mxu0 0.0
        %1356 = vmatpush1.msra.mxu0 0.0
        %1357 = vmatprep.mubr.f32.mxu0 %v1291
        %1358 = vmatmul.mubr.f32.gmra.mrb[0].mxu0 %v383
        %v1359 = vpop.f32.mrb[0].mxu0
        %v1360 = vadd.f32 0.0, %v1359
        %v1361 = vpop.f32.mrb[0].mxu0
        %v1362 = vadd.f32 0.0, %v1361
        %1363 = vdwg.mxu0
        %1364 = vmatprep.subr.mxu0 %v781
        %1365 = vmatpush1.msra.mxu0 %v780
        %1366 = vmatprep.subr.mxu0 %v783
        %1367 = vmatpush1.msra.mxu0 %v782
        %1368 = vmatprep.subr.mxu0 %v785
        %1369 = vmatpush1.msra.mxu0 %v784
        %1370 = vmatprep.subr.mxu0 %v787
        %1371 = vmatpush1.msra.mxu0 %v786
        %1372 = vmatprep.subr.mxu0 %v789
        %1373 = vmatpush1.msra.mxu0 %v788
        %1374 = vmatprep.subr.mxu0 %v791
        %1375 = vmatpush1.msra.mxu0 %v790
        %1376 = vmatprep.subr.mxu0 %v793
        %1377 = vmatpush1.msra.mxu0 %v792
        %1378 = vmatprep.subr.mxu0 %v795
        %1379 = vmatpush1.msra.mxu0 %v794
        %1380 = vmatprep.subr.mxu0 %v797
        %1381 = vmatpush1.msra.mxu0 %v796
        %1382 = vmatprep.subr.mxu0 %v799
        %1383 = vmatpush1.msra.mxu0 %v798
        %1384 = vmatprep.subr.mxu0 %v801
        %1385 = vmatpush1.msra.mxu0 %v800
        %1386 = vmatprep.subr.mxu0 %v803
        %1387 = vmatpush1.msra.mxu0 %v802
        %1388 = vmatprep.subr.mxu0 %v805
        %1389 = vmatpush1.msra.mxu0 %v804
        %1390 = vmatprep.subr.mxu0 %v807
        %1391 = vmatpush1.msra.mxu0 %v806
        %1392 = vmatprep.subr.mxu0 %v809
        %1393 = vmatpush1.msra.mxu0 %v808
        %1394 = vmatprep.subr.mxu0 %v811
        %1395 = vmatpush1.msra.mxu0 %v810
        %1396 = vmatprep.subr.mxu0 %v813
        %1397 = vmatpush1.msra.mxu0 %v812
        %1398 = vmatprep.subr.mxu0 %v815
        %1399 = vmatpush1.msra.mxu0 %v814
        %1400 = vmatprep.subr.mxu0 %v817
        %1401 = vmatpush1.msra.mxu0 %v816
        %1402 = vmatprep.subr.mxu0 %v819
        %1403 = vmatpush1.msra.mxu0 %v818
        %1404 = vmatprep.subr.mxu0 %v821
        %1405 = vmatpush1.msra.mxu0 %v820
        %1406 = vmatprep.subr.mxu0 %v823
        %1407 = vmatpush1.msra.mxu0 %v822
        %1408 = vmatprep.subr.mxu0 %v825
        %1409 = vmatpush1.msra.mxu0 %v824
        %1410 = vmatprep.subr.mxu0 %v827
        %1411 = vmatpush1.msra.mxu0 %v826
        %1412 = vmatprep.subr.mxu0 %v829
        %1413 = vmatpush1.msra.mxu0 %v828
        %1414 = vmatprep.subr.mxu0 %v831
        %1415 = vmatpush1.msra.mxu0 %v830
        %1416 = vmatprep.subr.mxu0 %v833
        %1417 = vmatpush1.msra.mxu0 %v832
        %1418 = vmatprep.subr.mxu0 %v835
        %1419 = vmatpush1.msra.mxu0 %v834
        %1420 = vmatprep.subr.mxu0 0.0
        %1421 = vmatpush1.msra.mxu0 0.0
        %1422 = vmatprep.subr.mxu0 0.0
        %1423 = vmatpush1.msra.mxu0 0.0
        %1424 = vmatprep.subr.mxu0 0.0
        %1425 = vmatpush1.msra.mxu0 0.0
        %1426 = vmatprep.subr.mxu0 0.0
        %1427 = vmatpush1.msra.mxu0 0.0
        %1428 = vmatprep.mubr.f32.mxu0 %v1291
        %1429 = vmatmul.mubr.f32.gmra.mrb[0].mxu0 %v383
        %v1430 = vpop.f32.mrb[0].mxu0
        %v1431 = vadd.f32 %v1360, %v1430
        %v1432 = vpop.f32.mrb[0].mxu0
        %v1433 = vadd.f32 %v1362, %v1432
        %1434 = vdwg.mxu0
        %s1435 = scalar_lea.vmem %s335, 896 [#allocation10]
        %v1436 = vld [vmem:[%s1435] sm:$0xff]
        %v1437 = vld [vmem:[%s1435 + $0x8] sm:$0xff]
        %v1438 = vld [vmem:[%s1435 + $0x10] sm:$0xff]
        %v1439 = vld [vmem:[%s1435 + $0x18] sm:$0xff]
        %v1440 = vld [vmem:[%s1435 + $0x20] sm:$0xff]
        %v1441 = vld [vmem:[%s1435 + $0x28] sm:$0xff]
        %v1442 = vld [vmem:[%s1435 + $0x30] sm:$0xff]
        %v1443 = vld [vmem:[%s1435 + $0x38] sm:$0xff]
        %v1444 = vld [vmem:[%s1435 + $0x40] sm:$0xff]
        %v1445 = vld [vmem:[%s1435 + $0x48] sm:$0xff]
        %v1446 = vld [vmem:[%s1435 + $0x50] sm:$0xff]
        %v1447 = vld [vmem:[%s1435 + $0x58] sm:$0xff]
        %v1448 = vld [vmem:[%s1435 + $0x60] sm:$0xff]
        %v1449 = vld [vmem:[%s1435 + $0x68] sm:$0xff]
        %v1450 = vld [vmem:[%s1435 + $0x70] sm:$0xff]
        %v1451 = vld [vmem:[%s1435 + $0x78] sm:$0xff]
        %v1452 = vld [vmem:[%s1435 + $0x80] sm:$0xff]
        %v1453 = vld [vmem:[%s1435 + $0x88] sm:$0xff]
        %v1454 = vld [vmem:[%s1435 + $0x90] sm:$0xff]
        %v1455 = vld [vmem:[%s1435 + $0x98] sm:$0xff]
        %v1456 = vld [vmem:[%s1435 + $0xa0] sm:$0xff]
        %v1457 = vld [vmem:[%s1435 + $0xa8] sm:$0xff]
        %v1458 = vld [vmem:[%s1435 + $0xb0] sm:$0xff]
        %v1459 = vld [vmem:[%s1435 + $0xb8] sm:$0xff]
        %v1460 = vld [vmem:[%s1435 + $0xc0] sm:$0xff]
        %v1461 = vld [vmem:[%s1435 + $0xc8] sm:$0xff]
        %v1462 = vld [vmem:[%s1435 + $0xd0] sm:$0xff]
        %v1463 = vld [vmem:[%s1435 + $0xd8] sm:$0xff]
        %v1464 = vld [vmem:[%s1435 + $0xe0] sm:$0xff]
        %v1465 = vld [vmem:[%s1435 + $0xe8] sm:$0xff]
        %v1466 = vld [vmem:[%s1435 + $0xf0] sm:$0xff]
        %v1467 = vld [vmem:[%s1435 + $0xf8] sm:$0xff]
        %v1468 = vld [vmem:[%s1435 + $0x100] sm:$0xff]
        %v1469 = vld [vmem:[%s1435 + $0x108] sm:$0xff]
        %v1470 = vld [vmem:[%s1435 + $0x110] sm:$0xff]
        %v1471 = vld [vmem:[%s1435 + $0x118] sm:$0xff]
        %v1472 = vld [vmem:[%s1435 + $0x120] sm:$0xff]
        %v1473 = vld [vmem:[%s1435 + $0x128] sm:$0xff]
        %v1474 = vld [vmem:[%s1435 + $0x130] sm:$0xff]
        %v1475 = vld [vmem:[%s1435 + $0x138] sm:$0xff]
        %v1476 = vld [vmem:[%s1435 + $0x140] sm:$0xff]
        %v1477 = vld [vmem:[%s1435 + $0x148] sm:$0xff]
        %v1478 = vld [vmem:[%s1435 + $0x150] sm:$0xff]
        %v1479 = vld [vmem:[%s1435 + $0x158] sm:$0xff]
        %v1480 = vld [vmem:[%s1435 + $0x160] sm:$0xff]
        %v1481 = vld [vmem:[%s1435 + $0x168] sm:$0xff]
        %v1482 = vld [vmem:[%s1435 + $0x170] sm:$0xff]
        %v1483 = vld [vmem:[%s1435 + $0x178] sm:$0xff]
        %v1484 = vld [vmem:[%s1435 + $0x180] sm:$0xff]
        %v1485 = vld [vmem:[%s1435 + $0x188] sm:$0xff]
        %v1486 = vld [vmem:[%s1435 + $0x190] sm:$0xff]
        %v1487 = vld [vmem:[%s1435 + $0x198] sm:$0xff]
        %v1488 = vld [vmem:[%s1435 + $0x1a0] sm:$0xff]
        %v1489 = vld [vmem:[%s1435 + $0x1a8] sm:$0xff]
        %v1490 = vld [vmem:[%s1435 + $0x1b0] sm:$0xff]
        %v1491 = vld [vmem:[%s1435 + $0x1b8] sm:$0xff]
        %s1492 = scalar_lea.vmem %s344, 896 [#allocation12]
        %v1493 = vld [vmem:[%s1492] sm:$0xff]
        %v1494 = vld [vmem:[%s1492 + $0x8] sm:$0xff]
        %v1495 = vld [vmem:[%s1492 + $0x10] sm:$0xff]
        %v1496 = vld [vmem:[%s1492 + $0x18] sm:$0xff]
        %v1497 = vld [vmem:[%s1492 + $0x20] sm:$0xff]
        %v1498 = vld [vmem:[%s1492 + $0x28] sm:$0xff]
        %v1499 = vld [vmem:[%s1492 + $0x30] sm:$0xff]
        %v1500 = vld [vmem:[%s1492 + $0x38] sm:$0xff]
        %v1501 = vld [vmem:[%s1492 + $0x40] sm:$0xff]
        %v1502 = vld [vmem:[%s1492 + $0x48] sm:$0xff]
        %v1503 = vld [vmem:[%s1492 + $0x50] sm:$0xff]
        %v1504 = vld [vmem:[%s1492 + $0x58] sm:$0xff]
        %v1505 = vld [vmem:[%s1492 + $0x60] sm:$0xff]
        %v1506 = vld [vmem:[%s1492 + $0x68] sm:$0xff]
        %v1507 = vld [vmem:[%s1492 + $0x70] sm:$0xff]
        %v1508 = vld [vmem:[%s1492 + $0x78] sm:$0xff]
        %v1509 = vld [vmem:[%s1492 + $0x80] sm:$0xff]
        %v1510 = vld [vmem:[%s1492 + $0x88] sm:$0xff]
        %v1511 = vld [vmem:[%s1492 + $0x90] sm:$0xff]
        %v1512 = vld [vmem:[%s1492 + $0x98] sm:$0xff]
        %v1513 = vld [vmem:[%s1492 + $0xa0] sm:$0xff]
        %v1514 = vld [vmem:[%s1492 + $0xa8] sm:$0xff]
        %v1515 = vld [vmem:[%s1492 + $0xb0] sm:$0xff]
        %v1516 = vld [vmem:[%s1492 + $0xb8] sm:$0xff]
        %v1517 = vld [vmem:[%s1492 + $0xc0] sm:$0xff]
        %v1518 = vld [vmem:[%s1492 + $0xc8] sm:$0xff]
        %v1519 = vld [vmem:[%s1492 + $0xd0] sm:$0xff]
        %v1520 = vld [vmem:[%s1492 + $0xd8] sm:$0xff]
        %v1521 = vld [vmem:[%s1492 + $0xe0] sm:$0xff]
        %v1522 = vld [vmem:[%s1492 + $0xe8] sm:$0xff]
        %v1523 = vld [vmem:[%s1492 + $0xf0] sm:$0xff]
        %v1524 = vld [vmem:[%s1492 + $0xf8] sm:$0xff]
        %v1525 = vld [vmem:[%s1492 + $0x100] sm:$0xff]
        %v1526 = vld [vmem:[%s1492 + $0x108] sm:$0xff]
        %v1527 = vld [vmem:[%s1492 + $0x110] sm:$0xff]
        %v1528 = vld [vmem:[%s1492 + $0x118] sm:$0xff]
        %v1529 = vld [vmem:[%s1492 + $0x120] sm:$0xff]
        %v1530 = vld [vmem:[%s1492 + $0x128] sm:$0xff]
        %v1531 = vld [vmem:[%s1492 + $0x130] sm:$0xff]
        %v1532 = vld [vmem:[%s1492 + $0x138] sm:$0xff]
        %v1533 = vld [vmem:[%s1492 + $0x140] sm:$0xff]
        %v1534 = vld [vmem:[%s1492 + $0x148] sm:$0xff]
        %v1535 = vld [vmem:[%s1492 + $0x150] sm:$0xff]
        %v1536 = vld [vmem:[%s1492 + $0x158] sm:$0xff]
        %v1537 = vld [vmem:[%s1492 + $0x160] sm:$0xff]
        %v1538 = vld [vmem:[%s1492 + $0x168] sm:$0xff]
        %v1539 = vld [vmem:[%s1492 + $0x170] sm:$0xff]
        %v1540 = vld [vmem:[%s1492 + $0x178] sm:$0xff]
        %v1541 = vld [vmem:[%s1492 + $0x180] sm:$0xff]
        %v1542 = vld [vmem:[%s1492 + $0x188] sm:$0xff]
        %v1543 = vld [vmem:[%s1492 + $0x190] sm:$0xff]
        %v1544 = vld [vmem:[%s1492 + $0x198] sm:$0xff]
        %v1545 = vld [vmem:[%s1492 + $0x1a0] sm:$0xff]
        %v1546 = vld [vmem:[%s1492 + $0x1a8] sm:$0xff]
        %v1547 = vld [vmem:[%s1492 + $0x1b0] sm:$0xff]
        %v1548 = vld [vmem:[%s1492 + $0x1b8] sm:$0xff]
        %s1549 = sld [smem:[#allocation3 + $0x2]]
        %s1550 = smul.f32 %s1549, 0.5
        %v1551 = vsub.f32 %v1493, %v1436
        %v1552 = vsub.f32 %v1494, %v1437
        %v1553 = vsub.f32 %v1495, %v1438
        %v1554 = vsub.f32 %v1496, %v1439
        %v1555 = vsub.f32 %v1497, %v1440
        %v1556 = vsub.f32 %v1498, %v1441
        %v1557 = vsub.f32 %v1499, %v1442
        %v1558 = vsub.f32 %v1500, %v1443
        %v1559 = vsub.f32 %v1501, %v1444
        %v1560 = vsub.f32 %v1502, %v1445
        %v1561 = vsub.f32 %v1503, %v1446
        %v1562 = vsub.f32 %v1504, %v1447
        %v1563 = vsub.f32 %v1505, %v1448
        %v1564 = vsub.f32 %v1506, %v1449
        %v1565 = vsub.f32 %v1507, %v1450
        %v1566 = vsub.f32 %v1508, %v1451
        %v1567 = vsub.f32 %v1509, %v1452
        %v1568 = vsub.f32 %v1510, %v1453
        %v1569 = vsub.f32 %v1511, %v1454
        %v1570 = vsub.f32 %v1512, %v1455
        %v1571 = vsub.f32 %v1513, %v1456
        %v1572 = vsub.f32 %v1514, %v1457
        %v1573 = vsub.f32 %v1515, %v1458
        %v1574 = vsub.f32 %v1516, %v1459
        %v1575 = vsub.f32 %v1517, %v1460
        %v1576 = vsub.f32 %v1518, %v1461
        %v1577 = vsub.f32 %v1519, %v1462
        %v1578 = vsub.f32 %v1520, %v1463
        %v1579 = vsub.f32 %v1521, %v1464
        %v1580 = vsub.f32 %v1522, %v1465
        %v1581 = vsub.f32 %v1523, %v1466
        %v1582 = vsub.f32 %v1524, %v1467
        %v1583 = vsub.f32 %v1525, %v1468
        %v1584 = vsub.f32 %v1526, %v1469
        %v1585 = vsub.f32 %v1527, %v1470
        %v1586 = vsub.f32 %v1528, %v1471
        %v1587 = vsub.f32 %v1529, %v1472
        %v1588 = vsub.f32 %v1530, %v1473
        %v1589 = vsub.f32 %v1531, %v1474
        %v1590 = vsub.f32 %v1532, %v1475
        %v1591 = vsub.f32 %v1533, %v1476
        %v1592 = vsub.f32 %v1534, %v1477
        %v1593 = vsub.f32 %v1535, %v1478
        %v1594 = vsub.f32 %v1536, %v1479
        %v1595 = vsub.f32 %v1537, %v1480
        %v1596 = vsub.f32 %v1538, %v1481
        %v1597 = vsub.f32 %v1539, %v1482
        %v1598 = vsub.f32 %v1540, %v1483
        %v1599 = vsub.f32 %v1541, %v1484
        %v1600 = vsub.f32 %v1542, %v1485
        %v1601 = vsub.f32 %v1543, %v1486
        %v1602 = vsub.f32 %v1544, %v1487
        %v1603 = vsub.f32 %v1545, %v1488
        %v1604 = vsub.f32 %v1546, %v1489
        %v1605 = vsub.f32 %v1547, %v1490
        %v1606 = vsub.f32 %v1548, %v1491
        %v1607 = vstv %s1550
        %v1608 = vmul.f32 %v1607, %v1551
        %v1609 = vmul.f32 %v1607, %v1552
        %v1610 = vmul.f32 %v1607, %v1553
        %v1611 = vmul.f32 %v1607, %v1554
        %v1612 = vmul.f32 %v1607, %v1555
        %v1613 = vmul.f32 %v1607, %v1556
        %v1614 = vmul.f32 %v1607, %v1557
        %v1615 = vmul.f32 %v1607, %v1558
        %v1616 = vmul.f32 %v1607, %v1559
        %v1617 = vmul.f32 %v1607, %v1560
        %v1618 = vmul.f32 %v1607, %v1561
        %v1619 = vmul.f32 %v1607, %v1562
        %v1620 = vmul.f32 %v1607, %v1563
        %v1621 = vmul.f32 %v1607, %v1564
        %v1622 = vmul.f32 %v1607, %v1565
        %v1623 = vmul.f32 %v1607, %v1566
        %v1624 = vmul.f32 %v1607, %v1567
        %v1625 = vmul.f32 %v1607, %v1568
        %v1626 = vmul.f32 %v1607, %v1569
        %v1627 = vmul.f32 %v1607, %v1570
        %v1628 = vmul.f32 %v1607, %v1571
        %v1629 = vmul.f32 %v1607, %v1572
        %v1630 = vmul.f32 %v1607, %v1573
        %v1631 = vmul.f32 %v1607, %v1574
        %v1632 = vmul.f32 %v1607, %v1575
        %v1633 = vmul.f32 %v1607, %v1576
        %v1634 = vmul.f32 %v1607, %v1577
        %v1635 = vmul.f32 %v1607, %v1578
        %v1636 = vmul.f32 %v1607, %v1579
        %v1637 = vmul.f32 %v1607, %v1580
        %v1638 = vmul.f32 %v1607, %v1581
        %v1639 = vmul.f32 %v1607, %v1582
        %v1640 = vmul.f32 %v1607, %v1583
        %v1641 = vmul.f32 %v1607, %v1584
        %v1642 = vmul.f32 %v1607, %v1585
        %v1643 = vmul.f32 %v1607, %v1586
        %v1644 = vmul.f32 %v1607, %v1587
        %v1645 = vmul.f32 %v1607, %v1588
        %v1646 = vmul.f32 %v1607, %v1589
        %v1647 = vmul.f32 %v1607, %v1590
        %v1648 = vmul.f32 %v1607, %v1591
        %v1649 = vmul.f32 %v1607, %v1592
        %v1650 = vmul.f32 %v1607, %v1593
        %v1651 = vmul.f32 %v1607, %v1594
        %v1652 = vmul.f32 %v1607, %v1595
        %v1653 = vmul.f32 %v1607, %v1596
        %v1654 = vmul.f32 %v1607, %v1597
        %v1655 = vmul.f32 %v1607, %v1598
        %v1656 = vmul.f32 %v1607, %v1599
        %v1657 = vmul.f32 %v1607, %v1600
        %v1658 = vmul.f32 %v1607, %v1601
        %v1659 = vmul.f32 %v1607, %v1602
        %v1660 = vmul.f32 %v1607, %v1603
        %v1661 = vmul.f32 %v1607, %v1604
        %v1662 = vmul.f32 %v1607, %v1605
        %v1663 = vmul.f32 %v1607, %v1606
        %v1664 = vtanh.pop %v1608
        %v1665 = vtanh.pop %v1609
        %v1666 = vtanh.pop %v1610
        %v1667 = vtanh.pop %v1611
        %v1668 = vtanh.pop %v1612
        %v1669 = vtanh.pop %v1613
        %v1670 = vtanh.pop %v1614
        %v1671 = vtanh.pop %v1615
        %v1672 = vtanh.pop %v1616
        %v1673 = vtanh.pop %v1617
        %v1674 = vtanh.pop %v1618
        %v1675 = vtanh.pop %v1619
        %v1676 = vtanh.pop %v1620
        %v1677 = vtanh.pop %v1621
        %v1678 = vtanh.pop %v1622
        %v1679 = vtanh.pop %v1623
        %v1680 = vtanh.pop %v1624
        %v1681 = vtanh.pop %v1625
        %v1682 = vtanh.pop %v1626
        %v1683 = vtanh.pop %v1627
        %v1684 = vtanh.pop %v1628
        %v1685 = vtanh.pop %v1629
        %v1686 = vtanh.pop %v1630
        %v1687 = vtanh.pop %v1631
        %v1688 = vtanh.pop %v1632
        %v1689 = vtanh.pop %v1633
        %v1690 = vtanh.pop %v1634
        %v1691 = vtanh.pop %v1635
        %v1692 = vtanh.pop %v1636
        %v1693 = vtanh.pop %v1637
        %v1694 = vtanh.pop %v1638
        %v1695 = vtanh.pop %v1639
        %v1696 = vtanh.pop %v1640
        %v1697 = vtanh.pop %v1641
        %v1698 = vtanh.pop %v1642
        %v1699 = vtanh.pop %v1643
        %v1700 = vtanh.pop %v1644
        %v1701 = vtanh.pop %v1645
        %v1702 = vtanh.pop %v1646
        %v1703 = vtanh.pop %v1647
        %v1704 = vtanh.pop %v1648
        %v1705 = vtanh.pop %v1649
        %v1706 = vtanh.pop %v1650
        %v1707 = vtanh.pop %v1651
        %v1708 = vtanh.pop %v1652
        %v1709 = vtanh.pop %v1653
        %v1710 = vtanh.pop %v1654
        %v1711 = vtanh.pop %v1655
        %v1712 = vtanh.pop %v1656
        %v1713 = vtanh.pop %v1657
        %v1714 = vtanh.pop %v1658
        %v1715 = vtanh.pop %v1659
        %v1716 = vtanh.pop %v1660
        %v1717 = vtanh.pop %v1661
        %v1718 = vtanh.pop %v1662
        %v1719 = vtanh.pop %v1663
        %v1720 = vmul.f32 %v1664, 0.5
        %v1721 = vmul.f32 %v1665, 0.5
        %v1722 = vmul.f32 %v1666, 0.5
        %v1723 = vmul.f32 %v1667, 0.5
        %v1724 = vmul.f32 %v1668, 0.5
        %v1725 = vmul.f32 %v1669, 0.5
        %v1726 = vmul.f32 %v1670, 0.5
        %v1727 = vmul.f32 %v1671, 0.5
        %v1728 = vmul.f32 %v1672, 0.5
        %v1729 = vmul.f32 %v1673, 0.5
        %v1730 = vmul.f32 %v1674, 0.5
        %v1731 = vmul.f32 %v1675, 0.5
        %v1732 = vmul.f32 %v1676, 0.5
        %v1733 = vmul.f32 %v1677, 0.5
        %v1734 = vmul.f32 %v1678, 0.5
        %v1735 = vmul.f32 %v1679, 0.5
        %v1736 = vmul.f32 %v1680, 0.5
        %v1737 = vmul.f32 %v1681, 0.5
        %v1738 = vmul.f32 %v1682, 0.5
        %v1739 = vmul.f32 %v1683, 0.5
        %v1740 = vmul.f32 %v1684, 0.5
        %v1741 = vmul.f32 %v1685, 0.5
        %v1742 = vmul.f32 %v1686, 0.5
        %v1743 = vmul.f32 %v1687, 0.5
        %v1744 = vmul.f32 %v1688, 0.5
        %v1745 = vmul.f32 %v1689, 0.5
        %v1746 = vmul.f32 %v1690, 0.5
        %v1747 = vmul.f32 %v1691, 0.5
        %v1748 = vmul.f32 %v1692, 0.5
        %v1749 = vmul.f32 %v1693, 0.5
        %v1750 = vmul.f32 %v1694, 0.5
        %v1751 = vmul.f32 %v1695, 0.5
        %v1752 = vmul.f32 %v1696, 0.5
        %v1753 = vmul.f32 %v1697, 0.5
        %v1754 = vmul.f32 %v1698, 0.5
        %v1755 = vmul.f32 %v1699, 0.5
        %v1756 = vmul.f32 %v1700, 0.5
        %v1757 = vmul.f32 %v1701, 0.5
        %v1758 = vmul.f32 %v1702, 0.5
        %v1759 = vmul.f32 %v1703, 0.5
        %v1760 = vmul.f32 %v1704, 0.5
        %v1761 = vmul.f32 %v1705, 0.5
        %v1762 = vmul.f32 %v1706, 0.5
        %v1763 = vmul.f32 %v1707, 0.5
        %v1764 = vmul.f32 %v1708, 0.5
        %v1765 = vmul.f32 %v1709, 0.5
        %v1766 = vmul.f32 %v1710, 0.5
        %v1767 = vmul.f32 %v1711, 0.5
        %v1768 = vmul.f32 %v1712, 0.5
        %v1769 = vmul.f32 %v1713, 0.5
        %v1770 = vmul.f32 %v1714, 0.5
        %v1771 = vmul.f32 %v1715, 0.5
        %v1772 = vmul.f32 %v1716, 0.5
        %v1773 = vmul.f32 %v1717, 0.5
        %v1774 = vmul.f32 %v1718, 0.5
        %v1775 = vmul.f32 %v1719, 0.5
        %v1776 = vadd.f32 %v1720, 0.5
        %v1777 = vadd.f32 %v1721, 0.5
        %v1778 = vadd.f32 %v1722, 0.5
        %v1779 = vadd.f32 %v1723, 0.5
        %v1780 = vadd.f32 %v1724, 0.5
        %v1781 = vadd.f32 %v1725, 0.5
        %v1782 = vadd.f32 %v1726, 0.5
        %v1783 = vadd.f32 %v1727, 0.5
        %v1784 = vadd.f32 %v1728, 0.5
        %v1785 = vadd.f32 %v1729, 0.5
        %v1786 = vadd.f32 %v1730, 0.5
        %v1787 = vadd.f32 %v1731, 0.5
        %v1788 = vadd.f32 %v1732, 0.5
        %v1789 = vadd.f32 %v1733, 0.5
        %v1790 = vadd.f32 %v1734, 0.5
        %v1791 = vadd.f32 %v1735, 0.5
        %v1792 = vadd.f32 %v1736, 0.5
        %v1793 = vadd.f32 %v1737, 0.5
        %v1794 = vadd.f32 %v1738, 0.5
        %v1795 = vadd.f32 %v1739, 0.5
        %v1796 = vadd.f32 %v1740, 0.5
        %v1797 = vadd.f32 %v1741, 0.5
        %v1798 = vadd.f32 %v1742, 0.5
        %v1799 = vadd.f32 %v1743, 0.5
        %v1800 = vadd.f32 %v1744, 0.5
        %v1801 = vadd.f32 %v1745, 0.5
        %v1802 = vadd.f32 %v1746, 0.5
        %v1803 = vadd.f32 %v1747, 0.5
        %v1804 = vadd.f32 %v1748, 0.5
        %v1805 = vadd.f32 %v1749, 0.5
        %v1806 = vadd.f32 %v1750, 0.5
        %v1807 = vadd.f32 %v1751, 0.5
        %v1808 = vadd.f32 %v1752, 0.5
        %v1809 = vadd.f32 %v1753, 0.5
        %v1810 = vadd.f32 %v1754, 0.5
        %v1811 = vadd.f32 %v1755, 0.5
        %v1812 = vadd.f32 %v1756, 0.5
        %v1813 = vadd.f32 %v1757, 0.5
        %v1814 = vadd.f32 %v1758, 0.5
        %v1815 = vadd.f32 %v1759, 0.5
        %v1816 = vadd.f32 %v1760, 0.5
        %v1817 = vadd.f32 %v1761, 0.5
        %v1818 = vadd.f32 %v1762, 0.5
        %v1819 = vadd.f32 %v1763, 0.5
        %v1820 = vadd.f32 %v1764, 0.5
        %v1821 = vadd.f32 %v1765, 0.5
        %v1822 = vadd.f32 %v1766, 0.5
        %v1823 = vadd.f32 %v1767, 0.5
        %v1824 = vadd.f32 %v1768, 0.5
        %v1825 = vadd.f32 %v1769, 0.5
        %v1826 = vadd.f32 %v1770, 0.5
        %v1827 = vadd.f32 %v1771, 0.5
        %v1828 = vadd.f32 %v1772, 0.5
        %v1829 = vadd.f32 %v1773, 0.5
        %v1830 = vadd.f32 %v1774, 0.5
        %v1831 = vadd.f32 %v1775, 0.5
        %v1832 = vmul.f32 %v1493, %v1776
        %v1833 = vmul.f32 %v1494, %v1777
        %v1834 = vmul.f32 %v1495, %v1778
        %v1835 = vmul.f32 %v1496, %v1779
        %v1836 = vmul.f32 %v1497, %v1780
        %v1837 = vmul.f32 %v1498, %v1781
        %v1838 = vmul.f32 %v1499, %v1782
        %v1839 = vmul.f32 %v1500, %v1783
        %v1840 = vmul.f32 %v1501, %v1784
        %v1841 = vmul.f32 %v1502, %v1785
        %v1842 = vmul.f32 %v1503, %v1786
        %v1843 = vmul.f32 %v1504, %v1787
        %v1844 = vmul.f32 %v1505, %v1788
        %v1845 = vmul.f32 %v1506, %v1789
        %v1846 = vmul.f32 %v1507, %v1790
        %v1847 = vmul.f32 %v1508, %v1791
        %v1848 = vmul.f32 %v1509, %v1792
        %v1849 = vmul.f32 %v1510, %v1793
        %v1850 = vmul.f32 %v1511, %v1794
        %v1851 = vmul.f32 %v1512, %v1795
        %v1852 = vmul.f32 %v1513, %v1796
        %v1853 = vmul.f32 %v1514, %v1797
        %v1854 = vmul.f32 %v1515, %v1798
        %v1855 = vmul.f32 %v1516, %v1799
        %v1856 = vmul.f32 %v1517, %v1800
        %v1857 = vmul.f32 %v1518, %v1801
        %v1858 = vmul.f32 %v1519, %v1802
        %v1859 = vmul.f32 %v1520, %v1803
        %v1860 = vmul.f32 %v1521, %v1804
        %v1861 = vmul.f32 %v1522, %v1805
        %v1862 = vmul.f32 %v1523, %v1806
        %v1863 = vmul.f32 %v1524, %v1807
        %v1864 = vmul.f32 %v1525, %v1808
        %v1865 = vmul.f32 %v1526, %v1809
        %v1866 = vmul.f32 %v1527, %v1810
        %v1867 = vmul.f32 %v1528, %v1811
        %v1868 = vmul.f32 %v1529, %v1812
        %v1869 = vmul.f32 %v1530, %v1813
        %v1870 = vmul.f32 %v1531, %v1814
        %v1871 = vmul.f32 %v1532, %v1815
        %v1872 = vmul.f32 %v1533, %v1816
        %v1873 = vmul.f32 %v1534, %v1817
        %v1874 = vmul.f32 %v1535, %v1818
        %v1875 = vmul.f32 %v1536, %v1819
        %v1876 = vmul.f32 %v1537, %v1820
        %v1877 = vmul.f32 %v1538, %v1821
        %v1878 = vmul.f32 %v1539, %v1822
        %v1879 = vmul.f32 %v1540, %v1823
        %v1880 = vmul.f32 %v1541, %v1824
        %v1881 = vmul.f32 %v1542, %v1825
        %v1882 = vmul.f32 %v1543, %v1826
        %v1883 = vmul.f32 %v1544, %v1827
        %v1884 = vmul.f32 %v1545, %v1828
        %v1885 = vmul.f32 %v1546, %v1829
        %v1886 = vmul.f32 %v1547, %v1830
        %v1887 = vmul.f32 %v1548, %v1831
        %1888 = vmatprep.subr.mxu0 %v1833
        %1889 = vmatpush1.msra.mxu0 %v1832
        %1890 = vmatprep.subr.mxu0 %v1835
        %1891 = vmatpush1.msra.mxu0 %v1834
        %1892 = vmatprep.subr.mxu0 %v1837
        %1893 = vmatpush1.msra.mxu0 %v1836
        %1894 = vmatprep.subr.mxu0 %v1839
        %1895 = vmatpush1.msra.mxu0 %v1838
        %1896 = vmatprep.subr.mxu0 %v1841
        %1897 = vmatpush1.msra.mxu0 %v1840
        %1898 = vmatprep.subr.mxu0 %v1843
        %1899 = vmatpush1.msra.mxu0 %v1842
        %1900 = vmatprep.subr.mxu0 %v1845
        %1901 = vmatpush1.msra.mxu0 %v1844
        %1902 = vmatprep.subr.mxu0 %v1847
        %1903 = vmatpush1.msra.mxu0 %v1846
        %1904 = vmatprep.subr.mxu0 %v1849
        %1905 = vmatpush1.msra.mxu0 %v1848
        %1906 = vmatprep.subr.mxu0 %v1851
        %1907 = vmatpush1.msra.mxu0 %v1850
        %1908 = vmatprep.subr.mxu0 %v1853
        %1909 = vmatpush1.msra.mxu0 %v1852
        %1910 = vmatprep.subr.mxu0 %v1855
        %1911 = vmatpush1.msra.mxu0 %v1854
        %1912 = vmatprep.subr.mxu0 %v1857
        %1913 = vmatpush1.msra.mxu0 %v1856
        %1914 = vmatprep.subr.mxu0 %v1859
        %1915 = vmatpush1.msra.mxu0 %v1858
        %1916 = vmatprep.subr.mxu0 %v1861
        %1917 = vmatpush1.msra.mxu0 %v1860
        %1918 = vmatprep.subr.mxu0 %v1863
        %1919 = vmatpush1.msra.mxu0 %v1862
        %1920 = vmatprep.subr.mxu0 %v1865
        %1921 = vmatpush1.msra.mxu0 %v1864
        %1922 = vmatprep.subr.mxu0 %v1867
        %1923 = vmatpush1.msra.mxu0 %v1866
        %1924 = vmatprep.subr.mxu0 %v1869
        %1925 = vmatpush1.msra.mxu0 %v1868
        %1926 = vmatprep.subr.mxu0 %v1871
        %1927 = vmatpush1.msra.mxu0 %v1870
        %1928 = vmatprep.subr.mxu0 %v1873
        %1929 = vmatpush1.msra.mxu0 %v1872
        %1930 = vmatprep.subr.mxu0 %v1875
        %1931 = vmatpush1.msra.mxu0 %v1874
        %1932 = vmatprep.subr.mxu0 %v1877
        %1933 = vmatpush1.msra.mxu0 %v1876
        %1934 = vmatprep.subr.mxu0 %v1879
        %1935 = vmatpush1.msra.mxu0 %v1878
        %1936 = vmatprep.subr.mxu0 %v1881
        %1937 = vmatpush1.msra.mxu0 %v1880
        %1938 = vmatprep.subr.mxu0 %v1883
        %1939 = vmatpush1.msra.mxu0 %v1882
        %1940 = vmatprep.subr.mxu0 %v1885
        %1941 = vmatpush1.msra.mxu0 %v1884
        %1942 = vmatprep.subr.mxu0 %v1887
        %1943 = vmatpush1.msra.mxu0 %v1886
        %1944 = vmatprep.subr.mxu0 0.0
        %1945 = vmatpush1.msra.mxu0 0.0
        %1946 = vmatprep.subr.mxu0 0.0
        %1947 = vmatpush1.msra.mxu0 0.0
        %1948 = vmatprep.subr.mxu0 0.0
        %1949 = vmatpush1.msra.mxu0 0.0
        %1950 = vmatprep.subr.mxu0 0.0
        %1951 = vmatpush1.msra.mxu0 0.0
        %1952 = vmatprep.mubr.f32.mxu0 %v1291
        %1953 = vmatmul.mubr.f32.gmra.mrb[0].mxu0 %v383
        %v1954 = vpop.f32.mrb[0].mxu0
        %v1955 = vadd.f32 0.0, %v1954
        %v1956 = vpop.f32.mrb[0].mxu0
        %v1957 = vadd.f32 0.0, %v1956
        %1958 = vdwg.mxu0
        %v1959 = vadd.f32 %v1431, %v1955
        %v1960 = vadd.f32 %v1433, %v1957
        %s1961 = smul.u32 %s28, 8
        %s1962 = sshra.s32 %s1961, 3
        %s1963 = sand.u32 %s1961, 7
        %s1964 = smul.u32 %s1962, 2
        %s1965 = smul.addr %s1964, 8
        %s1966 = scalar_lea.vmem [#allocation2], %s1965
        %1967 = vst [vmem:[%s1966] sm:$0xff] %v1959
        %1968 = vst.msk [vmem:[%s1966 + $0x8] sm:$0xff] %vm1289, %v1960
        %p1969 = scmp.eq.s32.totalorder %s28, 5
        // Predicated region
        $region69: #{_lambda_.2} parent=43 // pred_check
          %p1970 = pneg %p1969
        $region70: #{_lambda_.2} parent=43 // pred_check_branch
          %1972 = sbr.rel (%p1970) target = $region72
        $region71: #{_lambda_.2} parent=43 // pred_region
          %v1973 = vld [vmem:[#allocation2] sm:$0xff]
          %v1974 = vld [vmem:[#allocation2 + $0x8] sm:$0xff]
          %v1975 = vld [vmem:[#allocation2 + $0x10] sm:$0xff]
          %v1976 = vld [vmem:[#allocation2 + $0x18] sm:$0xff]
          %v1977 = vld [vmem:[#allocation2 + $0x20] sm:$0xff]
          %v1978 = vld [vmem:[#allocation2 + $0x28] sm:$0xff]
          %v1979 = vld [vmem:[#allocation2 + $0x30] sm:$0xff]
          %v1980 = vld [vmem:[#allocation2 + $0x38] sm:$0xff]
          %v1981 = vld [vmem:[#allocation2 + $0x40] sm:$0xff]
          %v1982 = vld [vmem:[#allocation2 + $0x48] sm:$0xff]
          %v1983 = vld [vmem:[#allocation2 + $0x50] sm:$0xff]
          %v1984 = vld [vmem:[#allocation2 + $0x58] sm:$0xff]
          %v1985 = vld [vmem:[#allocation7] sm:$0xff]
          %v1986 = vld [vmem:[#allocation7 + $0x8] sm:$0xff]
          %v1987 = vld [vmem:[#allocation7 + $0x10] sm:$0xff]
          %v1988 = vld [vmem:[#allocation7 + $0x18] sm:$0xff]
          %v1989 = vld [vmem:[#allocation7 + $0x20] sm:$0xff]
          %v1990 = vld [vmem:[#allocation7 + $0x28] sm:$0xff]
          %v1991 = vld [vmem:[#allocation7 + $0x30] sm:$0xff]
          %v1992 = vld [vmem:[#allocation7 + $0x38] sm:$0xff]
          %v1993 = vld [vmem:[#allocation7 + $0x40] sm:$0xff]
          %v1994 = vld [vmem:[#allocation7 + $0x48] sm:$0xff]
          %v1995 = vld [vmem:[#allocation7 + $0x50] sm:$0xff]
          %v1996 = vld [vmem:[#allocation7 + $0x58] sm:$0xff]
          %v1997 = vld [vmem:[#allocation7 + $0x60] sm:$0xff]
          %v1998 = vld [vmem:[#allocation7 + $0x68] sm:$0xff]
          %v1999 = vld [vmem:[#allocation7 + $0x70] sm:$0xff]
          %v2000 = vld [vmem:[#allocation7 + $0x78] sm:$0xff]
          %v2001 = vld [vmem:[#allocation7 + $0x80] sm:$0xff]
          %v2002 = vld [vmem:[#allocation7 + $0x88] sm:$0xff]
          %v2003 = vld [vmem:[#allocation7 + $0x90] sm:$0xff]
          %v2004 = vld [vmem:[#allocation7 + $0x98] sm:$0xff]
          %v2005 = vld [vmem:[#allocation7 + $0xa0] sm:$0xff]
          %v2006 = vld [vmem:[#allocation7 + $0xa8] sm:$0xff]
          %v2007 = vld [vmem:[#allocation7 + $0xb0] sm:$0xff]
          %v2008 = vld [vmem:[#allocation7 + $0xb8] sm:$0xff]
          %v2009 = vld [vmem:[#allocation7 + $0xc0] sm:$0xff]
          %v2010 = vld [vmem:[#allocation7 + $0xc8] sm:$0xff]
          %v2011 = vld [vmem:[#allocation7 + $0xd0] sm:$0xff]
          %v2012 = vld [vmem:[#allocation7 + $0xd8] sm:$0xff]
          %v2014 = vsel %vm1289, %v1974, 0
          %v2017 = vsel %vm1289, %v1976, 0
          %v2020 = vsel %vm1289, %v1978, 0
          %v2023 = vsel %vm1289, %v1980, 0
          %v2026 = vsel %vm1289, %v1982, 0
          %v2029 = vsel %vm1289, %v1984, 0
          %2031 = vmatprep.subr.mxu0 0.0
          %2032 = vmatpush1.msra.mxu0 %v1985
          %2033 = vmatprep.subr.mxu0 0.0
          %2034 = vmatpush1.msra.mxu0 %v1986
          %2035 = vmatprep.subr.mxu0 0.0
          %2036 = vmatpush1.msra.mxu0 %v1987
          %2037 = vmatprep.subr.mxu0 0.0
          %2038 = vmatpush1.msra.mxu0 %v1988
          %2039 = vmatprep.subr.mxu0 0.0
          %2040 = vmatpush1.msra.mxu0 %v1989
          %2041 = vmatprep.subr.mxu0 0.0
          %2042 = vmatpush1.msra.mxu0 %v1990
          %2043 = vmatprep.subr.mxu0 0.0
          %2044 = vmatpush1.msra.mxu0 %v1991
          %2045 = vmatprep.subr.mxu0 0.0
          %2046 = vmatpush1.msra.mxu0 %v1992
          %2047 = vmatprep.subr.mxu0 0.0
          %2048 = vmatpush1.msra.mxu0 %v1993
          %2049 = vmatprep.subr.mxu0 0.0
          %2050 = vmatpush1.msra.mxu0 %v1994
          %2051 = vmatprep.subr.mxu0 0.0
          %2052 = vmatpush1.msra.mxu0 %v1995
          %2053 = vmatprep.subr.mxu0 0.0
          %2054 = vmatpush1.msra.mxu0 %v1996
          %2055 = vmatprep.subr.mxu0 0.0
          %2056 = vmatpush1.msra.mxu0 %v1997
          %2057 = vmatprep.subr.mxu0 0.0
          %2058 = vmatpush1.msra.mxu0 %v1998
          %2059 = vmatprep.subr.mxu0 0.0
          %2060 = vmatpush1.msra.mxu0 %v1999
          %2061 = vmatprep.subr.mxu0 0.0
          %2062 = vmatpush1.msra.mxu0 %v2000
          %2063 = vmatprep.subr.mxu0 0.0
          %2064 = vmatpush1.msra.mxu0 %v2001
          %2065 = vmatprep.subr.mxu0 0.0
          %2066 = vmatpush1.msra.mxu0 %v2002
          %2067 = vmatprep.subr.mxu0 0.0
          %2068 = vmatpush1.msra.mxu0 %v2003
          %2069 = vmatprep.subr.mxu0 0.0
          %2070 = vmatpush1.msra.mxu0 %v2004
          %2071 = vmatprep.subr.mxu0 0.0
          %2072 = vmatpush1.msra.mxu0 %v2005
          %2073 = vmatprep.subr.mxu0 0.0
          %2074 = vmatpush1.msra.mxu0 %v2006
          %2075 = vmatprep.subr.mxu0 0.0
          %2076 = vmatpush1.msra.mxu0 %v2007
          %2077 = vmatprep.subr.mxu0 0.0
          %2078 = vmatpush1.msra.mxu0 %v2008
          %2079 = vmatprep.subr.mxu0 0.0
          %2080 = vmatpush1.msra.mxu0 %v2009
          %2081 = vmatprep.subr.mxu0 0.0
          %2082 = vmatpush1.msra.mxu0 %v2010
          %2083 = vmatprep.subr.mxu0 0.0
          %2084 = vmatpush1.msra.mxu0 %v2011
          %2085 = vmatprep.subr.mxu0 0.0
          %2086 = vmatpush1.msra.mxu0 %v2012
          %2087 = vmatprep.subr.mxu0 0.0
          %2088 = vmatpush1.msra.mxu0 0.0
          %2089 = vmatprep.subr.mxu0 0.0
          %2090 = vmatpush1.msra.mxu0 0.0
          %2091 = vmatprep.subr.mxu0 0.0
          %2092 = vmatpush1.msra.mxu0 0.0
          %2093 = vmatprep.subr.mxu0 0.0
          %2094 = vmatpush1.msra.mxu0 0.0
          %2095 = vmatprep.mubr.f32.mxu0 %v2014
          %2096 = vmatmul.mubr.f32.gmra.mrb[0].mxu0 %v1973
          %v2097 = vpop.f32.mrb[0].mxu0
          %v2098 = vadd.f32 0.0, %v2097
          %v2099 = vpop.f32.mrb[0].mxu0
          %2100 = vmatprep.mubr.f32.mxu0 %v2017
          %2101 = vmatmul.mubr.f32.gmra.mrb[0].mxu0 %v1975
          %v2102 = vpop.f32.mrb[0].mxu0
          %v2103 = vadd.f32 0.0, %v2102
          %v2104 = vpop.f32.mrb[0].mxu0
          %2105 = vmatprep.mubr.f32.mxu0 %v2020
          %2106 = vmatmul.mubr.f32.gmra.mrb[0].mxu0 %v1977
          %v2107 = vpop.f32.mrb[0].mxu0
          %v2108 = vadd.f32 0.0, %v2107
          %v2109 = vpop.f32.mrb[0].mxu0
          %2110 = vmatprep.mubr.f32.mxu0 %v2023
          %2111 = vmatmul.mubr.f32.gmra.mrb[0].mxu0 %v1979
          %v2112 = vpop.f32.mrb[0].mxu0
          %v2113 = vadd.f32 0.0, %v2112
          %v2114 = vpop.f32.mrb[0].mxu0
          %2115 = vmatprep.mubr.f32.mxu0 %v2026
          %2116 = vmatmul.mubr.f32.gmra.mrb[0].mxu0 %v1981
          %v2117 = vpop.f32.mrb[0].mxu0
          %v2118 = vadd.f32 0.0, %v2117
          %v2119 = vpop.f32.mrb[0].mxu0
          %2120 = vmatprep.mubr.f32.mxu0 %v2029
          %2121 = vmatmul.mubr.f32.gmra.mrb[0].mxu0 %v1983
          %v2122 = vpop.f32.mrb[0].mxu0
          %v2123 = vadd.f32 0.0, %v2122
          %v2124 = vpop.f32.mrb[0].mxu0
          %2125 = vdwg.mxu0
          %v2126 = vld [vmem:[#allocation9] sm:$0xff]
          %v2127 = vmul.f32 %v2098, %v2126
          %v2128 = vmul.f32 %v2103, %v2126
          %v2129 = vmul.f32 %v2108, %v2126
          %v2130 = vmul.f32 %v2113, %v2126
          %v2131 = vmul.f32 %v2118, %v2126
          %v2132 = vmul.f32 %v2123, %v2126
          %v2133 = vrot.slane %v2127, 4
          %v2134 = vadd.f32 %v2127, %v2133
          %v2135 = vrot.slane %v2134, 2
          %v2136 = vadd.f32 %v2134, %v2135
          %v2137 = vrot.slane %v2136, 1
          %v2138 = vadd.f32 %v2136, %v2137
          %v2139 = vrot.slane %v2128, 4
          %v2140 = vadd.f32 %v2128, %v2139
          %v2141 = vrot.slane %v2140, 2
          %v2142 = vadd.f32 %v2140, %v2141
          %v2143 = vrot.slane %v2142, 1
          %v2144 = vadd.f32 %v2142, %v2143
          %v2145 = vrot.slane %v2129, 4
          %v2146 = vadd.f32 %v2129, %v2145
          %v2147 = vrot.slane %v2146, 2
          %v2148 = vadd.f32 %v2146, %v2147
          %v2149 = vrot.slane %v2148, 1
          %v2150 = vadd.f32 %v2148, %v2149
          %v2151 = vrot.slane %v2130, 4
          %v2152 = vadd.f32 %v2130, %v2151
          %v2153 = vrot.slane %v2152, 2
          %v2154 = vadd.f32 %v2152, %v2153
          %v2155 = vrot.slane %v2154, 1
          %v2156 = vadd.f32 %v2154, %v2155
          %v2157 = vrot.slane %v2131, 4
          %v2158 = vadd.f32 %v2131, %v2157
          %v2159 = vrot.slane %v2158, 2
          %v2160 = vadd.f32 %v2158, %v2159
          %v2161 = vrot.slane %v2160, 1
          %v2162 = vadd.f32 %v2160, %v2161
          %v2163 = vrot.slane %v2132, 4
          %v2164 = vadd.f32 %v2132, %v2163
          %v2165 = vrot.slane %v2164, 2
          %v2166 = vadd.f32 %v2164, %v2165
          %v2167 = vrot.slane %v2166, 1
          %v2168 = vadd.f32 %v2166, %v2167
          %vm2175 = vcmask 1041409
          %v2176 = vsel %vm2175, %v2144, %v2138
          %vm2177 = vcmask 1042434
          %v2178 = vsel %vm2177, %v2150, %v2176
          %vm2179 = vcmask 1043459
          %v2180 = vsel %vm2179, %v2156, %v2178
          %vm2181 = vcmask 1044484
          %v2182 = vsel %vm2181, %v2162, %v2180
          %vm2183 = vcmask 1045509
          %v2184 = vsel %vm2183, %v2168, %v2182
          %2186 = vst [vmem:[%s382] sm:$0x3f] %v2184
        $region72: #{_lambda_.2} parent=43 // pred_fallthru
          _
        %p2187 = scmp.lt.s32.totalorder %s27, 1
        %s2188 = scalar_select %p2187, %s27, 1
        %s2189 = smul.addr %s2188, 8
        %s2190 = scalar_lea.vmem %s6, %s2189
        // Predicated region
        $region73: #{_lambda_.2} parent=43 // pred_check
          %p2191 = pneg %p195
        $region74: #{_lambda_.2} parent=43 // pred_check_branch
          %2193 = sbr.rel (%p2191) target = $region76
        $region75: #{_lambda_.2} parent=43 // pred_region
          _
        $region76: #{_lambda_.2} parent=43 // pred_fallthru
          _
      $region44: #{_lambda_.2} parent=5 // pred_fallthru
        _
      %p2194 = scmp.le.s32.totalorder 2, %s18
      // Predicated region
      $region77: #{_lambda_.2} parent=5 // pred_check
        %p2195 = pneg %p2194
      $region78: #{_lambda_.2} parent=5 // pred_check_branch
        %2197 = sbr.rel (%p2195) target = $region80
      $region79: #{_lambda_.2} parent=5 // pred_region
        %s2198 = ssub.s32 %s18, 2
        // Predicated region
        $region81: #{_lambda_.2} parent=79 // pred_check
          %p2199 = pneg %p201
        $region82: #{_lambda_.2} parent=79 // pred_check_branch
          %2201 = sbr.rel (%p2199) target = $region84
        $region83: #{_lambda_.2} parent=79 // pred_region
          %p2202 = scmp.lt.s32.totalorder %s29, 1
          %s2203 = scalar_select %p2202, %s29, 1
          %s2204 = smul.addr %s2203, 8
          %s2205 = scalar_lea.vmem %s6, %s2204
        $region84: #{_lambda_.2} parent=79 // pred_fallthru
          _
      $region80: #{_lambda_.2} parent=5 // pred_fallthru
        _
    $region6: #{_lambda_.2} parent=1 // loop_footer
      %s22 = sadd.s32 1, %s18
    $region7: #{_lambda_.2} parent=1 // loop_footer_branch
      %17 = sbr.rel target = $region3
    $region8: #{_lambda_.2} parent=1 // loop_exit
      _
    %2206 = vsyncpa [#allocation4], 1
    %s2207 = scalar_lea.sflag [#allocation4], 1
    %2208 = vsyncpa %s2207, 1
    %2209 = vsyncpa [#allocation8], 1
    %2210 = vsyncpa [#allocation11], 1
    %s2211 = scalar_lea.sflag [#allocation11], 1
    %2212 = vsyncpa %s2211, 1
    %2213 = vsyncpa [#allocation5], 1
    %s2214 = scalar_lea.sflag [#allocation5], 1
    %2215 = vsyncpa %s2214, 1

</llo_original>
